<compile_context>
chip_gen: v7x
topology: tpu7x:2x2x1
jax: 0.10.0
libtpu: 0.0.40
codegen_flags: <defaults>
</compile_context>

<pallas_src>
import functools
import math

import jax
import jax.numpy as jnp
from jax import lax
from jax.experimental import pallas as pl
from jax.experimental.pallas import tpu as pltpu


def _round_up(v, m):
    return (v + m - 1) // m * m


def _sigmoid(x):
    # sigmoid(x) == 0.5*tanh(0.5*x) + 0.5  → a single EUP op per gate.
    return 0.5 * jnp.tanh(0.5 * x) + 0.5


def init_params(key, input_dim, hidden_dims, kernel_sizes, dtype=jnp.float32):
    """PyTorch-layout parameters: per layer Conv2d weight (4*ch, cin+ch, kh, kw)
    and bias (4*ch,), with nn.Conv2d's default uniform init."""
    params = []
    cur_in = input_dim
    for ch, (kh, kw) in zip(hidden_dims, kernel_sizes):
        ctot = cur_in + ch
        co = 4 * ch
        key, wk, bk = jax.random.split(key, 3)
        bound = 1.0 / math.sqrt(ctot * kh * kw)
        w = jax.random.uniform(wk, (co, ctot, kh, kw), dtype, -bound, bound)
        b = jax.random.uniform(bk, (co,), dtype, -bound, bound)
        params.append((w, b))
        cur_in = ch
    return params


def convlstm2d_forward(x, params, hidden_dims, kernel_sizes,
                       batch_first=True, return_all_layers=False):
    """Mirrors ConvLSTM2d.forward (return_all_layers=False path).

    batch_first=True: x is (B, C_in, T, H, W).  Returns
      layer_output (B, hidden[-1], T, H, W) and (h_last, c_last), each
      (B, hidden[-1], H, W).
    """
    if return_all_layers:
        # TODO(synk): the fused kernel only emits the last layer's stream/state.
        raise NotImplementedError("return_all_layers=True is not supported")

    if not batch_first:
        x = jnp.transpose(x, (1, 0, 2, 3, 4))
    x = jnp.transpose(x, (0, 2, 1, 3, 4)).astype(jnp.float32)   # (B, T, C, H, W)
    B, T, cin0, H, W = x.shape

    num_layers = len(hidden_dims)
    kh, kw = kernel_sizes[0]
    assert all(tuple(k) == (kh, kw) for k in kernel_sizes), \
        "fused kernel assumes a single shared kernel size"
    nk = kh * kw
    ph, pw = kh // 2, kw // 2
    Hp, Wp = H + 2 * ph, W + 2 * pw
    Q = H * Wp                               # flat spatial columns, q = y*Wp + x
    off0 = ph * Wp + pw                      # max |lane shift| of any conv tap
    # Lane padding: multiple of 128 (all stores unmasked full-vreg) AND large
    # enough that circular rolls wrap only into forced-zero columns.
    Qp = _round_up(Q + off0 + 1, 128)
    shifts = [(dy - ph) * Wp + (dx - pw) for dy in range(kh) for dx in range(kw)]

    ch_last = hidden_dims[-1]
    Kx0 = nk * cin0
    Kx0p = _round_up(Kx0, 16)                # bf16 sublane-pair aligned rows

    # Row offset of each layer's h-im2col band inside the shared bf16 scratch.
    hoff, acc_rows = [], 0
    for ch in hidden_dims:
        hoff.append(acc_rows)
        acc_rows += nk * ch
    Ktot = acc_rows

    # ---- layer-0 x im2col, built once in XLA (tiny), streamed as bf16 -------
    offsets = [dy * Wp + dx for dy in range(kh) for dx in range(kw)]
    xp = jnp.pad(x, ((0, 0), (0, 0), (0, 0), (ph, ph), (pw, pw)))
    xf = xp.reshape(B, T, cin0, Hp * Wp)
    Lx = Hp * Wp + max(offsets) + 1
    xf = jnp.pad(xf, ((0, 0), (0, 0), (0, 0), (0, Lx - Hp * Wp)))
    x_im2col = jnp.concatenate([xf[..., o:o + Q] for o in offsets], axis=2)
    x_im2col = jnp.pad(
        x_im2col,
        ((0, 0), (0, 0), (0, Kx0p - Kx0), (0, Qp - Q))).astype(jnp.bfloat16)

    # valid-column mask: 1.0 where q < Q and (q % Wp) < W, else 0.0
    col = jnp.arange(Qp, dtype=jnp.int32)
    mask = ((col < Q) & ((col % Wp) < W)).astype(jnp.float32).reshape(1, Qp)

    # ---- weights as (4ch, K) bf16 matrices matching the im2col row order ----
    cins = [cin0] + list(hidden_dims[:-1])
    kparams = []
    for l, ((w, b), ch) in enumerate(zip(params, hidden_dims)):
        cin = cins[l]
        co = 4 * ch
        w = w.astype(jnp.float32)
        wx = jnp.transpose(w[:, :cin], (0, 2, 3, 1)).reshape(co, nk * cin)
        wh = jnp.transpose(w[:, cin:], (0, 2, 3, 1)).reshape(co, nk * ch)
        if l == 0:
            wx = jnp.pad(wx, ((0, 0), (0, Kx0p - nk * cin)))
            kparams += [wx.astype(jnp.bfloat16), wh.astype(jnp.bfloat16)]
        else:
            # rhs for layer l>0 is the contiguous [band(l-1) ; band(l)] slice,
            # so its weight is one combined [Wx | Wh] matrix → one MXU dot.
            kparams += [jnp.concatenate([wx, wh], axis=1).astype(jnp.bfloat16)]
        kparams += [b.reshape(co, 1).astype(jnp.float32)]

    # ---- the fused kernel ----------------------------------------------------
    def kernel(*refs):
        x_ref, mask_ref = refs[0], refs[1]
        pos = 2
        wrefs = []
        for l in range(num_layers):
            n = 3 if l == 0 else 2
            wrefs.append(refs[pos:pos + n])
            pos += n
        out_ref, clast_ref = refs[pos], refs[pos + 1]
        him_ref = refs[pos + 2]                      # (Ktot, Qp) bf16 bands
        c_refs = refs[pos + 3:pos + 3 + num_layers]  # (ch, Qp) f32 cell states

        # Fresh zero state for this batch element (one grid step == one batch).
        him_ref[...] = jnp.zeros_like(him_ref)
        for cr in c_refs:
            cr[...] = jnp.zeros_like(cr)

        m = mask_ref[...]                            # (1, Qp)

        def step(t, carry):
            for l in range(num_layers):
                ch = hidden_dims[l]
                if l == 0:
                    wx_ref, wh_ref, b_ref = wrefs[0]
                    acc = jnp.dot(wx_ref[...], x_ref[0, t],
                                  preferred_element_type=jnp.float32)
                    acc = acc + jnp.dot(
                        wh_ref[...], him_ref[hoff[0]:hoff[0] + nk * ch, :],
                        preferred_element_type=jnp.float32)
                else:
                    w_ref, b_ref = wrefs[l]
                    lo, hi = hoff[l - 1], hoff[l] + nk * ch
                    acc = jnp.dot(w_ref[...], him_ref[lo:hi, :],
                                  preferred_element_type=jnp.float32)
                acc = acc + b_ref[...]               # (4ch, Qp) f32

                i_g = _sigmoid(acc[0 * ch:1 * ch])
                f_g = _sigmoid(acc[1 * ch:2 * ch])
                o_g = _sigmoid(acc[2 * ch:3 * ch])
                g_g = jnp.tanh(acc[3 * ch:4 * ch])

                # Mask junk/pad columns of c every step → h is exactly zero
                # there (tanh(0)=0), which the rolled im2col bands rely on.
                c_next = (f_g * c_refs[l][...] + i_g * g_g) * m
                h_next = o_g * jnp.tanh(c_next)
                c_refs[l][...] = c_next

                # Refresh this layer's im2col band: kh*kw lane-rolled copies of
                # h_t, written once and reused at t+1 (own recurrence) and by
                # layer l+1 (its input) — no per-step concat materialisation.
                for j, s in enumerate(shifts):
                    band = h_next if s == 0 else pltpu.roll(
                        h_next, shift=(-s) % Qp, axis=1)
                    r0 = hoff[l] + j * ch
                    him_ref[r0:r0 + ch, :] = band.astype(jnp.bfloat16)

                if l == num_layers - 1:
                    out_ref[0, t] = h_next
            return carry

        lax.fori_loop(0, T, step, 0)
        # c of the last layer only needs to reach HBM once, after the scan.
        clast_ref[0] = c_refs[num_layers - 1][...]

    in_specs = [
        pl.BlockSpec((1, T, Kx0p, Qp), lambda b: (b, 0, 0, 0)),
        pl.BlockSpec((1, Qp), lambda b: (0, 0)),
    ]
    for l in range(num_layers):
        co = 4 * hidden_dims[l]
        if l == 0:
            in_specs.append(pl.BlockSpec((co, Kx0p), lambda b: (0, 0)))
            in_specs.append(pl.BlockSpec((co, nk * hidden_dims[0]),
                                         lambda b: (0, 0)))
        else:
            Kl = nk * (hidden_dims[l - 1] + hidden_dims[l])
            in_specs.append(pl.BlockSpec((co, Kl), lambda b: (0, 0)))
        in_specs.append(pl.BlockSpec((co, 1), lambda b: (0, 0)))

    out_specs = (
        pl.BlockSpec((1, T, ch_last, Qp), lambda b: (b, 0, 0, 0)),
        pl.BlockSpec((1, ch_last, Qp), lambda b: (b, 0, 0)),
    )
    out_shape = (
        jax.ShapeDtypeStruct((B, T, ch_last, Qp), jnp.float32),
        jax.ShapeDtypeStruct((B, ch_last, Qp), jnp.float32),
    )
    scratch_shapes = [pltpu.VMEM((Ktot, Qp), jnp.bfloat16)]
    scratch_shapes += [pltpu.VMEM((ch, Qp), jnp.float32) for ch in hidden_dims]

    # Advisory cost model for XLA's scheduler.
    flops = 0
    for l in range(num_layers):
        k_l = (Kx0p if l == 0 else nk * hidden_dims[l - 1]) + nk * hidden_dims[l]
        flops += 2 * (4 * hidden_dims[l]) * k_l * Qp
    flops *= B * T
    transcendentals = B * T * sum(5 * ch * Qp for ch in hidden_dims)
    bytes_accessed = (B * T * Kx0p * Qp * 2 + B * T * ch_last * Qp * 4 +
                      B * ch_last * Qp * 4 + int(mask.size) * 4 +
                      sum(int(p.size) * p.dtype.itemsize for p in kparams))

    out_flat, c_flat = pl.pallas_call(
        kernel,
        out_shape=out_shape,
        grid=(B,),
        in_specs=in_specs,
        out_specs=out_specs,
        scratch_shapes=scratch_shapes,
        compiler_params=pltpu.CompilerParams(
            dimension_semantics=("parallel",)),
        cost_estimate=pl.CostEstimate(
            flops=int(flops), transcendentals=int(transcendentals),
            bytes_accessed=int(bytes_accessed)),
    )(x_im2col, mask, *kparams)

    out = out_flat[..., :Q].reshape(B, T, ch_last, H, Wp)[..., :W]
    h_last = out[:, -1]
    c_last = c_flat[..., :Q].reshape(B, ch_last, H, Wp)[..., :W]
    layer_output = jnp.transpose(out, (0, 2, 1, 3, 4))          # (B,ch,T,H,W)
    return layer_output, (h_last, c_last)


def _reference_forward(x, params, hidden_dims, kernel_sizes, batch_first=True):
    """Pure-JAX (XLA conv) reference of ConvLSTM2d.forward, f32."""
    if not batch_first:
        x = jnp.transpose(x, (1, 0, 2, 3, 4))
    x = jnp.transpose(x, (0, 2, 1, 3, 4)).astype(jnp.float32)
    B, T, _, H, W = x.shape
    cur = x
    for (w, b), ch, (kh, kw) in zip(params, hidden_dims, kernel_sizes):
        h = jnp.zeros((B, ch, H, W), jnp.float32)
        c = jnp.zeros((B, ch, H, W), jnp.float32)
        outs = []
        for t in range(T):
            comb = jnp.concatenate([cur[:, t], h], axis=1)
            conv = lax.conv_general_dilated(
                comb, w.astype(jnp.float32), window_strides=(1, 1),
                padding=((kh // 2, kh // 2), (kw // 2, kw // 2)),
                dimension_numbers=("NCHW", "OIHW", "NCHW"),
                precision=lax.Precision.HIGHEST)
            conv = conv + b[None, :, None, None]
            i = jax.nn.sigmoid(conv[:, 0 * ch:1 * ch])
            f = jax.nn.sigmoid(conv[:, 1 * ch:2 * ch])
            o = jax.nn.sigmoid(conv[:, 2 * ch:3 * ch])
            g = jnp.tanh(conv[:, 3 * ch:4 * ch])
            c = f * c + i * g
            h = o * jnp.tanh(c)
            outs.append(h)
        cur = jnp.stack(outs, axis=1)
    return jnp.transpose(cur, (0, 2, 1, 3, 4)), (h, c)


if __name__ == "__main__":
    # Module config: ConvLSTM2d(input_dim=4, hidden_dim=32, kernel_size=(3,3),
    #                           num_layers=2, batch_first=True, bias=True)
    input_dim = 4
    hidden_dims = [32, 32]
    kernel_sizes = [(3, 3), (3, 3)]
    B, T, H, W = 2, 8, 16, 16

    key = jax.random.PRNGKey(0)
    key, xk = jax.random.split(key)
    # batch_first=True input convention: (B, C_in, T, H, W)
    x = jax.random.normal(xk, (B, input_dim, T, H, W), jnp.float32)
    params = init_params(key, input_dim, hidden_dims, kernel_sizes)

    fwd = jax.jit(functools.partial(
        convlstm2d_forward, hidden_dims=hidden_dims, kernel_sizes=kernel_sizes,
        batch_first=True, return_all_layers=False))

    layer_output, (h_last, c_last) = fwd(x, params)
    jax.block_until_ready((layer_output, h_last, c_last))

    assert layer_output.shape == (B, hidden_dims[-1], T, H, W)
    assert h_last.shape == (B, hidden_dims[-1], H, W)
    assert c_last.shape == (B, hidden_dims[-1], H, W)

    # Correctness check vs. a pure-JAX f32 reference (loose tol: bf16 MXU path).
    ref_out, (ref_h, ref_c) = jax.jit(functools.partial(
        _reference_forward, hidden_dims=hidden_dims,
        kernel_sizes=kernel_sizes))(x, params)
    err = max(float(jnp.max(jnp.abs(layer_output - ref_out))),
              float(jnp.max(jnp.abs(h_last - ref_h))),
              float(jnp.max(jnp.abs(c_last - ref_c))))
    assert err < 1e-1, f"max |diff| vs reference = {err}"

    print("KERNEL_OK")
</pallas_src>

<mosaic_0001>
module attributes {stable_mosaic.version = 11 : i64} {
  func.func @kernel(%arg0: i32, %arg1: memref<1x8x48x384xbf16, #tpu.memory_space<vmem>>, %arg2: memref<1x384xf32, #tpu.memory_space<vmem>>, %arg3: memref<128x48xbf16, #tpu.memory_space<vmem>>, %arg4: memref<128x288xbf16, #tpu.memory_space<vmem>>, %arg5: memref<128x1xf32, #tpu.memory_space<vmem>>, %arg6: memref<128x576xbf16, #tpu.memory_space<vmem>>, %arg7: memref<128x1xf32, #tpu.memory_space<vmem>>, %arg8: memref<1x8x32x384xf32, #tpu.memory_space<vmem>>, %arg9: memref<1x32x384xf32, #tpu.memory_space<vmem>>, %arg10: memref<576x384xbf16, #tpu.memory_space<vmem>>, %arg11: memref<32x384xf32, #tpu.memory_space<vmem>>, %arg12: memref<32x384xf32, #tpu.memory_space<vmem>>) attributes {dimension_semantics = [#tpu.dimension_semantics<parallel>], iteration_bounds = array<i64: 2>, scalar_prefetch = 0 : i64, scratch_operands = 3 : i64, tpu.core_type = #tpu.core_type<tc>, window_params = [{transform_indices = @transform_0, window_bounds = array<i64: 1, 8, 48, 384>}, {pipeline_mode = #tpu.pipeline_mode<synchronous>, transform_indices = @transform_1, window_bounds = array<i64: 1, 384>}, {pipeline_mode = #tpu.pipeline_mode<synchronous>, transform_indices = @transform_2, window_bounds = array<i64: 128, 48>}, {pipeline_mode = #tpu.pipeline_mode<synchronous>, transform_indices = @transform_3, window_bounds = array<i64: 128, 288>}, {pipeline_mode = #tpu.pipeline_mode<synchronous>, transform_indices = @transform_4, window_bounds = array<i64: 128, 1>}, {pipeline_mode = #tpu.pipeline_mode<synchronous>, transform_indices = @transform_5, window_bounds = array<i64: 128, 576>}, {pipeline_mode = #tpu.pipeline_mode<synchronous>, transform_indices = @transform_6, window_bounds = array<i64: 128, 1>}, {transform_indices = @transform_7, window_bounds = array<i64: 1, 8, 32, 384>}, {transform_indices = @transform_8, window_bounds = array<i64: 1, 32, 384>}]} {
    %cst = arith.constant 0.000000e+00 : bf16
    %0 = vector.broadcast %cst : bf16 to vector<576x384xbf16>
    %c0 = arith.constant 0 : index
    %c0_0 = arith.constant 0 : index
    %1 = vector.load %arg10[%c0, %c0_0] : memref<576x384xbf16, #tpu.memory_space<vmem>>, vector<576x384xbf16>
    tpu.vector_store %arg10[%c0, %c0_0], %0 {strides = array<i32>} : memref<576x384xbf16, #tpu.memory_space<vmem>>, vector<576x384xbf16>,
    %cst_1 = arith.constant 0.000000e+00 : f32
    %2 = vector.broadcast %cst_1 : f32 to vector<32x384xf32>
    %c0_2 = arith.constant 0 : index
    %c0_3 = arith.constant 0 : index
    %3 = vector.load %arg11[%c0_2, %c0_3] : memref<32x384xf32, #tpu.memory_space<vmem>>, vector<32x384xf32>
    tpu.vector_store %arg11[%c0_2, %c0_3], %2 {strides = array<i32>} : memref<32x384xf32, #tpu.memory_space<vmem>>, vector<32x384xf32>,
    %cst_4 = arith.constant 0.000000e+00 : f32
    %4 = vector.broadcast %cst_4 : f32 to vector<32x384xf32>
    %c0_5 = arith.constant 0 : index
    %c0_6 = arith.constant 0 : index
    %5 = vector.load %arg12[%c0_5, %c0_6] : memref<32x384xf32, #tpu.memory_space<vmem>>, vector<32x384xf32>
    tpu.vector_store %arg12[%c0_5, %c0_6], %4 {strides = array<i32>} : memref<32x384xf32, #tpu.memory_space<vmem>>, vector<32x384xf32>,
    %c0_7 = arith.constant 0 : index
    %c0_8 = arith.constant 0 : index
    %6 = vector.load %arg2[%c0_7, %c0_8] : memref<1x384xf32, #tpu.memory_space<vmem>>, vector<1x384xf32>
    %c0_i32 = arith.constant 0 : i32
    %c8_i32 = arith.constant 8 : i32
    %7 = arith.addi %c0_i32, %c8_i32 : i32
    %c1_i32 = arith.constant 1 : i32
    scf.for %arg13 = %c0_i32 to %7 step %c1_i32  : i32 {
      %c0_15 = arith.constant 0 : index
      %c0_16 = arith.constant 0 : index
      %12 = vector.load %arg3[%c0_15, %c0_16] : memref<128x48xbf16, #tpu.memory_space<vmem>>, vector<128x48xbf16>
      %c0_17 = arith.constant 0 : index
      %13 = arith.index_cast %arg13 : i32 to index
      %c0_18 = arith.constant 0 : index
      %c0_19 = arith.constant 0 : index
      %14 = vector.load %arg1[%c0_17, %13, %c0_18, %c0_19] : memref<1x8x48x384xbf16, #tpu.memory_space<vmem>>, vector<1x1x48x384xbf16>
      %15 = vector.shape_cast %14 : vector<1x1x48x384xbf16> to vector<48x384xbf16>
      %cst_20 = arith.constant dense<0.000000e+00> : vector<128x384xf32>
      %16 = tpu.matmul %12, %15, %cst_20 {dimension_numbers = #tpu.dot_dimension_numbers<[1], [0], [0], [1], [0, 0, 1, 1], [], []>} : vector<128x48xbf16>, vector<48x384xbf16>, vector<128x384xf32> -> vector<128x384xf32>
      %c0_21 = arith.constant 0 : index
      %c0_22 = arith.constant 0 : index
      %17 = vector.load %arg4[%c0_21, %c0_22] : memref<128x288xbf16, #tpu.memory_space<vmem>>, vector<128x288xbf16>
      %c0_23 = arith.constant 0 : index
      %c0_24 = arith.constant 0 : index
      %18 = vector.load %arg10[%c0_23, %c0_24] : memref<576x384xbf16, #tpu.memory_space<vmem>>, vector<288x384xbf16>
      %cst_25 = arith.constant dense<0.000000e+00> : vector<128x384xf32>
      %19 = tpu.matmul %17, %18, %cst_25 {dimension_numbers = #tpu.dot_dimension_numbers<[1], [0], [0], [1], [0, 0, 1, 1], [], []>} : vector<128x288xbf16>, vector<288x384xbf16>, vector<128x384xf32> -> vector<128x384xf32>
      %20 = arith.addf %16, %19 : vector<128x384xf32>
      %c0_26 = arith.constant 0 : index
      %c0_27 = arith.constant 0 : index
      %21 = vector.load %arg5[%c0_26, %c0_27] : memref<128x1xf32, #tpu.memory_space<vmem>>, vector<128x1xf32>
      %22 = vector.broadcast %21 : vector<128x1xf32> to vector<128x384xf32>
      %23 = arith.addf %20, %22 : vector<128x384xf32>
      %24 = vector.extract_strided_slice %23 {offsets = [0, 0], sizes = [32, 384], strides = [1, 1]} : vector<128x384xf32> to vector<32x384xf32>
      %cst_28 = arith.constant 5.000000e-01 : f32
      %25 = vector.broadcast %cst_28 : f32 to vector<32x384xf32>
      %26 = arith.mulf %25, %24 : vector<32x384xf32>
      %27 = math.tanh %26 : vector<32x384xf32>
      %cst_29 = arith.constant 5.000000e-01 : f32
      %28 = vector.broadcast %cst_29 : f32 to vector<32x384xf32>
      %29 = arith.mulf %28, %27 : vector<32x384xf32>
      %cst_30 = arith.constant 5.000000e-01 : f32
      %30 = vector.broadcast %cst_30 : f32 to vector<32x384xf32>
      %31 = arith.addf %29, %30 : vector<32x384xf32>
      %32 = vector.extract_strided_slice %23 {offsets = [32, 0], sizes = [32, 384], strides = [1, 1]} : vector<128x384xf32> to vector<32x384xf32>
      %cst_31 = arith.constant 5.000000e-01 : f32
      %33 = vector.broadcast %cst_31 : f32 to vector<32x384xf32>
      %34 = arith.mulf %33, %32 : vector<32x384xf32>
      %35 = math.tanh %34 : vector<32x384xf32>
      %cst_32 = arith.constant 5.000000e-01 : f32
      %36 = vector.broadcast %cst_32 : f32 to vector<32x384xf32>
      %37 = arith.mulf %36, %35 : vector<32x384xf32>
      %cst_33 = arith.constant 5.000000e-01 : f32
      %38 = vector.broadcast %cst_33 : f32 to vector<32x384xf32>
      %39 = arith.addf %37, %38 : vector<32x384xf32>
      %40 = vector.extract_strided_slice %23 {offsets = [64, 0], sizes = [32, 384], strides = [1, 1]} : vector<128x384xf32> to vector<32x384xf32>
      %cst_34 = arith.constant 5.000000e-01 : f32
      %41 = vector.broadcast %cst_34 : f32 to vector<32x384xf32>
      %42 = arith.mulf %41, %40 : vector<32x384xf32>
      %43 = math.tanh %42 : vector<32x384xf32>
      %cst_35 = arith.constant 5.000000e-01 : f32
      %44 = vector.broadcast %cst_35 : f32 to vector<32x384xf32>
      %45 = arith.mulf %44, %43 : vector<32x384xf32>
      %cst_36 = arith.constant 5.000000e-01 : f32
      %46 = vector.broadcast %cst_36 : f32 to vector<32x384xf32>
      %47 = arith.addf %45, %46 : vector<32x384xf32>
      %48 = vector.extract_strided_slice %23 {offsets = [96, 0], sizes = [32, 384], strides = [1, 1]} : vector<128x384xf32> to vector<32x384xf32>
      %49 = math.tanh %48 : vector<32x384xf32>
      %c0_37 = arith.constant 0 : index
      %c0_38 = arith.constant 0 : index
      %50 = vector.load %arg11[%c0_37, %c0_38] : memref<32x384xf32, #tpu.memory_space<vmem>>, vector<32x384xf32>
      %51 = arith.mulf %39, %50 : vector<32x384xf32>
      %52 = arith.mulf %31, %49 : vector<32x384xf32>
      %53 = arith.addf %51, %52 : vector<32x384xf32>
      %54 = vector.broadcast %6 : vector<1x384xf32> to vector<32x384xf32>
      %55 = arith.mulf %53, %54 : vector<32x384xf32>
      %56 = math.tanh %55 : vector<32x384xf32>
      %57 = arith.mulf %47, %56 : vector<32x384xf32>
      %c0_39 = arith.constant 0 : index
      %c0_40 = arith.constant 0 : index
      %58 = vector.load %arg11[%c0_39, %c0_40] : memref<32x384xf32, #tpu.memory_space<vmem>>, vector<32x384xf32>
      tpu.vector_store %arg11[%c0_39, %c0_40], %55 {strides = array<i32>} : memref<32x384xf32, #tpu.memory_space<vmem>>, vector<32x384xf32>,
      %c19_i32 = arith.constant 19 : i32
      %59 = tpu.dynamic_rotate %57 by %c19_i32 dim 1 : vector<32x384xf32>, i32 -> vector<32x384xf32>
      %60 = arith.truncf %59 : vector<32x384xf32> to vector<32x384xbf16>
      %c0_41 = arith.constant 0 : index
      %c0_42 = arith.constant 0 : index
      %61 = vector.load %arg10[%c0_41, %c0_42] : memref<576x384xbf16, #tpu.memory_space<vmem>>, vector<32x384xbf16>
      tpu.vector_store %arg10[%c0_41, %c0_42], %60 {strides = array<i32>} : memref<576x384xbf16, #tpu.memory_space<vmem>>, vector<32x384xbf16>,
      %c18_i32 = arith.constant 18 : i32
      %62 = tpu.dynamic_rotate %57 by %c18_i32 dim 1 : vector<32x384xf32>, i32 -> vector<32x384xf32>
      %63 = arith.truncf %62 : vector<32x384xf32> to vector<32x384xbf16>
      %c32 = arith.constant 32 : index
      %c0_43 = arith.constant 0 : index
      %64 = vector.load %arg10[%c32, %c0_43] : memref<576x384xbf16, #tpu.memory_space<vmem>>, vector<32x384xbf16>
      tpu.vector_store %arg10[%c32, %c0_43], %63 {strides = array<i32>} : memref<576x384xbf16, #tpu.memory_space<vmem>>, vector<32x384xbf16>,
      %c17_i32 = arith.constant 17 : i32
      %65 = tpu.dynamic_rotate %57 by %c17_i32 dim 1 : vector<32x384xf32>, i32 -> vector<32x384xf32>
      %66 = arith.truncf %65 : vector<32x384xf32> to vector<32x384xbf16>
      %c64 = arith.constant 64 : index
      %c0_44 = arith.constant 0 : index
      %67 = vector.load %arg10[%c64, %c0_44] : memref<576x384xbf16, #tpu.memory_space<vmem>>, vector<32x384xbf16>
      tpu.vector_store %arg10[%c64, %c0_44], %66 {strides = array<i32>} : memref<576x384xbf16, #tpu.memory_space<vmem>>, vector<32x384xbf16>,
      %c1_i32_45 = arith.constant 1 : i32
      %68 = tpu.dynamic_rotate %57 by %c1_i32_45 dim 1 : vector<32x384xf32>, i32 -> vector<32x384xf32>
      %69 = arith.truncf %68 : vector<32x384xf32> to vector<32x384xbf16>
      %c96 = arith.constant 96 : index
      %c0_46 = arith.constant 0 : index
      %70 = vector.load %arg10[%c96, %c0_46] : memref<576x384xbf16, #tpu.memory_space<vmem>>, vector<32x384xbf16>
      tpu.vector_store %arg10[%c96, %c0_46], %69 {strides = array<i32>} : memref<576x384xbf16, #tpu.memory_space<vmem>>, vector<32x384xbf16>,
      %71 = arith.truncf %57 : vector<32x384xf32> to vector<32x384xbf16>
      %c128 = arith.constant 128 : index
      %c0_47 = arith.constant 0 : index
      %72 = vector.load %arg10[%c128, %c0_47] : memref<576x384xbf16, #tpu.memory_space<vmem>>, vector<32x384xbf16>
      tpu.vector_store %arg10[%c128, %c0_47], %71 {strides = array<i32>} : memref<576x384xbf16, #tpu.memory_space<vmem>>, vector<32x384xbf16>,
      %c383_i32 = arith.constant 383 : i32
      %73 = tpu.dynamic_rotate %57 by %c383_i32 dim 1 : vector<32x384xf32>, i32 -> vector<32x384xf32>
      %74 = arith.truncf %73 : vector<32x384xf32> to vector<32x384xbf16>
      %c160 = arith.constant 160 : index
      %c0_48 = arith.constant 0 : index
      %75 = vector.load %arg10[%c160, %c0_48] : memref<576x384xbf16, #tpu.memory_space<vmem>>, vector<32x384xbf16>
      tpu.vector_store %arg10[%c160, %c0_48], %74 {strides = array<i32>} : memref<576x384xbf16, #tpu.memory_space<vmem>>, vector<32x384xbf16>,
      %c367_i32 = arith.constant 367 : i32
      %76 = tpu.dynamic_rotate %57 by %c367_i32 dim 1 : vector<32x384xf32>, i32 -> vector<32x384xf32>
      %77 = arith.truncf %76 : vector<32x384xf32> to vector<32x384xbf16>
      %c192 = arith.constant 192 : index
      %c0_49 = arith.constant 0 : index
      %78 = vector.load %arg10[%c192, %c0_49] : memref<576x384xbf16, #tpu.memory_space<vmem>>, vector<32x384xbf16>
      tpu.vector_store %arg10[%c192, %c0_49], %77 {strides = array<i32>} : memref<576x384xbf16, #tpu.memory_space<vmem>>, vector<32x384xbf16>,
      %c366_i32 = arith.constant 366 : i32
      %79 = tpu.dynamic_rotate %57 by %c366_i32 dim 1 : vector<32x384xf32>, i32 -> vector<32x384xf32>
      %80 = arith.truncf %79 : vector<32x384xf32> to vector<32x384xbf16>
      %c224 = arith.constant 224 : index
      %c0_50 = arith.constant 0 : index
      %81 = vector.load %arg10[%c224, %c0_50] : memref<576x384xbf16, #tpu.memory_space<vmem>>, vector<32x384xbf16>
      tpu.vector_store %arg10[%c224, %c0_50], %80 {strides = array<i32>} : memref<576x384xbf16, #tpu.memory_space<vmem>>, vector<32x384xbf16>,
      %c365_i32 = arith.constant 365 : i32
      %82 = tpu.dynamic_rotate %57 by %c365_i32 dim 1 : vector<32x384xf32>, i32 -> vector<32x384xf32>
      %83 = arith.truncf %82 : vector<32x384xf32> to vector<32x384xbf16>
      %c256 = arith.constant 256 : index
      %c0_51 = arith.constant 0 : index
      %84 = vector.load %arg10[%c256, %c0_51] : memref<576x384xbf16, #tpu.memory_space<vmem>>, vector<32x384xbf16>
      tpu.vector_store %arg10[%c256, %c0_51], %83 {strides = array<i32>} : memref<576x384xbf16, #tpu.memory_space<vmem>>, vector<32x384xbf16>,
      %c0_52 = arith.constant 0 : index
      %c0_53 = arith.constant 0 : index
      %85 = vector.load %arg6[%c0_52, %c0_53] : memref<128x576xbf16, #tpu.memory_space<vmem>>, vector<128x576xbf16>
      %c0_54 = arith.constant 0 : index
      %c0_55 = arith.constant 0 : index
      %86 = vector.load %arg10[%c0_54, %c0_55] : memref<576x384xbf16, #tpu.memory_space<vmem>>, vector<576x384xbf16>
      %cst_56 = arith.constant dense<0.000000e+00> : vector<128x384xf32>
      %87 = tpu.matmul %85, %86, %cst_56 {dimension_numbers = #tpu.dot_dimension_numbers<[1], [0], [0], [1], [0, 0, 1, 1], [], []>} : vector<128x576xbf16>, vector<576x384xbf16>, vector<128x384xf32> -> vector<128x384xf32>
      %c0_57 = arith.constant 0 : index
      %c0_58 = arith.constant 0 : index
      %88 = vector.load %arg7[%c0_57, %c0_58] : memref<128x1xf32, #tpu.memory_space<vmem>>, vector<128x1xf32>
      %89 = vector.broadcast %88 : vector<128x1xf32> to vector<128x384xf32>
      %90 = arith.addf %87, %89 : vector<128x384xf32>
      %91 = vector.extract_strided_slice %90 {offsets = [0, 0], sizes = [32, 384], strides = [1, 1]} : vector<128x384xf32> to vector<32x384xf32>
      %cst_59 = arith.constant 5.000000e-01 : f32
      %92 = vector.broadcast %cst_59 : f32 to vector<32x384xf32>
      %93 = arith.mulf %92, %91 : vector<32x384xf32>
      %94 = math.tanh %93 : vector<32x384xf32>
      %cst_60 = arith.constant 5.000000e-01 : f32
      %95 = vector.broadcast %cst_60 : f32 to vector<32x384xf32>
      %96 = arith.mulf %95, %94 : vector<32x384xf32>
      %cst_61 = arith.constant 5.000000e-01 : f32
      %97 = vector.broadcast %cst_61 : f32 to vector<32x384xf32>
      %98 = arith.addf %96, %97 : vector<32x384xf32>
      %99 = vector.extract_strided_slice %90 {offsets = [32, 0], sizes = [32, 384], strides = [1, 1]} : vector<128x384xf32> to vector<32x384xf32>
      %cst_62 = arith.constant 5.000000e-01 : f32
      %100 = vector.broadcast %cst_62 : f32 to vector<32x384xf32>
      %101 = arith.mulf %100, %99 : vector<32x384xf32>
      %102 = math.tanh %101 : vector<32x384xf32>
      %cst_63 = arith.constant 5.000000e-01 : f32
      %103 = vector.broadcast %cst_63 : f32 to vector<32x384xf32>
      %104 = arith.mulf %103, %102 : vector<32x384xf32>
      %cst_64 = arith.constant 5.000000e-01 : f32
      %105 = vector.broadcast %cst_64 : f32 to vector<32x384xf32>
      %106 = arith.addf %104, %105 : vector<32x384xf32>
      %107 = vector.extract_strided_slice %90 {offsets = [64, 0], sizes = [32, 384], strides = [1, 1]} : vector<128x384xf32> to vector<32x384xf32>
      %cst_65 = arith.constant 5.000000e-01 : f32
      %108 = vector.broadcast %cst_65 : f32 to vector<32x384xf32>
      %109 = arith.mulf %108, %107 : vector<32x384xf32>
      %110 = math.tanh %109 : vector<32x384xf32>
      %cst_66 = arith.constant 5.000000e-01 : f32
      %111 = vector.broadcast %cst_66 : f32 to vector<32x384xf32>
      %112 = arith.mulf %111, %110 : vector<32x384xf32>
      %cst_67 = arith.constant 5.000000e-01 : f32
      %113 = vector.broadcast %cst_67 : f32 to vector<32x384xf32>
      %114 = arith.addf %112, %113 : vector<32x384xf32>
      %115 = vector.extract_strided_slice %90 {offsets = [96, 0], sizes = [32, 384], strides = [1, 1]} : vector<128x384xf32> to vector<32x384xf32>
      %116 = math.tanh %115 : vector<32x384xf32>
      %c0_68 = arith.constant 0 : index
      %c0_69 = arith.constant 0 : index
      %117 = vector.load %arg12[%c0_68, %c0_69] : memref<32x384xf32, #tpu.memory_space<vmem>>, vector<32x384xf32>
      %118 = arith.mulf %106, %117 : vector<32x384xf32>
      %119 = arith.mulf %98, %116 : vector<32x384xf32>
      %120 = arith.addf %118, %119 : vector<32x384xf32>
      %121 = vector.broadcast %6 : vector<1x384xf32> to vector<32x384xf32>
      %122 = arith.mulf %120, %121 : vector<32x384xf32>
      %123 = math.tanh %122 : vector<32x384xf32>
      %124 = arith.mulf %114, %123 : vector<32x384xf32>
      %c0_70 = arith.constant 0 : index
      %c0_71 = arith.constant 0 : index
      %125 = vector.load %arg12[%c0_70, %c0_71] : memref<32x384xf32, #tpu.memory_space<vmem>>, vector<32x384xf32>
      tpu.vector_store %arg12[%c0_70, %c0_71], %122 {strides = array<i32>} : memref<32x384xf32, #tpu.memory_space<vmem>>, vector<32x384xf32>,
      %c19_i32_72 = arith.constant 19 : i32
      %126 = tpu.dynamic_rotate %124 by %c19_i32_72 dim 1 : vector<32x384xf32>, i32 -> vector<32x384xf32>
      %127 = arith.truncf %126 : vector<32x384xf32> to vector<32x384xbf16>
      %c288 = arith.constant 288 : index
      %c0_73 = arith.constant 0 : index
      %128 = vector.load %arg10[%c288, %c0_73] : memref<576x384xbf16, #tpu.memory_space<vmem>>, vector<32x384xbf16>
      tpu.vector_store %arg10[%c288, %c0_73], %127 {strides = array<i32>} : memref<576x384xbf16, #tpu.memory_space<vmem>>, vector<32x384xbf16>,
      %c18_i32_74 = arith.constant 18 : i32
      %129 = tpu.dynamic_rotate %124 by %c18_i32_74 dim 1 : vector<32x384xf32>, i32 -> vector<32x384xf32>
      %130 = arith.truncf %129 : vector<32x384xf32> to vector<32x384xbf16>
      %c320 = arith.constant 320 : index
      %c0_75 = arith.constant 0 : index
      %131 = vector.load %arg10[%c320, %c0_75] : memref<576x384xbf16, #tpu.memory_space<vmem>>, vector<32x384xbf16>
      tpu.vector_store %arg10[%c320, %c0_75], %130 {strides = array<i32>} : memref<576x384xbf16, #tpu.memory_space<vmem>>, vector<32x384xbf16>,
      %c17_i32_76 = arith.constant 17 : i32
      %132 = tpu.dynamic_rotate %124 by %c17_i32_76 dim 1 : vector<32x384xf32>, i32 -> vector<32x384xf32>
      %133 = arith.truncf %132 : vector<32x384xf32> to vector<32x384xbf16>
      %c352 = arith.constant 352 : index
      %c0_77 = arith.constant 0 : index
      %134 = vector.load %arg10[%c352, %c0_77] : memref<576x384xbf16, #tpu.memory_space<vmem>>, vector<32x384xbf16>
      tpu.vector_store %arg10[%c352, %c0_77], %133 {strides = array<i32>} : memref<576x384xbf16, #tpu.memory_space<vmem>>, vector<32x384xbf16>,
      %c1_i32_78 = arith.constant 1 : i32
      %135 = tpu.dynamic_rotate %124 by %c1_i32_78 dim 1 : vector<32x384xf32>, i32 -> vector<32x384xf32>
      %136 = arith.truncf %135 : vector<32x384xf32> to vector<32x384xbf16>
      %c384 = arith.constant 384 : index
      %c0_79 = arith.constant 0 : index
      %137 = vector.load %arg10[%c384, %c0_79] : memref<576x384xbf16, #tpu.memory_space<vmem>>, vector<32x384xbf16>
      tpu.vector_store %arg10[%c384, %c0_79], %136 {strides = array<i32>} : memref<576x384xbf16, #tpu.memory_space<vmem>>, vector<32x384xbf16>,
      %138 = arith.truncf %124 : vector<32x384xf32> to vector<32x384xbf16>
      %c416 = arith.constant 416 : index
      %c0_80 = arith.constant 0 : index
      %139 = vector.load %arg10[%c416, %c0_80] : memref<576x384xbf16, #tpu.memory_space<vmem>>, vector<32x384xbf16>
      tpu.vector_store %arg10[%c416, %c0_80], %138 {strides = array<i32>} : memref<576x384xbf16, #tpu.memory_space<vmem>>, vector<32x384xbf16>,
      %c383_i32_81 = arith.constant 383 : i32
      %140 = tpu.dynamic_rotate %124 by %c383_i32_81 dim 1 : vector<32x384xf32>, i32 -> vector<32x384xf32>
      %141 = arith.truncf %140 : vector<32x384xf32> to vector<32x384xbf16>
      %c448 = arith.constant 448 : index
      %c0_82 = arith.constant 0 : index
      %142 = vector.load %arg10[%c448, %c0_82] : memref<576x384xbf16, #tpu.memory_space<vmem>>, vector<32x384xbf16>
      tpu.vector_store %arg10[%c448, %c0_82], %141 {strides = array<i32>} : memref<576x384xbf16, #tpu.memory_space<vmem>>, vector<32x384xbf16>,
      %c367_i32_83 = arith.constant 367 : i32
      %143 = tpu.dynamic_rotate %124 by %c367_i32_83 dim 1 : vector<32x384xf32>, i32 -> vector<32x384xf32>
      %144 = arith.truncf %143 : vector<32x384xf32> to vector<32x384xbf16>
      %c480 = arith.constant 480 : index
      %c0_84 = arith.constant 0 : index
      %145 = vector.load %arg10[%c480, %c0_84] : memref<576x384xbf16, #tpu.memory_space<vmem>>, vector<32x384xbf16>
      tpu.vector_store %arg10[%c480, %c0_84], %144 {strides = array<i32>} : memref<576x384xbf16, #tpu.memory_space<vmem>>, vector<32x384xbf16>,
      %c366_i32_85 = arith.constant 366 : i32
      %146 = tpu.dynamic_rotate %124 by %c366_i32_85 dim 1 : vector<32x384xf32>, i32 -> vector<32x384xf32>
      %147 = arith.truncf %146 : vector<32x384xf32> to vector<32x384xbf16>
      %c512 = arith.constant 512 : index
      %c0_86 = arith.constant 0 : index
      %148 = vector.load %arg10[%c512, %c0_86] : memref<576x384xbf16, #tpu.memory_space<vmem>>, vector<32x384xbf16>
      tpu.vector_store %arg10[%c512, %c0_86], %147 {strides = array<i32>} : memref<576x384xbf16, #tpu.memory_space<vmem>>, vector<32x384xbf16>,
      %c365_i32_87 = arith.constant 365 : i32
      %149 = tpu.dynamic_rotate %124 by %c365_i32_87 dim 1 : vector<32x384xf32>, i32 -> vector<32x384xf32>
      %150 = arith.truncf %149 : vector<32x384xf32> to vector<32x384xbf16>
      %c544 = arith.constant 544 : index
      %c0_88 = arith.constant 0 : index
      %151 = vector.load %arg10[%c544, %c0_88] : memref<576x384xbf16, #tpu.memory_space<vmem>>, vector<32x384xbf16>
      tpu.vector_store %arg10[%c544, %c0_88], %150 {strides = array<i32>} : memref<576x384xbf16, #tpu.memory_space<vmem>>, vector<32x384xbf16>,
      %c0_89 = arith.constant 0 : index
      %152 = arith.index_cast %arg13 : i32 to index
      %c0_90 = arith.constant 0 : index
      %c0_91 = arith.constant 0 : index
      %153 = vector.load %arg8[%c0_89, %152, %c0_90, %c0_91] : memref<1x8x32x384xf32, #tpu.memory_space<vmem>>, vector<1x1x32x384xf32>
      %154 = vector.shape_cast %153 : vector<1x1x32x384xf32> to vector<32x384xf32>
      %155 = vector.shape_cast %124 : vector<32x384xf32> to vector<1x1x32x384xf32>
      tpu.vector_store %arg8[%c0_89, %152, %c0_90, %c0_91], %155 {strides = array<i32>} : memref<1x8x32x384xf32, #tpu.memory_space<vmem>>, vector<1x1x32x384xf32>,
    }
    %c8_i32_9 = arith.constant 8 : i32
    %c0_10 = arith.constant 0 : index
    %c0_11 = arith.constant 0 : index
    %8 = vector.load %arg12[%c0_10, %c0_11] : memref<32x384xf32, #tpu.memory_space<vmem>>, vector<32x384xf32>
    %c0_12 = arith.constant 0 : index
    %c0_13 = arith.constant 0 : index
    %c0_14 = arith.constant 0 : index
    %9 = vector.load %arg9[%c0_12, %c0_13, %c0_14] : memref<1x32x384xf32, #tpu.memory_space<vmem>>, vector<1x32x384xf32>
    %10 = vector.shape_cast %9 : vector<1x32x384xf32> to vector<32x384xf32>
    %11 = vector.shape_cast %8 : vector<32x384xf32> to vector<1x32x384xf32>
    tpu.vector_store %arg9[%c0_12, %c0_13, %c0_14], %11 {strides = array<i32>} : memref<1x32x384xf32, #tpu.memory_space<vmem>>, vector<1x32x384xf32>,
    return
  }
  func.func @transform_0(%arg0: i32) -> (i32, i32, i32, i32) {
    %c0_i32 = arith.constant 0 : i32
    %c0_i32_0 = arith.constant 0 : i32
    %c0_i32_1 = arith.constant 0 : i32
    %c0_i32_2 = arith.constant 0 : i32
    return %arg0, %c0_i32, %c0_i32_0, %c0_i32_1 : i32, i32, i32, i32
  }
  func.func @transform_1(%arg0: i32) -> (i32, i32) {
    %c0_i32 = arith.constant 0 : i32
    %c0_i32_0 = arith.constant 0 : i32
    %c0_i32_1 = arith.constant 0 : i32
    return %c0_i32, %c0_i32_0 : i32, i32
  }
  func.func @transform_2(%arg0: i32) -> (i32, i32) {
    %c0_i32 = arith.constant 0 : i32
    %c0_i32_0 = arith.constant 0 : i32
    %c0_i32_1 = arith.constant 0 : i32
    return %c0_i32, %c0_i32_0 : i32, i32
  }
  func.func @transform_3(%arg0: i32) -> (i32, i32) {
    %c0_i32 = arith.constant 0 : i32
    %c0_i32_0 = arith.constant 0 : i32
    %c0_i32_1 = arith.constant 0 : i32
    return %c0_i32, %c0_i32_0 : i32, i32
  }
  func.func @transform_4(%arg0: i32) -> (i32, i32) {
    %c0_i32 = arith.constant 0 : i32
    %c0_i32_0 = arith.constant 0 : i32
    %c0_i32_1 = arith.constant 0 : i32
    return %c0_i32, %c0_i32_0 : i32, i32
  }
  func.func @transform_5(%arg0: i32) -> (i32, i32) {
    %c0_i32 = arith.constant 0 : i32
    %c0_i32_0 = arith.constant 0 : i32
    %c0_i32_1 = arith.constant 0 : i32
    return %c0_i32, %c0_i32_0 : i32, i32
  }
  func.func @transform_6(%arg0: i32) -> (i32, i32) {
    %c0_i32 = arith.constant 0 : i32
    %c0_i32_0 = arith.constant 0 : i32
    %c0_i32_1 = arith.constant 0 : i32
    return %c0_i32, %c0_i32_0 : i32, i32
  }
  func.func @transform_7(%arg0: i32) -> (i32, i32, i32, i32) {
    %c0_i32 = arith.constant 0 : i32
    %c0_i32_0 = arith.constant 0 : i32
    %c0_i32_1 = arith.constant 0 : i32
    %c0_i32_2 = arith.constant 0 : i32
    return %arg0, %c0_i32, %c0_i32_0, %c0_i32_1 : i32, i32, i32, i32
  }
  func.func @transform_8(%arg0: i32) -> (i32, i32, i32) {
    %c0_i32 = arith.constant 0 : i32
    %c0_i32_0 = arith.constant 0 : i32
    %c0_i32_1 = arith.constant 0 : i32
    return %arg0, %c0_i32, %c0_i32_0 : i32, i32, i32
  }
}

</mosaic_0001>

<llo_original>
// kernel: convlstm2d_forward.1
$region0: #{convlstm2d_forward.1}
  #allocation0 [shape = 'u32[]', space=smem, size = 0x4, offset = 0x4, fixed_abs, tag = 'smem constant byte address 0x4 - core index']
  #allocation1 [shape = 'u32[144,128]{1,0:T(1,128)}', space=vmem, size = 0x12000, scoped, tag = 'internal scratch']
  #allocation2 [shape = 'bf16[576,384]{1,0:T(16,128)(2,1)}', space=vmem, size = 0x6c000, scoped, tag = 'scratch operand']
  #allocation3 [shape = 'f32[32,384]{1,0:T(8,128)}', space=vmem, size = 0xc000, scoped, tag = 'scratch operand']
  #allocation4 [shape = 'f32[32,384]{1,0:T(8,128)}', space=vmem, size = 0xc000, scoped, tag = 'scratch operand']
  %s0 = inlined_call_operand.vmem [shape: bf16[2,8,48,384], index: 0, kind: input, shape index: {}]
  %s1 = inlined_call_operand.vmem [shape: f32[1,384], index: 1, kind: input, shape index: {}]
  %s2 = inlined_call_operand.vmem [shape: bf16[128,48], index: 2, kind: input, shape index: {}]
  %s3 = inlined_call_operand.vmem [shape: bf16[128,288], index: 3, kind: input, shape index: {}]
  %s4 = inlined_call_operand.vmem [shape: f32[128,1], index: 4, kind: input, shape index: {}]
  %s5 = inlined_call_operand.vmem [shape: bf16[128,576], index: 5, kind: input, shape index: {}]
  %s6 = inlined_call_operand.vmem [shape: f32[128,1], index: 6, kind: input, shape index: {}]
  %s7 = inlined_call_operand.vmem [shape: f32[2,8,32,384], index: 7, kind: output, shape index: {0}]
  %s8 = inlined_call_operand.vmem [shape: f32[2,32,384], index: 8, kind: output, shape index: {1}]
  %9 = xla_tuple %s7, %s8
  %s10 = sld [smem:[#allocation0]]
  $region76: #{convlstm2d_forward.1} parent=0
    _
  %s12 = ssub.s32 1, %s10
  %s13 = scalar_select 0, %s12, %s10
  loop: start=0, step=1, limit=4
  $region2: #{convlstm2d_forward.1} parent=0 // loop_pre_header
    _
  $region3: #{convlstm2d_forward.1} parent=0 // loop_header
    %s15 = sphi 0, %s19
    %p16 = scmp.ge.s32.totalorder %s15, 4
    %s25 = sphi 0, %s27
    %s28 = sphi 0, %s25
    %s29 = sphi 0, %s28
    %s45 = sphi 0, %s29
    %s49 = sphi 0, %s49
    %s51 = sphi 0, %s49
    %s52 = sphi 0, %s51
    %s66 = sphi 0, %s52
    %s70 = sphi 0, %s70
    %s72 = sphi 0, %s70
    %s73 = sphi 0, %s72
    %s87 = sphi 0, %s73
    %s91 = sphi 0, %s91
    %s93 = sphi 0, %s91
    %s94 = sphi 0, %s93
    %s108 = sphi 0, %s94
    %s112 = sphi 0, %s112
    %s114 = sphi 0, %s112
    %s115 = sphi 0, %s114
    %s129 = sphi 0, %s115
    %s133 = sphi 0, %s133
    %s135 = sphi 0, %s133
    %s136 = sphi 0, %s135
    %s150 = sphi 0, %s136
    %s154 = sphi 0, %s154
    %s156 = sphi 0, %s154
    %s157 = sphi 0, %s156
    %s171 = sphi 0, %s157
    %s177 = sphi 0, %s179
    %s180 = sphi 0, %s177
    %s181 = sphi 0, %s180
    %s197 = sphi 0, %s181
    %s203 = sphi 0, %s205
    %s206 = sphi 0, %s203
    %s207 = sphi 0, %s206
    %s223 = sphi 0, %s207
  $region4: #{convlstm2d_forward.1} parent=0 // loop_header_branch
    %18 = sbr.rel (%p16) target = $region8
  $region5: #{convlstm2d_forward.1} parent=0 // loop_body
    %s20 = ssub.s32 %s15, 1
    %s21 = ssub.s32 %s15, 2
    %s22 = sadd.s32 %s15, 1
    %s23 = ssub.s32 %s15, %s22
    %p24 = scmp.eq.s32.totalorder %s23, 0
    %s26 = sadd.s32 %s25, 1
    %s27 = scalar_select %p24, %s25, %s26
    %p30 = pneg %p24
    %p31 = scmp.eq.s32.totalorder %s15, 1
    %p32 = por %p30, %p31
    %p33 = scmp.ne.s32.totalorder %s25, %s28
    %p34 = scmp.eq.s32.totalorder %s15, 0
    %p35 = por %p33, %p34
    %p36 = scmp.ne.s32.totalorder %s25, %s28
    %p37 = scmp.eq.s32.totalorder %s20, 1
    %p38 = por %p36, %p37
    %p39 = scmp.ne.s32.totalorder %s28, %s29
    %p40 = scmp.eq.s32.totalorder %s20, 0
    %p41 = por %p39, %p40
    %p42 = scmp.ne.s32.totalorder %s28, %s29
    %p43 = scmp.eq.s32.totalorder %s21, 1
    %p44 = por %p42, %p43
    %p46 = scmp.ne.s32.totalorder %s29, %s45
    %p47 = scmp.eq.s32.totalorder %s21, 0
    %p48 = por %p46, %p47
    %s50 = sadd.s32 %s49, 1
    %p53 = scmp.eq.s32.totalorder %s15, 1
    %p54 = scmp.ne.s32.totalorder %s49, %s51
    %p55 = scmp.eq.s32.totalorder %s15, 0
    %p56 = por %p54, %p55
    %p57 = scmp.ne.s32.totalorder %s49, %s51
    %p58 = scmp.eq.s32.totalorder %s20, 1
    %p59 = por %p57, %p58
    %p60 = scmp.ne.s32.totalorder %s51, %s52
    %p61 = scmp.eq.s32.totalorder %s20, 0
    %p62 = por %p60, %p61
    %p63 = scmp.ne.s32.totalorder %s51, %s52
    %p64 = scmp.eq.s32.totalorder %s21, 1
    %p65 = por %p63, %p64
    %p67 = scmp.ne.s32.totalorder %s52, %s66
    %p68 = scmp.eq.s32.totalorder %s21, 0
    %p69 = por %p67, %p68
    %s71 = sadd.s32 %s70, 1
    %p74 = scmp.eq.s32.totalorder %s15, 1
    %p75 = scmp.ne.s32.totalorder %s70, %s72
    %p76 = scmp.eq.s32.totalorder %s15, 0
    %p77 = por %p75, %p76
    %p78 = scmp.ne.s32.totalorder %s70, %s72
    %p79 = scmp.eq.s32.totalorder %s20, 1
    %p80 = por %p78, %p79
    %p81 = scmp.ne.s32.totalorder %s72, %s73
    %p82 = scmp.eq.s32.totalorder %s20, 0
    %p83 = por %p81, %p82
    %p84 = scmp.ne.s32.totalorder %s72, %s73
    %p85 = scmp.eq.s32.totalorder %s21, 1
    %p86 = por %p84, %p85
    %p88 = scmp.ne.s32.totalorder %s73, %s87
    %p89 = scmp.eq.s32.totalorder %s21, 0
    %p90 = por %p88, %p89
    %s92 = sadd.s32 %s91, 1
    %p95 = scmp.eq.s32.totalorder %s15, 1
    %p96 = scmp.ne.s32.totalorder %s91, %s93
    %p97 = scmp.eq.s32.totalorder %s15, 0
    %p98 = por %p96, %p97
    %p99 = scmp.ne.s32.totalorder %s91, %s93
    %p100 = scmp.eq.s32.totalorder %s20, 1
    %p101 = por %p99, %p100
    %p102 = scmp.ne.s32.totalorder %s93, %s94
    %p103 = scmp.eq.s32.totalorder %s20, 0
    %p104 = por %p102, %p103
    %p105 = scmp.ne.s32.totalorder %s93, %s94
    %p106 = scmp.eq.s32.totalorder %s21, 1
    %p107 = por %p105, %p106
    %p109 = scmp.ne.s32.totalorder %s94, %s108
    %p110 = scmp.eq.s32.totalorder %s21, 0
    %p111 = por %p109, %p110
    %s113 = sadd.s32 %s112, 1
    %p116 = scmp.eq.s32.totalorder %s15, 1
    %p117 = scmp.ne.s32.totalorder %s112, %s114
    %p118 = scmp.eq.s32.totalorder %s15, 0
    %p119 = por %p117, %p118
    %p120 = scmp.ne.s32.totalorder %s112, %s114
    %p121 = scmp.eq.s32.totalorder %s20, 1
    %p122 = por %p120, %p121
    %p123 = scmp.ne.s32.totalorder %s114, %s115
    %p124 = scmp.eq.s32.totalorder %s20, 0
    %p125 = por %p123, %p124
    %p126 = scmp.ne.s32.totalorder %s114, %s115
    %p127 = scmp.eq.s32.totalorder %s21, 1
    %p128 = por %p126, %p127
    %p130 = scmp.ne.s32.totalorder %s115, %s129
    %p131 = scmp.eq.s32.totalorder %s21, 0
    %p132 = por %p130, %p131
    %s134 = sadd.s32 %s133, 1
    %p137 = scmp.eq.s32.totalorder %s15, 1
    %p138 = scmp.ne.s32.totalorder %s133, %s135
    %p139 = scmp.eq.s32.totalorder %s15, 0
    %p140 = por %p138, %p139
    %p141 = scmp.ne.s32.totalorder %s133, %s135
    %p142 = scmp.eq.s32.totalorder %s20, 1
    %p143 = por %p141, %p142
    %p144 = scmp.ne.s32.totalorder %s135, %s136
    %p145 = scmp.eq.s32.totalorder %s20, 0
    %p146 = por %p144, %p145
    %p147 = scmp.ne.s32.totalorder %s135, %s136
    %p148 = scmp.eq.s32.totalorder %s21, 1
    %p149 = por %p147, %p148
    %p151 = scmp.ne.s32.totalorder %s136, %s150
    %p152 = scmp.eq.s32.totalorder %s21, 0
    %p153 = por %p151, %p152
    %s155 = sadd.s32 %s154, 1
    %p158 = scmp.eq.s32.totalorder %s15, 1
    %p159 = scmp.ne.s32.totalorder %s154, %s156
    %p160 = scmp.eq.s32.totalorder %s15, 0
    %p161 = por %p159, %p160
    %p162 = scmp.ne.s32.totalorder %s154, %s156
    %p163 = scmp.eq.s32.totalorder %s20, 1
    %p164 = por %p162, %p163
    %p165 = scmp.ne.s32.totalorder %s156, %s157
    %p166 = scmp.eq.s32.totalorder %s20, 0
    %p167 = por %p165, %p166
    %p168 = scmp.ne.s32.totalorder %s156, %s157
    %p169 = scmp.eq.s32.totalorder %s21, 1
    %p170 = por %p168, %p169
    %p172 = scmp.ne.s32.totalorder %s157, %s171
    %p173 = scmp.eq.s32.totalorder %s21, 0
    %p174 = por %p172, %p173
    %s175 = ssub.s32 %s15, %s22
    %p176 = scmp.eq.s32.totalorder %s175, 0
    %s178 = sadd.s32 %s177, 1
    %s179 = scalar_select %p176, %s177, %s178
    %p182 = pneg %p176
    %p183 = scmp.eq.s32.totalorder %s15, 1
    %p184 = por %p182, %p183
    %p185 = scmp.ne.s32.totalorder %s177, %s180
    %p186 = scmp.eq.s32.totalorder %s15, 0
    %p187 = por %p185, %p186
    %p188 = scmp.ne.s32.totalorder %s177, %s180
    %p189 = scmp.eq.s32.totalorder %s20, 1
    %p190 = por %p188, %p189
    %p191 = scmp.ne.s32.totalorder %s180, %s181
    %p192 = scmp.eq.s32.totalorder %s20, 0
    %p193 = por %p191, %p192
    %p194 = scmp.ne.s32.totalorder %s180, %s181
    %p195 = scmp.eq.s32.totalorder %s21, 1
    %p196 = por %p194, %p195
    %p198 = scmp.ne.s32.totalorder %s181, %s197
    %p199 = scmp.eq.s32.totalorder %s21, 0
    %p200 = por %p198, %p199
    %s201 = ssub.s32 %s15, %s22
    %p202 = scmp.eq.s32.totalorder %s201, 0
    %s204 = sadd.s32 %s203, 1
    %s205 = scalar_select %p202, %s203, %s204
    %p208 = pneg %p202
    %p209 = scmp.eq.s32.totalorder %s15, 1
    %p210 = por %p208, %p209
    %p211 = scmp.ne.s32.totalorder %s203, %s206
    %p212 = scmp.eq.s32.totalorder %s15, 0
    %p213 = por %p211, %p212
    %p214 = scmp.ne.s32.totalorder %s203, %s206
    %p215 = scmp.eq.s32.totalorder %s20, 1
    %p216 = por %p214, %p215
    %p217 = scmp.ne.s32.totalorder %s206, %s207
    %p218 = scmp.eq.s32.totalorder %s20, 0
    %p219 = por %p217, %p218
    %p220 = scmp.ne.s32.totalorder %s206, %s207
    %p221 = scmp.eq.s32.totalorder %s21, 1
    %p222 = por %p220, %p221
    %p224 = scmp.ne.s32.totalorder %s207, %s223
    %p225 = scmp.eq.s32.totalorder %s21, 0
    %p226 = por %p224, %p225
    %p227 = scmp.le.s32.totalorder 1, %s15
    %p228 = scmp.lt.s32.totalorder %s15, 3
    %p229 = pnand %p227, %p228
    %p230 = pneg %p229
    // Predicated region
    $region9: #{convlstm2d_forward.1} parent=5 // pred_check
      _
    $region10: #{convlstm2d_forward.1} parent=5 // pred_check_branch
      %232 = sbr.rel (%p229) target = $region12
    $region11: #{convlstm2d_forward.1} parent=5 // pred_region
      %s233 = ssub.s32 %s15, 1
      // Predicated region
      $region13: #{convlstm2d_forward.1} parent=11 // pred_check
        %p234 = pneg %p62
      $region14: #{convlstm2d_forward.1} parent=11 // pred_check_branch
        %236 = sbr.rel (%p234) target = $region16
      $region15: #{convlstm2d_forward.1} parent=11 // pred_region
        _
      $region16: #{convlstm2d_forward.1} parent=11 // pred_fallthru
        _
      // Predicated region
      $region17: #{convlstm2d_forward.1} parent=11 // pred_check
        %p237 = pneg %p83
      $region18: #{convlstm2d_forward.1} parent=11 // pred_check_branch
        %239 = sbr.rel (%p237) target = $region20
      $region19: #{convlstm2d_forward.1} parent=11 // pred_region
        _
      $region20: #{convlstm2d_forward.1} parent=11 // pred_fallthru
        _
      // Predicated region
      $region21: #{convlstm2d_forward.1} parent=11 // pred_check
        %p240 = pneg %p104
      $region22: #{convlstm2d_forward.1} parent=11 // pred_check_branch
        %242 = sbr.rel (%p240) target = $region24
      $region23: #{convlstm2d_forward.1} parent=11 // pred_region
        _
      $region24: #{convlstm2d_forward.1} parent=11 // pred_fallthru
        _
      // Predicated region
      $region25: #{convlstm2d_forward.1} parent=11 // pred_check
        %p243 = pneg %p125
      $region26: #{convlstm2d_forward.1} parent=11 // pred_check_branch
        %245 = sbr.rel (%p243) target = $region28
      $region27: #{convlstm2d_forward.1} parent=11 // pred_region
        _
      $region28: #{convlstm2d_forward.1} parent=11 // pred_fallthru
        _
      // Predicated region
      $region29: #{convlstm2d_forward.1} parent=11 // pred_check
        %p246 = pneg %p146
      $region30: #{convlstm2d_forward.1} parent=11 // pred_check_branch
        %248 = sbr.rel (%p246) target = $region32
      $region31: #{convlstm2d_forward.1} parent=11 // pred_region
        _
      $region32: #{convlstm2d_forward.1} parent=11 // pred_fallthru
        _
      // Predicated region
      $region33: #{convlstm2d_forward.1} parent=11 // pred_check
        %p249 = pneg %p167
      $region34: #{convlstm2d_forward.1} parent=11 // pred_check_branch
        %251 = sbr.rel (%p249) target = $region36
      $region35: #{convlstm2d_forward.1} parent=11 // pred_region
        _
      $region36: #{convlstm2d_forward.1} parent=11 // pred_fallthru
        _
    $region12: #{convlstm2d_forward.1} parent=5 // pred_fallthru
      _
    %p252 = scmp.lt.s32.totalorder %s15, 2
    // Predicated region
    $region37: #{convlstm2d_forward.1} parent=5 // pred_check
      %p253 = pneg %p252
    $region38: #{convlstm2d_forward.1} parent=5 // pred_check_branch
      %255 = sbr.rel (%p253) target = $region40
    $region39: #{convlstm2d_forward.1} parent=5 // pred_region
      // Predicated region
      $region41: #{convlstm2d_forward.1} parent=39 // pred_check
        %p256 = pneg %p35
      $region42: #{convlstm2d_forward.1} parent=39 // pred_check_branch
        %258 = sbr.rel (%p256) target = $region44
      $region43: #{convlstm2d_forward.1} parent=39 // pred_region
        %p259 = scmp.lt.s32.totalorder %s15, 1
        %s260 = scalar_select %p259, %s15, 1
        %s261 = smul.addr %s260, 144
        %s262 = smul.addr %s261, 4
        %s263 = scalar_lea.vmem %s0, %s262
      $region44: #{convlstm2d_forward.1} parent=39 // pred_fallthru
        _
    $region40: #{convlstm2d_forward.1} parent=5 // pred_fallthru
      _
    %p264 = scmp.le.s32.totalorder 1, %s15
    %p265 = scmp.lt.s32.totalorder %s15, 3
    %p266 = pnand %p264, %p265
    %p267 = pneg %p266
    // Predicated region
    $region45: #{convlstm2d_forward.1} parent=5 // pred_check
      _
    $region46: #{convlstm2d_forward.1} parent=5 // pred_check_branch
      %269 = sbr.rel (%p266) target = $region48
    $region47: #{convlstm2d_forward.1} parent=5 // pred_region
      %s270 = ssub.s32 %s15, 1
      %p271 = scmp.lt.s32.totalorder %s20, 1
      %s272 = scalar_select %p271, %s20, 1
      %s273 = smul.addr %s272, 144
      %s274 = smul.addr %s273, 4
      %s275 = scalar_lea.vmem %s0, %s274
      %p276 = pneg %p41
      %p277 = pneg %p38
      %p278 = pneg %p62
      %p279 = pneg %p59
      %p280 = pneg %p83
      %p281 = pneg %p80
      %p282 = pneg %p104
      %p283 = pneg %p101
      %p284 = pneg %p125
      %p285 = pneg %p122
      %p286 = pneg %p146
      %p287 = pneg %p143
      %p288 = pneg %p167
      %p289 = pneg %p164
      %p290 = pneg %p193
      %p291 = pneg %p190
      %p292 = scmp.lt.s32.totalorder %s20, 1
      %s293 = scalar_select %p292, %s20, 1
      %s294 = smul.addr %s293, 96
      %s295 = smul.addr %s294, 8
      %s296 = scalar_lea.vmem %s7, %s295
      %p297 = pneg %p219
      %p298 = pneg %p216
      %p299 = scmp.lt.s32.totalorder %s20, 1
      %s300 = scalar_select %p299, %s20, 1
      %s301 = smul.addr %s300, 12
      %s302 = smul.addr %s301, 8
      %s303 = scalar_lea.vmem %s8, %s302
      %p304 = scmp.lt.s32.totalorder %s20, 1
      %s305 = scalar_select %p304, %s20, 1
      %s306 = smul.addr %s305, 144
      %s307 = smul.addr %s306, 4
      %s308 = scalar_lea.vmem %s0, %s307
      %p309 = scmp.lt.s32.totalorder %s20, 1
      %s310 = scalar_select %p309, %s20, 1
      %s311 = smul.addr %s310, 96
      %s312 = smul.addr %s311, 8
      %s313 = scalar_lea.vmem %s7, %s312
      %p314 = scmp.lt.s32.totalorder %s20, 1
      %s315 = scalar_select %p314, %s20, 1
      %s316 = smul.addr %s315, 12
      %s317 = smul.addr %s316, 8
      %s318 = scalar_lea.vmem %s8, %s317
      %320 = vst [vmem:[#allocation2] sm:$0xff] 0
      %321 = vst [vmem:[#allocation2 + $0x8] sm:$0xff] 0
      %322 = vst [vmem:[#allocation2 + $0x10] sm:$0xff] 0
      %323 = vst [vmem:[#allocation2 + $0x18] sm:$0xff] 0
      %324 = vst [vmem:[#allocation2 + $0x20] sm:$0xff] 0
      %325 = vst [vmem:[#allocation2 + $0x28] sm:$0xff] 0
      %326 = vst [vmem:[#allocation2 + $0x30] sm:$0xff] 0
      %327 = vst [vmem:[#allocation2 + $0x38] sm:$0xff] 0
      %328 = vst [vmem:[#allocation2 + $0x40] sm:$0xff] 0
      %329 = vst [vmem:[#allocation2 + $0x48] sm:$0xff] 0
      %330 = vst [vmem:[#allocation2 + $0x50] sm:$0xff] 0
      %331 = vst [vmem:[#allocation2 + $0x58] sm:$0xff] 0
      %332 = vst [vmem:[#allocation2 + $0x60] sm:$0xff] 0
      %333 = vst [vmem:[#allocation2 + $0x68] sm:$0xff] 0
      %334 = vst [vmem:[#allocation2 + $0x70] sm:$0xff] 0
      %335 = vst [vmem:[#allocation2 + $0x78] sm:$0xff] 0
      %336 = vst [vmem:[#allocation2 + $0x80] sm:$0xff] 0
      %337 = vst [vmem:[#allocation2 + $0x88] sm:$0xff] 0
      %338 = vst [vmem:[#allocation2 + $0x90] sm:$0xff] 0
      %339 = vst [vmem:[#allocation2 + $0x98] sm:$0xff] 0
      %340 = vst [vmem:[#allocation2 + $0xa0] sm:$0xff] 0
      %341 = vst [vmem:[#allocation2 + $0xa8] sm:$0xff] 0
      %342 = vst [vmem:[#allocation2 + $0xb0] sm:$0xff] 0
      %343 = vst [vmem:[#allocation2 + $0xb8] sm:$0xff] 0
      %344 = vst [vmem:[#allocation2 + $0xc0] sm:$0xff] 0
      %345 = vst [vmem:[#allocation2 + $0xc8] sm:$0xff] 0
      %346 = vst [vmem:[#allocation2 + $0xd0] sm:$0xff] 0
      %347 = vst [vmem:[#allocation2 + $0xd8] sm:$0xff] 0
      %348 = vst [vmem:[#allocation2 + $0xe0] sm:$0xff] 0
      %349 = vst [vmem:[#allocation2 + $0xe8] sm:$0xff] 0
      %350 = vst [vmem:[#allocation2 + $0xf0] sm:$0xff] 0
      %351 = vst [vmem:[#allocation2 + $0xf8] sm:$0xff] 0
      %352 = vst [vmem:[#allocation2 + $0x100] sm:$0xff] 0
      %353 = vst [vmem:[#allocation2 + $0x108] sm:$0xff] 0
      %354 = vst [vmem:[#allocation2 + $0x110] sm:$0xff] 0
      %355 = vst [vmem:[#allocation2 + $0x118] sm:$0xff] 0
      %356 = vst [vmem:[#allocation2 + $0x120] sm:$0xff] 0
      %357 = vst [vmem:[#allocation2 + $0x128] sm:$0xff] 0
      %358 = vst [vmem:[#allocation2 + $0x130] sm:$0xff] 0
      %359 = vst [vmem:[#allocation2 + $0x138] sm:$0xff] 0
      %360 = vst [vmem:[#allocation2 + $0x140] sm:$0xff] 0
      %361 = vst [vmem:[#allocation2 + $0x148] sm:$0xff] 0
      %362 = vst [vmem:[#allocation2 + $0x150] sm:$0xff] 0
      %363 = vst [vmem:[#allocation2 + $0x158] sm:$0xff] 0
      %364 = vst [vmem:[#allocation2 + $0x160] sm:$0xff] 0
      %365 = vst [vmem:[#allocation2 + $0x168] sm:$0xff] 0
      %366 = vst [vmem:[#allocation2 + $0x170] sm:$0xff] 0
      %367 = vst [vmem:[#allocation2 + $0x178] sm:$0xff] 0
      %368 = vst [vmem:[#allocation2 + $0x180] sm:$0xff] 0
      %369 = vst [vmem:[#allocation2 + $0x188] sm:$0xff] 0
      %370 = vst [vmem:[#allocation2 + $0x190] sm:$0xff] 0
      %371 = vst [vmem:[#allocation2 + $0x198] sm:$0xff] 0
      %372 = vst [vmem:[#allocation2 + $0x1a0] sm:$0xff] 0
      %373 = vst [vmem:[#allocation2 + $0x1a8] sm:$0xff] 0
      %374 = vst [vmem:[#allocation2 + $0x1b0] sm:$0xff] 0
      %375 = vst [vmem:[#allocation2 + $0x1b8] sm:$0xff] 0
      %376 = vst [vmem:[#allocation2 + $0x1c0] sm:$0xff] 0
      %377 = vst [vmem:[#allocation2 + $0x1c8] sm:$0xff] 0
      %378 = vst [vmem:[#allocation2 + $0x1d0] sm:$0xff] 0
      %379 = vst [vmem:[#allocation2 + $0x1d8] sm:$0xff] 0
      %380 = vst [vmem:[#allocation2 + $0x1e0] sm:$0xff] 0
      %381 = vst [vmem:[#allocation2 + $0x1e8] sm:$0xff] 0
      %382 = vst [vmem:[#allocation2 + $0x1f0] sm:$0xff] 0
      %383 = vst [vmem:[#allocation2 + $0x1f8] sm:$0xff] 0
      %384 = vst [vmem:[#allocation2 + $0x200] sm:$0xff] 0
      %385 = vst [vmem:[#allocation2 + $0x208] sm:$0xff] 0
      %386 = vst [vmem:[#allocation2 + $0x210] sm:$0xff] 0
      %387 = vst [vmem:[#allocation2 + $0x218] sm:$0xff] 0
      %388 = vst [vmem:[#allocation2 + $0x220] sm:$0xff] 0
      %389 = vst [vmem:[#allocation2 + $0x228] sm:$0xff] 0
      %390 = vst [vmem:[#allocation2 + $0x230] sm:$0xff] 0
      %391 = vst [vmem:[#allocation2 + $0x238] sm:$0xff] 0
      %392 = vst [vmem:[#allocation2 + $0x240] sm:$0xff] 0
      %393 = vst [vmem:[#allocation2 + $0x248] sm:$0xff] 0
      %394 = vst [vmem:[#allocation2 + $0x250] sm:$0xff] 0
      %395 = vst [vmem:[#allocation2 + $0x258] sm:$0xff] 0
      %396 = vst [vmem:[#allocation2 + $0x260] sm:$0xff] 0
      %397 = vst [vmem:[#allocation2 + $0x268] sm:$0xff] 0
      %398 = vst [vmem:[#allocation2 + $0x270] sm:$0xff] 0
      %399 = vst [vmem:[#allocation2 + $0x278] sm:$0xff] 0
      %400 = vst [vmem:[#allocation2 + $0x280] sm:$0xff] 0
      %401 = vst [vmem:[#allocation2 + $0x288] sm:$0xff] 0
      %402 = vst [vmem:[#allocation2 + $0x290] sm:$0xff] 0
      %403 = vst [vmem:[#allocation2 + $0x298] sm:$0xff] 0
      %404 = vst [vmem:[#allocation2 + $0x2a0] sm:$0xff] 0
      %405 = vst [vmem:[#allocation2 + $0x2a8] sm:$0xff] 0
      %406 = vst [vmem:[#allocation2 + $0x2b0] sm:$0xff] 0
      %407 = vst [vmem:[#allocation2 + $0x2b8] sm:$0xff] 0
      %408 = vst [vmem:[#allocation2 + $0x2c0] sm:$0xff] 0
      %409 = vst [vmem:[#allocation2 + $0x2c8] sm:$0xff] 0
      %410 = vst [vmem:[#allocation2 + $0x2d0] sm:$0xff] 0
      %411 = vst [vmem:[#allocation2 + $0x2d8] sm:$0xff] 0
      %412 = vst [vmem:[#allocation2 + $0x2e0] sm:$0xff] 0
      %413 = vst [vmem:[#allocation2 + $0x2e8] sm:$0xff] 0
      %414 = vst [vmem:[#allocation2 + $0x2f0] sm:$0xff] 0
      %415 = vst [vmem:[#allocation2 + $0x2f8] sm:$0xff] 0
      %416 = vst [vmem:[#allocation2 + $0x300] sm:$0xff] 0
      %417 = vst [vmem:[#allocation2 + $0x308] sm:$0xff] 0
      %418 = vst [vmem:[#allocation2 + $0x310] sm:$0xff] 0
      %419 = vst [vmem:[#allocation2 + $0x318] sm:$0xff] 0
      %420 = vst [vmem:[#allocation2 + $0x320] sm:$0xff] 0
      %421 = vst [vmem:[#allocation2 + $0x328] sm:$0xff] 0
      %422 = vst [vmem:[#allocation2 + $0x330] sm:$0xff] 0
      %423 = vst [vmem:[#allocation2 + $0x338] sm:$0xff] 0
      %424 = vst [vmem:[#allocation2 + $0x340] sm:$0xff] 0
      %425 = vst [vmem:[#allocation2 + $0x348] sm:$0xff] 0
      %426 = vst [vmem:[#allocation2 + $0x350] sm:$0xff] 0
      %427 = vst [vmem:[#allocation2 + $0x358] sm:$0xff] 0
      %428 = vst [vmem:[#allocation3] sm:$0xff] 0.0
      %429 = vst [vmem:[#allocation3 + $0x8] sm:$0xff] 0.0
      %430 = vst [vmem:[#allocation3 + $0x10] sm:$0xff] 0.0
      %431 = vst [vmem:[#allocation3 + $0x18] sm:$0xff] 0.0
      %432 = vst [vmem:[#allocation3 + $0x20] sm:$0xff] 0.0
      %433 = vst [vmem:[#allocation3 + $0x28] sm:$0xff] 0.0
      %434 = vst [vmem:[#allocation3 + $0x30] sm:$0xff] 0.0
      %435 = vst [vmem:[#allocation3 + $0x38] sm:$0xff] 0.0
      %436 = vst [vmem:[#allocation3 + $0x40] sm:$0xff] 0.0
      %437 = vst [vmem:[#allocation3 + $0x48] sm:$0xff] 0.0
      %438 = vst [vmem:[#allocation3 + $0x50] sm:$0xff] 0.0
      %439 = vst [vmem:[#allocation3 + $0x58] sm:$0xff] 0.0
      %440 = vst [vmem:[#allocation4] sm:$0xff] 0.0
      %441 = vst [vmem:[#allocation4 + $0x8] sm:$0xff] 0.0
      %442 = vst [vmem:[#allocation4 + $0x10] sm:$0xff] 0.0
      %443 = vst [vmem:[#allocation4 + $0x18] sm:$0xff] 0.0
      %444 = vst [vmem:[#allocation4 + $0x20] sm:$0xff] 0.0
      %445 = vst [vmem:[#allocation4 + $0x28] sm:$0xff] 0.0
      %446 = vst [vmem:[#allocation4 + $0x30] sm:$0xff] 0.0
      %447 = vst [vmem:[#allocation4 + $0x38] sm:$0xff] 0.0
      %448 = vst [vmem:[#allocation4 + $0x40] sm:$0xff] 0.0
      %449 = vst [vmem:[#allocation4 + $0x48] sm:$0xff] 0.0
      %450 = vst [vmem:[#allocation4 + $0x50] sm:$0xff] 0.0
      %451 = vst [vmem:[#allocation4 + $0x58] sm:$0xff] 0.0
      %v452 = vld [vmem:[%s1] sm:$0x7]
      loop: start=0, step=1, limit=8
      $region49: #{convlstm2d_forward.1} parent=47 // loop_pre_header
        _
      $region50: #{convlstm2d_forward.1} parent=47 // loop_header
        %s454 = sphi 0, %s458
        %p455 = scmp.ge.s32.totalorder %s454, 8
      $region51: #{convlstm2d_forward.1} parent=47 // loop_header_branch
        %457 = sbr.rel (%p455) target = $region55
      $region52: #{convlstm2d_forward.1} parent=47 // loop_body
        %v459 = vld [vmem:[%s2] sm:$0xf]
        %v460 = vld [vmem:[%s2 + $0x4] sm:$0xf]
        %v461 = vld [vmem:[%s2 + $0x8] sm:$0xf]
        %v462 = vld [vmem:[%s2 + $0xc] sm:$0xf]
        %v463 = vld [vmem:[%s2 + $0x10] sm:$0xf]
        %v464 = vld [vmem:[%s2 + $0x14] sm:$0xf]
        %v465 = vld [vmem:[%s2 + $0x18] sm:$0xf]
        %v466 = vld [vmem:[%s2 + $0x1c] sm:$0xf]
        %v467 = vld [vmem:[%s2 + $0x20] sm:$0xf]
        %v468 = vld [vmem:[%s2 + $0x24] sm:$0xf]
        %v469 = vld [vmem:[%s2 + $0x28] sm:$0xf]
        %v470 = vld [vmem:[%s2 + $0x2c] sm:$0xf]
        %v471 = vld [vmem:[%s2 + $0x30] sm:$0xf]
        %v472 = vld [vmem:[%s2 + $0x34] sm:$0xf]
        %v473 = vld [vmem:[%s2 + $0x38] sm:$0xf]
        %v474 = vld [vmem:[%s2 + $0x3c] sm:$0xf]
        %s475 = smul.u32 %s454, 18
        %s476 = smul.addr %s475, 4
        %s477 = scalar_lea.vmem %s308, %s476
        %v478 = vld [vmem:[%s477] sm:$0xff]
        %v479 = vld [vmem:[%s477 + $0x8] sm:$0xf]
        %v480 = vld [vmem:[%s477 + $0xc] sm:$0xff]
        %v481 = vld [vmem:[%s477 + $0x14] sm:$0xf]
        %v482 = vld [vmem:[%s477 + $0x18] sm:$0xff]
        %v483 = vld [vmem:[%s477 + $0x20] sm:$0xf]
        %v484 = vld [vmem:[%s477 + $0x24] sm:$0xff]
        %v485 = vld [vmem:[%s477 + $0x2c] sm:$0xf]
        %v486 = vld [vmem:[%s477 + $0x30] sm:$0xff]
        %v487 = vld [vmem:[%s477 + $0x38] sm:$0xf]
        %v488 = vld [vmem:[%s477 + $0x3c] sm:$0xff]
        %v489 = vld [vmem:[%s477 + $0x44] sm:$0xf]
        %v490 = vld [vmem:[%s3] sm:$0xff]
        %v491 = vld [vmem:[%s3 + $0x8] sm:$0xf]
        %v492 = vld [vmem:[%s3 + $0xc] sm:$0xff]
        %v493 = vld [vmem:[%s3 + $0x14] sm:$0xf]
        %v494 = vld [vmem:[%s3 + $0x18] sm:$0xff]
        %v495 = vld [vmem:[%s3 + $0x20] sm:$0xf]
        %v496 = vld [vmem:[%s3 + $0x24] sm:$0xff]
        %v497 = vld [vmem:[%s3 + $0x2c] sm:$0xf]
        %v498 = vld [vmem:[%s3 + $0x30] sm:$0xff]
        %v499 = vld [vmem:[%s3 + $0x38] sm:$0xf]
        %v500 = vld [vmem:[%s3 + $0x3c] sm:$0xff]
        %v501 = vld [vmem:[%s3 + $0x44] sm:$0xf]
        %v502 = vld [vmem:[%s3 + $0x48] sm:$0xff]
        %v503 = vld [vmem:[%s3 + $0x50] sm:$0xf]
        %v504 = vld [vmem:[%s3 + $0x54] sm:$0xff]
        %v505 = vld [vmem:[%s3 + $0x5c] sm:$0xf]
        %v506 = vld [vmem:[%s3 + $0x60] sm:$0xff]
        %v507 = vld [vmem:[%s3 + $0x68] sm:$0xf]
        %v508 = vld [vmem:[%s3 + $0x6c] sm:$0xff]
        %v509 = vld [vmem:[%s3 + $0x74] sm:$0xf]
        %v510 = vld [vmem:[%s3 + $0x78] sm:$0xff]
        %v511 = vld [vmem:[%s3 + $0x80] sm:$0xf]
        %v512 = vld [vmem:[%s3 + $0x84] sm:$0xff]
        %v513 = vld [vmem:[%s3 + $0x8c] sm:$0xf]
        %v514 = vld [vmem:[%s3 + $0x90] sm:$0xff]
        %v515 = vld [vmem:[%s3 + $0x98] sm:$0xf]
        %v516 = vld [vmem:[%s3 + $0x9c] sm:$0xff]
        %v517 = vld [vmem:[%s3 + $0xa4] sm:$0xf]
        %v518 = vld [vmem:[%s3 + $0xa8] sm:$0xff]
        %v519 = vld [vmem:[%s3 + $0xb0] sm:$0xf]
        %v520 = vld [vmem:[%s3 + $0xb4] sm:$0xff]
        %v521 = vld [vmem:[%s3 + $0xbc] sm:$0xf]
        %v522 = vld [vmem:[#allocation2] sm:$0xff]
        %v523 = vld [vmem:[#allocation2 + $0x8] sm:$0xff]
        %v524 = vld [vmem:[#allocation2 + $0x10] sm:$0xff]
        %v525 = vld [vmem:[#allocation2 + $0x18] sm:$0xff]
        %v526 = vld [vmem:[#allocation2 + $0x20] sm:$0xff]
        %v527 = vld [vmem:[#allocation2 + $0x28] sm:$0xff]
        %v528 = vld [vmem:[#allocation2 + $0x30] sm:$0xff]
        %v529 = vld [vmem:[#allocation2 + $0x38] sm:$0xff]
        %v530 = vld [vmem:[#allocation2 + $0x40] sm:$0xff]
        %v531 = vld [vmem:[#allocation2 + $0x48] sm:$0xff]
        %v532 = vld [vmem:[#allocation2 + $0x50] sm:$0xff]
        %v533 = vld [vmem:[#allocation2 + $0x58] sm:$0xff]
        %v534 = vld [vmem:[#allocation2 + $0x60] sm:$0xff]
        %v535 = vld [vmem:[#allocation2 + $0x68] sm:$0xff]
        %v536 = vld [vmem:[#allocation2 + $0x70] sm:$0xff]
        %v537 = vld [vmem:[#allocation2 + $0x78] sm:$0xff]
        %v538 = vld [vmem:[#allocation2 + $0x80] sm:$0xff]
        %v539 = vld [vmem:[#allocation2 + $0x88] sm:$0xff]
        %v540 = vld [vmem:[#allocation2 + $0x90] sm:$0xff]
        %v541 = vld [vmem:[#allocation2 + $0x98] sm:$0xff]
        %v542 = vld [vmem:[#allocation2 + $0xa0] sm:$0xff]
        %v543 = vld [vmem:[#allocation2 + $0xa8] sm:$0xff]
        %v544 = vld [vmem:[#allocation2 + $0xb0] sm:$0xff]
        %v545 = vld [vmem:[#allocation2 + $0xb8] sm:$0xff]
        %v546 = vld [vmem:[#allocation2 + $0xc0] sm:$0xff]
        %v547 = vld [vmem:[#allocation2 + $0xc8] sm:$0xff]
        %v548 = vld [vmem:[#allocation2 + $0xd0] sm:$0xff]
        %v549 = vld [vmem:[#allocation2 + $0xd8] sm:$0xff]
        %v550 = vld [vmem:[#allocation2 + $0xe0] sm:$0xff]
        %v551 = vld [vmem:[#allocation2 + $0xe8] sm:$0xff]
        %v552 = vld [vmem:[#allocation2 + $0xf0] sm:$0xff]
        %v553 = vld [vmem:[#allocation2 + $0xf8] sm:$0xff]
        %v554 = vld [vmem:[#allocation2 + $0x100] sm:$0xff]
        %v555 = vld [vmem:[#allocation2 + $0x108] sm:$0xff]
        %v556 = vld [vmem:[#allocation2 + $0x110] sm:$0xff]
        %v557 = vld [vmem:[#allocation2 + $0x118] sm:$0xff]
        %v558 = vld [vmem:[#allocation2 + $0x120] sm:$0xff]
        %v559 = vld [vmem:[#allocation2 + $0x128] sm:$0xff]
        %v560 = vld [vmem:[#allocation2 + $0x130] sm:$0xff]
        %v561 = vld [vmem:[#allocation2 + $0x138] sm:$0xff]
        %v562 = vld [vmem:[#allocation2 + $0x140] sm:$0xff]
        %v563 = vld [vmem:[#allocation2 + $0x148] sm:$0xff]
        %v564 = vld [vmem:[#allocation2 + $0x150] sm:$0xff]
        %v565 = vld [vmem:[#allocation2 + $0x158] sm:$0xff]
        %v566 = vld [vmem:[#allocation2 + $0x160] sm:$0xff]
        %v567 = vld [vmem:[#allocation2 + $0x168] sm:$0xff]
        %v568 = vld [vmem:[#allocation2 + $0x170] sm:$0xff]
        %v569 = vld [vmem:[#allocation2 + $0x178] sm:$0xff]
        %v570 = vld [vmem:[#allocation2 + $0x180] sm:$0xff]
        %v571 = vld [vmem:[#allocation2 + $0x188] sm:$0xff]
        %v572 = vld [vmem:[#allocation2 + $0x190] sm:$0xff]
        %v573 = vld [vmem:[#allocation2 + $0x198] sm:$0xff]
        %v574 = vld [vmem:[#allocation2 + $0x1a0] sm:$0xff]
        %v575 = vld [vmem:[#allocation2 + $0x1a8] sm:$0xff]
        %v608 = vunpack.c.l.b16 %v490
        %v609 = vunpack.c.h.b16 %v490
        %v610 = vunpack.c.l.b16 %v491
        %v611 = vunpack.c.l.b16 %v492
        %v612 = vunpack.c.h.b16 %v492
        %v613 = vunpack.c.l.b16 %v493
        %v614 = vunpack.c.l.b16 %v494
        %v615 = vunpack.c.h.b16 %v494
        %v616 = vunpack.c.l.b16 %v495
        %v617 = vunpack.c.l.b16 %v496
        %v618 = vunpack.c.h.b16 %v496
        %v619 = vunpack.c.l.b16 %v497
        %v620 = vunpack.c.l.b16 %v498
        %v621 = vunpack.c.h.b16 %v498
        %v622 = vunpack.c.l.b16 %v499
        %v623 = vunpack.c.l.b16 %v500
        %v624 = vunpack.c.h.b16 %v500
        %v625 = vunpack.c.l.b16 %v501
        %v626 = vunpack.c.l.b16 %v502
        %v627 = vunpack.c.h.b16 %v502
        %v628 = vunpack.c.l.b16 %v503
        %v629 = vunpack.c.l.b16 %v504
        %v630 = vunpack.c.h.b16 %v504
        %v631 = vunpack.c.l.b16 %v505
        %v632 = vunpack.c.l.b16 %v506
        %v633 = vunpack.c.h.b16 %v506
        %v634 = vunpack.c.l.b16 %v507
        %v635 = vunpack.c.l.b16 %v508
        %v636 = vunpack.c.h.b16 %v508
        %v637 = vunpack.c.l.b16 %v509
        %v638 = vunpack.c.l.b16 %v510
        %v639 = vunpack.c.h.b16 %v510
        %v640 = vunpack.c.l.b16 %v511
        %v641 = vunpack.c.l.b16 %v512
        %v642 = vunpack.c.h.b16 %v512
        %v643 = vunpack.c.l.b16 %v513
        %v644 = vunpack.c.l.b16 %v514
        %v645 = vunpack.c.h.b16 %v514
        %v646 = vunpack.c.l.b16 %v515
        %v647 = vunpack.c.l.b16 %v516
        %v648 = vunpack.c.h.b16 %v516
        %v649 = vunpack.c.l.b16 %v517
        %v650 = vunpack.c.l.b16 %v518
        %v651 = vunpack.c.h.b16 %v518
        %v652 = vunpack.c.l.b16 %v519
        %v653 = vunpack.c.l.b16 %v520
        %v654 = vunpack.c.h.b16 %v520
        %v655 = vunpack.c.l.b16 %v521
        %v656 = vpack.c.b16 %v611, %v608
        %v657 = vpack.c.b16 %v612, %v609
        %v658 = vpack.c.b16 %v613, %v610
        %v659 = vpack.c.b16 %v617, %v614
        %v660 = vpack.c.b16 %v618, %v615
        %v661 = vpack.c.b16 %v619, %v616
        %v662 = vpack.c.b16 %v623, %v620
        %v663 = vpack.c.b16 %v624, %v621
        %v664 = vpack.c.b16 %v625, %v622
        %v665 = vpack.c.b16 %v629, %v626
        %v666 = vpack.c.b16 %v630, %v627
        %v667 = vpack.c.b16 %v631, %v628
        %v668 = vpack.c.b16 %v635, %v632
        %v669 = vpack.c.b16 %v636, %v633
        %v670 = vpack.c.b16 %v637, %v634
        %v671 = vpack.c.b16 %v641, %v638
        %v672 = vpack.c.b16 %v642, %v639
        %v673 = vpack.c.b16 %v643, %v640
        %v674 = vpack.c.b16 %v647, %v644
        %v675 = vpack.c.b16 %v648, %v645
        %v676 = vpack.c.b16 %v649, %v646
        %v677 = vpack.c.b16 %v653, %v650
        %v678 = vpack.c.b16 %v654, %v651
        %v679 = vpack.c.b16 %v655, %v652
        %vm696 = vcmask 261120
        %v698 = vsel %vm696, %v658, 0
        %v701 = vsel %vm696, %v661, 0
        %v704 = vsel %vm696, %v664, 0
        %v707 = vsel %vm696, %v667, 0
        %v710 = vsel %vm696, %v670, 0
        %v713 = vsel %vm696, %v673, 0
        %v716 = vsel %vm696, %v676, 0
        %v719 = vsel %vm696, %v679, 0
        %721 = vmatprep.subr.bf16.mxu0 %v523
        %722 = vmatpush1.bf16.msra.mxu0 %v522
        %723 = vmatprep.subr.bf16.mxu0 %v526
        %724 = vmatpush1.bf16.msra.mxu0 %v525
        %725 = vmatprep.subr.bf16.mxu0 %v529
        %726 = vmatpush1.bf16.msra.mxu0 %v528
        %727 = vmatprep.subr.bf16.mxu0 %v532
        %728 = vmatpush1.bf16.msra.mxu0 %v531
        %729 = vmatprep.subr.bf16.mxu0 %v535
        %730 = vmatpush1.bf16.msra.mxu0 %v534
        %731 = vmatprep.subr.bf16.mxu0 %v538
        %732 = vmatpush1.bf16.msra.mxu0 %v537
        %733 = vmatprep.subr.bf16.mxu0 %v541
        %734 = vmatpush1.bf16.msra.mxu0 %v540
        %735 = vmatprep.subr.bf16.mxu0 %v544
        %736 = vmatpush1.bf16.msra.mxu0 %v543
        %737 = vmatprep.subr.bf16.mxu0 %v547
        %738 = vmatpush1.bf16.msra.mxu0 %v546
        %739 = vmatprep.subr.bf16.mxu0 %v550
        %740 = vmatpush1.bf16.msra.mxu0 %v549
        %741 = vmatprep.subr.bf16.mxu0 %v553
        %742 = vmatpush1.bf16.msra.mxu0 %v552
        %743 = vmatprep.subr.bf16.mxu0 %v556
        %744 = vmatpush1.bf16.msra.mxu0 %v555
        %745 = vmatprep.subr.bf16.mxu0 %v559
        %746 = vmatpush1.bf16.msra.mxu0 %v558
        %747 = vmatprep.subr.bf16.mxu0 %v562
        %748 = vmatpush1.bf16.msra.mxu0 %v561
        %749 = vmatprep.subr.bf16.mxu0 %v565
        %750 = vmatpush1.bf16.msra.mxu0 %v564
        %751 = vmatprep.subr.bf16.mxu0 %v568
        %752 = vmatpush1.bf16.msra.mxu0 %v567
        %753 = vmatprep.mubr.bf16.mxu0 %v657
        %754 = vmatmul.mubr.bf16.gmra.mrb[0].mxu0 %v656
        %v755 = vpop.f32.mrb[0].mxu0
        %v756 = vadd.f32 0.0, %v755
        %v757 = vpop.f32.mrb[0].mxu0
        %v758 = vadd.f32 0.0, %v757
        %v759 = vpop.f32.mrb[0].mxu0
        %v760 = vadd.f32 0.0, %v759
        %v761 = vpop.f32.mrb[0].mxu0
        %v762 = vadd.f32 0.0, %v761
        %763 = vmatprep.mubr.bf16.mxu0 %v660
        %764 = vmatmul.mubr.bf16.gmra.mrb[0].mxu0 %v659
        %v765 = vpop.f32.mrb[0].mxu0
        %v766 = vadd.f32 0.0, %v765
        %v767 = vpop.f32.mrb[0].mxu0
        %v768 = vadd.f32 0.0, %v767
        %v769 = vpop.f32.mrb[0].mxu0
        %v770 = vadd.f32 0.0, %v769
        %v771 = vpop.f32.mrb[0].mxu0
        %v772 = vadd.f32 0.0, %v771
        %773 = vmatprep.mubr.bf16.mxu0 %v663
        %774 = vmatmul.mubr.bf16.gmra.mrb[0].mxu0 %v662
        %v775 = vpop.f32.mrb[0].mxu0
        %v776 = vadd.f32 0.0, %v775
        %v777 = vpop.f32.mrb[0].mxu0
        %v778 = vadd.f32 0.0, %v777
        %v779 = vpop.f32.mrb[0].mxu0
        %v780 = vadd.f32 0.0, %v779
        %v781 = vpop.f32.mrb[0].mxu0
        %v782 = vadd.f32 0.0, %v781
        %783 = vmatprep.mubr.bf16.mxu0 %v666
        %784 = vmatmul.mubr.bf16.gmra.mrb[0].mxu0 %v665
        %v785 = vpop.f32.mrb[0].mxu0
        %v786 = vadd.f32 0.0, %v785
        %v787 = vpop.f32.mrb[0].mxu0
        %v788 = vadd.f32 0.0, %v787
        %v789 = vpop.f32.mrb[0].mxu0
        %v790 = vadd.f32 0.0, %v789
        %v791 = vpop.f32.mrb[0].mxu0
        %v792 = vadd.f32 0.0, %v791
        %793 = vmatprep.mubr.bf16.mxu0 %v669
        %794 = vmatmul.mubr.bf16.gmra.mrb[0].mxu0 %v668
        %v795 = vpop.f32.mrb[0].mxu0
        %v796 = vadd.f32 0.0, %v795
        %v797 = vpop.f32.mrb[0].mxu0
        %v798 = vadd.f32 0.0, %v797
        %v799 = vpop.f32.mrb[0].mxu0
        %v800 = vadd.f32 0.0, %v799
        %v801 = vpop.f32.mrb[0].mxu0
        %v802 = vadd.f32 0.0, %v801
        %803 = vmatprep.mubr.bf16.mxu0 %v672
        %804 = vmatmul.mubr.bf16.gmra.mrb[0].mxu0 %v671
        %v805 = vpop.f32.mrb[0].mxu0
        %v806 = vadd.f32 0.0, %v805
        %v807 = vpop.f32.mrb[0].mxu0
        %v808 = vadd.f32 0.0, %v807
        %v809 = vpop.f32.mrb[0].mxu0
        %v810 = vadd.f32 0.0, %v809
        %v811 = vpop.f32.mrb[0].mxu0
        %v812 = vadd.f32 0.0, %v811
        %813 = vmatprep.mubr.bf16.mxu0 %v675
        %814 = vmatmul.mubr.bf16.gmra.mrb[0].mxu0 %v674
        %v815 = vpop.f32.mrb[0].mxu0
        %v816 = vadd.f32 0.0, %v815
        %v817 = vpop.f32.mrb[0].mxu0
        %v818 = vadd.f32 0.0, %v817
        %v819 = vpop.f32.mrb[0].mxu0
        %v820 = vadd.f32 0.0, %v819
        %v821 = vpop.f32.mrb[0].mxu0
        %v822 = vadd.f32 0.0, %v821
        %823 = vmatprep.mubr.bf16.mxu0 %v678
        %824 = vmatmul.mubr.bf16.gmra.mrb[0].mxu0 %v677
        %v825 = vpop.f32.mrb[0].mxu0
        %v826 = vadd.f32 0.0, %v825
        %v827 = vpop.f32.mrb[0].mxu0
        %v828 = vadd.f32 0.0, %v827
        %v829 = vpop.f32.mrb[0].mxu0
        %v830 = vadd.f32 0.0, %v829
        %v831 = vpop.f32.mrb[0].mxu0
        %v832 = vadd.f32 0.0, %v831
        %833 = vdwg.mxu0
        %834 = vmatprep.subr.bf16.mxu0 %v571
        %835 = vmatpush1.bf16.msra.mxu0 %v570
        %836 = vmatprep.subr.bf16.mxu0 %v574
        %837 = vmatpush1.bf16.msra.mxu0 %v573
        %838 = vmatprep.subr.bf16.mxu0 0
        %839 = vmatpush1.bf16.msra.mxu0 0
        %840 = vmatprep.subr.bf16.mxu0 0
        %841 = vmatpush1.bf16.msra.mxu0 0
        %842 = vmatprep.subr.bf16.mxu0 0
        %843 = vmatpush1.bf16.msra.mxu0 0
        %844 = vmatprep.subr.bf16.mxu0 0
        %845 = vmatpush1.bf16.msra.mxu0 0
        %846 = vmatprep.subr.bf16.mxu0 0
        %847 = vmatpush1.bf16.msra.mxu0 0
        %848 = vmatprep.subr.bf16.mxu0 0
        %849 = vmatpush1.bf16.msra.mxu0 0
        %850 = vmatprep.subr.bf16.mxu0 0
        %851 = vmatpush1.bf16.msra.mxu0 0
        %852 = vmatprep.subr.bf16.mxu0 0
        %853 = vmatpush1.bf16.msra.mxu0 0
        %854 = vmatprep.subr.bf16.mxu0 0
        %855 = vmatpush1.bf16.msra.mxu0 0
        %856 = vmatprep.subr.bf16.mxu0 0
        %857 = vmatpush1.bf16.msra.mxu0 0
        %858 = vmatprep.subr.bf16.mxu0 0
        %859 = vmatpush1.bf16.msra.mxu0 0
        %860 = vmatprep.subr.bf16.mxu0 0
        %861 = vmatpush1.bf16.msra.mxu0 0
        %862 = vmatprep.subr.bf16.mxu0 0
        %863 = vmatpush1.bf16.msra.mxu0 0
        %864 = vmatprep.subr.bf16.mxu0 0
        %865 = vmatpush1.bf16.msra.mxu0 0
        %866 = vmatprep.mubr.bf16.mxu0 0
        %867 = vmatmul.mubr.bf16.gmra.mrb[0].mxu0 %v698
        %v868 = vpop.f32.mrb[0].mxu0
        %v869 = vadd.f32 %v756, %v868
        %v870 = vpop.f32.mrb[0].mxu0
        %v871 = vadd.f32 %v758, %v870
        %v872 = vpop.f32.mrb[0].mxu0
        %v873 = vadd.f32 %v760, %v872
        %v874 = vpop.f32.mrb[0].mxu0
        %v875 = vadd.f32 %v762, %v874
        %876 = vmatprep.mubr.bf16.mxu0 0
        %877 = vmatmul.mubr.bf16.gmra.mrb[0].mxu0 %v701
        %v878 = vpop.f32.mrb[0].mxu0
        %v879 = vadd.f32 %v766, %v878
        %v880 = vpop.f32.mrb[0].mxu0
        %v881 = vadd.f32 %v768, %v880
        %v882 = vpop.f32.mrb[0].mxu0
        %v883 = vadd.f32 %v770, %v882
        %v884 = vpop.f32.mrb[0].mxu0
        %v885 = vadd.f32 %v772, %v884
        %886 = vmatprep.mubr.bf16.mxu0 0
        %887 = vmatmul.mubr.bf16.gmra.mrb[0].mxu0 %v704
        %v888 = vpop.f32.mrb[0].mxu0
        %v889 = vadd.f32 %v776, %v888
        %v890 = vpop.f32.mrb[0].mxu0
        %v891 = vadd.f32 %v778, %v890
        %v892 = vpop.f32.mrb[0].mxu0
        %v893 = vadd.f32 %v780, %v892
        %v894 = vpop.f32.mrb[0].mxu0
        %v895 = vadd.f32 %v782, %v894
        %896 = vmatprep.mubr.bf16.mxu0 0
        %897 = vmatmul.mubr.bf16.gmra.mrb[0].mxu0 %v707
        %v898 = vpop.f32.mrb[0].mxu0
        %v899 = vadd.f32 %v786, %v898
        %v900 = vpop.f32.mrb[0].mxu0
        %v901 = vadd.f32 %v788, %v900
        %v902 = vpop.f32.mrb[0].mxu0
        %v903 = vadd.f32 %v790, %v902
        %v904 = vpop.f32.mrb[0].mxu0
        %v905 = vadd.f32 %v792, %v904
        %906 = vmatprep.mubr.bf16.mxu0 0
        %907 = vmatmul.mubr.bf16.gmra.mrb[0].mxu0 %v710
        %v908 = vpop.f32.mrb[0].mxu0
        %v909 = vadd.f32 %v796, %v908
        %v910 = vpop.f32.mrb[0].mxu0
        %v911 = vadd.f32 %v798, %v910
        %v912 = vpop.f32.mrb[0].mxu0
        %v913 = vadd.f32 %v800, %v912
        %v914 = vpop.f32.mrb[0].mxu0
        %v915 = vadd.f32 %v802, %v914
        %916 = vmatprep.mubr.bf16.mxu0 0
        %917 = vmatmul.mubr.bf16.gmra.mrb[0].mxu0 %v713
        %v918 = vpop.f32.mrb[0].mxu0
        %v919 = vadd.f32 %v806, %v918
        %v920 = vpop.f32.mrb[0].mxu0
        %v921 = vadd.f32 %v808, %v920
        %v922 = vpop.f32.mrb[0].mxu0
        %v923 = vadd.f32 %v810, %v922
        %v924 = vpop.f32.mrb[0].mxu0
        %v925 = vadd.f32 %v812, %v924
        %926 = vmatprep.mubr.bf16.mxu0 0
        %927 = vmatmul.mubr.bf16.gmra.mrb[0].mxu0 %v716
        %v928 = vpop.f32.mrb[0].mxu0
        %v929 = vadd.f32 %v816, %v928
        %v930 = vpop.f32.mrb[0].mxu0
        %v931 = vadd.f32 %v818, %v930
        %v932 = vpop.f32.mrb[0].mxu0
        %v933 = vadd.f32 %v820, %v932
        %v934 = vpop.f32.mrb[0].mxu0
        %v935 = vadd.f32 %v822, %v934
        %936 = vmatprep.mubr.bf16.mxu0 0
        %937 = vmatmul.mubr.bf16.gmra.mrb[0].mxu0 %v719
        %v938 = vpop.f32.mrb[0].mxu0
        %v939 = vadd.f32 %v826, %v938
        %v940 = vpop.f32.mrb[0].mxu0
        %v941 = vadd.f32 %v828, %v940
        %v942 = vpop.f32.mrb[0].mxu0
        %v943 = vadd.f32 %v830, %v942
        %v944 = vpop.f32.mrb[0].mxu0
        %v945 = vadd.f32 %v832, %v944
        %946 = vdwg.mxu0
        %947 = vmatprep.subr.bf16.mxu0 0
        %948 = vmatpush1.bf16.msra.mxu0 %v524
        %949 = vmatprep.subr.bf16.mxu0 0
        %950 = vmatpush1.bf16.msra.mxu0 %v527
        %951 = vmatprep.subr.bf16.mxu0 0
        %952 = vmatpush1.bf16.msra.mxu0 %v530
        %953 = vmatprep.subr.bf16.mxu0 0
        %954 = vmatpush1.bf16.msra.mxu0 %v533
        %955 = vmatprep.subr.bf16.mxu0 0
        %956 = vmatpush1.bf16.msra.mxu0 %v536
        %957 = vmatprep.subr.bf16.mxu0 0
        %958 = vmatpush1.bf16.msra.mxu0 %v539
        %959 = vmatprep.subr.bf16.mxu0 0
        %960 = vmatpush1.bf16.msra.mxu0 %v542
        %961 = vmatprep.subr.bf16.mxu0 0
        %962 = vmatpush1.bf16.msra.mxu0 %v545
        %963 = vmatprep.subr.bf16.mxu0 0
        %964 = vmatpush1.bf16.msra.mxu0 %v548
        %965 = vmatprep.subr.bf16.mxu0 0
        %966 = vmatpush1.bf16.msra.mxu0 %v551
        %967 = vmatprep.subr.bf16.mxu0 0
        %968 = vmatpush1.bf16.msra.mxu0 %v554
        %969 = vmatprep.subr.bf16.mxu0 0
        %970 = vmatpush1.bf16.msra.mxu0 %v557
        %971 = vmatprep.subr.bf16.mxu0 0
        %972 = vmatpush1.bf16.msra.mxu0 %v560
        %973 = vmatprep.subr.bf16.mxu0 0
        %974 = vmatpush1.bf16.msra.mxu0 %v563
        %975 = vmatprep.subr.bf16.mxu0 0
        %976 = vmatpush1.bf16.msra.mxu0 %v566
        %977 = vmatprep.subr.bf16.mxu0 0
        %978 = vmatpush1.bf16.msra.mxu0 %v569
        %979 = vmatprep.mubr.bf16.mxu0 %v657
        %980 = vmatmul.mubr.bf16.gmra.mrb[0].mxu0 %v656
        %v981 = vpop.f32.mrb[0].mxu0
        %v982 = vadd.f32 0.0, %v981
        %v983 = vpop.f32.mrb[0].mxu0
        %v984 = vpop.f32.mrb[0].mxu0
        %v985 = vadd.f32 0.0, %v984
        %v986 = vpop.f32.mrb[0].mxu0
        %987 = vmatprep.mubr.bf16.mxu0 %v660
        %988 = vmatmul.mubr.bf16.gmra.mrb[0].mxu0 %v659
        %v989 = vpop.f32.mrb[0].mxu0
        %v990 = vadd.f32 0.0, %v989
        %v991 = vpop.f32.mrb[0].mxu0
        %v992 = vpop.f32.mrb[0].mxu0
        %v993 = vadd.f32 0.0, %v992
        %v994 = vpop.f32.mrb[0].mxu0
        %995 = vmatprep.mubr.bf16.mxu0 %v663
        %996 = vmatmul.mubr.bf16.gmra.mrb[0].mxu0 %v662
        %v997 = vpop.f32.mrb[0].mxu0
        %v998 = vadd.f32 0.0, %v997
        %v999 = vpop.f32.mrb[0].mxu0
        %v1000 = vpop.f32.mrb[0].mxu0
        %v1001 = vadd.f32 0.0, %v1000
        %v1002 = vpop.f32.mrb[0].mxu0
        %1003 = vmatprep.mubr.bf16.mxu0 %v666
        %1004 = vmatmul.mubr.bf16.gmra.mrb[0].mxu0 %v665
        %v1005 = vpop.f32.mrb[0].mxu0
        %v1006 = vadd.f32 0.0, %v1005
        %v1007 = vpop.f32.mrb[0].mxu0
        %v1008 = vpop.f32.mrb[0].mxu0
        %v1009 = vadd.f32 0.0, %v1008
        %v1010 = vpop.f32.mrb[0].mxu0
        %1011 = vmatprep.mubr.bf16.mxu0 %v669
        %1012 = vmatmul.mubr.bf16.gmra.mrb[0].mxu0 %v668
        %v1013 = vpop.f32.mrb[0].mxu0
        %v1014 = vadd.f32 0.0, %v1013
        %v1015 = vpop.f32.mrb[0].mxu0
        %v1016 = vpop.f32.mrb[0].mxu0
        %v1017 = vadd.f32 0.0, %v1016
        %v1018 = vpop.f32.mrb[0].mxu0
        %1019 = vmatprep.mubr.bf16.mxu0 %v672
        %1020 = vmatmul.mubr.bf16.gmra.mrb[0].mxu0 %v671
        %v1021 = vpop.f32.mrb[0].mxu0
        %v1022 = vadd.f32 0.0, %v1021
        %v1023 = vpop.f32.mrb[0].mxu0
        %v1024 = vpop.f32.mrb[0].mxu0
        %v1025 = vadd.f32 0.0, %v1024
        %v1026 = vpop.f32.mrb[0].mxu0
        %1027 = vmatprep.mubr.bf16.mxu0 %v675
        %1028 = vmatmul.mubr.bf16.gmra.mrb[0].mxu0 %v674
        %v1029 = vpop.f32.mrb[0].mxu0
        %v1030 = vadd.f32 0.0, %v1029
        %v1031 = vpop.f32.mrb[0].mxu0
        %v1032 = vpop.f32.mrb[0].mxu0
        %v1033 = vadd.f32 0.0, %v1032
        %v1034 = vpop.f32.mrb[0].mxu0
        %1035 = vmatprep.mubr.bf16.mxu0 %v678
        %1036 = vmatmul.mubr.bf16.gmra.mrb[0].mxu0 %v677
        %v1037 = vpop.f32.mrb[0].mxu0
        %v1038 = vadd.f32 0.0, %v1037
        %v1039 = vpop.f32.mrb[0].mxu0
        %v1040 = vpop.f32.mrb[0].mxu0
        %v1041 = vadd.f32 0.0, %v1040
        %v1042 = vpop.f32.mrb[0].mxu0
        %1043 = vdwg.mxu0
        %1044 = vmatprep.subr.bf16.mxu0 0
        %1045 = vmatpush1.bf16.msra.mxu0 %v572
        %1046 = vmatprep.subr.bf16.mxu0 0
        %1047 = vmatpush1.bf16.msra.mxu0 %v575
        %1048 = vmatprep.subr.bf16.mxu0 0
        %1049 = vmatpush1.bf16.msra.mxu0 0
        %1050 = vmatprep.subr.bf16.mxu0 0
        %1051 = vmatpush1.bf16.msra.mxu0 0
        %1052 = vmatprep.subr.bf16.mxu0 0
        %1053 = vmatpush1.bf16.msra.mxu0 0
        %1054 = vmatprep.subr.bf16.mxu0 0
        %1055 = vmatpush1.bf16.msra.mxu0 0
        %1056 = vmatprep.subr.bf16.mxu0 0
        %1057 = vmatpush1.bf16.msra.mxu0 0
        %1058 = vmatprep.subr.bf16.mxu0 0
        %1059 = vmatpush1.bf16.msra.mxu0 0
        %1060 = vmatprep.subr.bf16.mxu0 0
        %1061 = vmatpush1.bf16.msra.mxu0 0
        %1062 = vmatprep.subr.bf16.mxu0 0
        %1063 = vmatpush1.bf16.msra.mxu0 0
        %1064 = vmatprep.subr.bf16.mxu0 0
        %1065 = vmatpush1.bf16.msra.mxu0 0
        %1066 = vmatprep.subr.bf16.mxu0 0
        %1067 = vmatpush1.bf16.msra.mxu0 0
        %1068 = vmatprep.subr.bf16.mxu0 0
        %1069 = vmatpush1.bf16.msra.mxu0 0
        %1070 = vmatprep.subr.bf16.mxu0 0
        %1071 = vmatpush1.bf16.msra.mxu0 0
        %1072 = vmatprep.subr.bf16.mxu0 0
        %1073 = vmatpush1.bf16.msra.mxu0 0
        %1074 = vmatprep.subr.bf16.mxu0 0
        %1075 = vmatpush1.bf16.msra.mxu0 0
        %1076 = vmatprep.mubr.bf16.mxu0 0
        %1077 = vmatmul.mubr.bf16.gmra.mrb[0].mxu0 %v698
        %v1078 = vpop.f32.mrb[0].mxu0
        %v1079 = vadd.f32 %v982, %v1078
        %v1080 = vpop.f32.mrb[0].mxu0
        %v1081 = vpop.f32.mrb[0].mxu0
        %v1082 = vadd.f32 %v985, %v1081
        %v1083 = vpop.f32.mrb[0].mxu0
        %1084 = vmatprep.mubr.bf16.mxu0 0
        %1085 = vmatmul.mubr.bf16.gmra.mrb[0].mxu0 %v701
        %v1086 = vpop.f32.mrb[0].mxu0
        %v1087 = vadd.f32 %v990, %v1086
        %v1088 = vpop.f32.mrb[0].mxu0
        %v1089 = vpop.f32.mrb[0].mxu0
        %v1090 = vadd.f32 %v993, %v1089
        %v1091 = vpop.f32.mrb[0].mxu0
        %1092 = vmatprep.mubr.bf16.mxu0 0
        %1093 = vmatmul.mubr.bf16.gmra.mrb[0].mxu0 %v704
        %v1094 = vpop.f32.mrb[0].mxu0
        %v1095 = vadd.f32 %v998, %v1094
        %v1096 = vpop.f32.mrb[0].mxu0
        %v1097 = vpop.f32.mrb[0].mxu0
        %v1098 = vadd.f32 %v1001, %v1097
        %v1099 = vpop.f32.mrb[0].mxu0
        %1100 = vmatprep.mubr.bf16.mxu0 0
        %1101 = vmatmul.mubr.bf16.gmra.mrb[0].mxu0 %v707
        %v1102 = vpop.f32.mrb[0].mxu0
        %v1103 = vadd.f32 %v1006, %v1102
        %v1104 = vpop.f32.mrb[0].mxu0
        %v1105 = vpop.f32.mrb[0].mxu0
        %v1106 = vadd.f32 %v1009, %v1105
        %v1107 = vpop.f32.mrb[0].mxu0
        %1108 = vmatprep.mubr.bf16.mxu0 0
        %1109 = vmatmul.mubr.bf16.gmra.mrb[0].mxu0 %v710
        %v1110 = vpop.f32.mrb[0].mxu0
        %v1111 = vadd.f32 %v1014, %v1110
        %v1112 = vpop.f32.mrb[0].mxu0
        %v1113 = vpop.f32.mrb[0].mxu0
        %v1114 = vadd.f32 %v1017, %v1113
        %v1115 = vpop.f32.mrb[0].mxu0
        %1116 = vmatprep.mubr.bf16.mxu0 0
        %1117 = vmatmul.mubr.bf16.gmra.mrb[0].mxu0 %v713
        %v1118 = vpop.f32.mrb[0].mxu0
        %v1119 = vadd.f32 %v1022, %v1118
        %v1120 = vpop.f32.mrb[0].mxu0
        %v1121 = vpop.f32.mrb[0].mxu0
        %v1122 = vadd.f32 %v1025, %v1121
        %v1123 = vpop.f32.mrb[0].mxu0
        %1124 = vmatprep.mubr.bf16.mxu0 0
        %1125 = vmatmul.mubr.bf16.gmra.mrb[0].mxu0 %v716
        %v1126 = vpop.f32.mrb[0].mxu0
        %v1127 = vadd.f32 %v1030, %v1126
        %v1128 = vpop.f32.mrb[0].mxu0
        %v1129 = vpop.f32.mrb[0].mxu0
        %v1130 = vadd.f32 %v1033, %v1129
        %v1131 = vpop.f32.mrb[0].mxu0
        %1132 = vmatprep.mubr.bf16.mxu0 0
        %1133 = vmatmul.mubr.bf16.gmra.mrb[0].mxu0 %v719
        %v1134 = vpop.f32.mrb[0].mxu0
        %v1135 = vadd.f32 %v1038, %v1134
        %v1136 = vpop.f32.mrb[0].mxu0
        %v1137 = vpop.f32.mrb[0].mxu0
        %v1138 = vadd.f32 %v1041, %v1137
        %v1139 = vpop.f32.mrb[0].mxu0
        %1140 = vdwg.mxu0
        %v1157 = vunpack.c.l.b16 %v459
        %v1158 = vunpack.c.l.b16 %v460
        %v1159 = vunpack.c.l.b16 %v461
        %v1160 = vunpack.c.l.b16 %v462
        %v1161 = vunpack.c.l.b16 %v463
        %v1162 = vunpack.c.l.b16 %v464
        %v1163 = vunpack.c.l.b16 %v465
        %v1164 = vunpack.c.l.b16 %v466
        %v1165 = vunpack.c.l.b16 %v467
        %v1166 = vunpack.c.l.b16 %v468
        %v1167 = vunpack.c.l.b16 %v469
        %v1168 = vunpack.c.l.b16 %v470
        %v1169 = vunpack.c.l.b16 %v471
        %v1170 = vunpack.c.l.b16 %v472
        %v1171 = vunpack.c.l.b16 %v473
        %v1172 = vunpack.c.l.b16 %v474
        %v1173 = vpack.c.b16 %v1158, %v1157
        %v1174 = vpack.c.b16 %v1160, %v1159
        %v1175 = vpack.c.b16 %v1162, %v1161
        %v1176 = vpack.c.b16 %v1164, %v1163
        %v1177 = vpack.c.b16 %v1166, %v1165
        %v1178 = vpack.c.b16 %v1168, %v1167
        %v1179 = vpack.c.b16 %v1170, %v1169
        %v1180 = vpack.c.b16 %v1172, %v1171
        %v1193 = vunpack.c.l.b16 %v478
        %v1194 = vunpack.c.h.b16 %v478
        %v1195 = vunpack.c.l.b16 %v479
        %v1196 = vunpack.c.l.b16 %v480
        %v1197 = vunpack.c.h.b16 %v480
        %v1198 = vunpack.c.l.b16 %v481
        %v1199 = vunpack.c.l.b16 %v482
        %v1200 = vunpack.c.h.b16 %v482
        %v1201 = vunpack.c.l.b16 %v483
        %v1202 = vunpack.c.l.b16 %v484
        %v1203 = vunpack.c.h.b16 %v484
        %v1204 = vunpack.c.l.b16 %v485
        %v1205 = vunpack.c.l.b16 %v486
        %v1206 = vunpack.c.h.b16 %v486
        %v1207 = vunpack.c.l.b16 %v487
        %v1208 = vunpack.c.l.b16 %v488
        %v1209 = vunpack.c.h.b16 %v488
        %v1210 = vunpack.c.l.b16 %v489
        %v1211 = vpack.c.b16 %v1196, %v1193
        %v1212 = vpack.c.b16 %v1197, %v1194
        %v1213 = vpack.c.b16 %v1198, %v1195
        %v1214 = vpack.c.b16 %v1202, %v1199
        %v1215 = vpack.c.b16 %v1203, %v1200
        %v1216 = vpack.c.b16 %v1204, %v1201
        %v1217 = vpack.c.b16 %v1208, %v1205
        %v1218 = vpack.c.b16 %v1209, %v1206
        %v1219 = vpack.c.b16 %v1210, %v1207
        %vm1229 = vcmask 392192
        %v1231 = vsel %vm1229, %v1173, 0
        %v1234 = vsel %vm1229, %v1174, 0
        %v1237 = vsel %vm1229, %v1175, 0
        %v1240 = vsel %vm1229, %v1176, 0
        %v1243 = vsel %vm1229, %v1177, 0
        %v1246 = vsel %vm1229, %v1178, 0
        %v1249 = vsel %vm1229, %v1179, 0
        %v1252 = vsel %vm1229, %v1180, 0
        %1254 = vmatprep.subr.bf16.mxu0 %v1212
        %1255 = vmatpush1.bf16.msra.mxu0 %v1211
        %1256 = vmatprep.subr.bf16.mxu0 %v1215
        %1257 = vmatpush1.bf16.msra.mxu0 %v1214
        %1258 = vmatprep.subr.bf16.mxu0 %v1218
        %1259 = vmatpush1.bf16.msra.mxu0 %v1217
        %1260 = vmatprep.subr.bf16.mxu0 0
        %1261 = vmatpush1.bf16.msra.mxu0 0
        %1262 = vmatprep.subr.bf16.mxu0 0
        %1263 = vmatpush1.bf16.msra.mxu0 0
        %1264 = vmatprep.subr.bf16.mxu0 0
        %1265 = vmatpush1.bf16.msra.mxu0 0
        %1266 = vmatprep.subr.bf16.mxu0 0
        %1267 = vmatpush1.bf16.msra.mxu0 0
        %1268 = vmatprep.subr.bf16.mxu0 0
        %1269 = vmatpush1.bf16.msra.mxu0 0
        %1270 = vmatprep.subr.bf16.mxu0 0
        %1271 = vmatpush1.bf16.msra.mxu0 0
        %1272 = vmatprep.subr.bf16.mxu0 0
        %1273 = vmatpush1.bf16.msra.mxu0 0
        %1274 = vmatprep.subr.bf16.mxu0 0
        %1275 = vmatpush1.bf16.msra.mxu0 0
        %1276 = vmatprep.subr.bf16.mxu0 0
        %1277 = vmatpush1.bf16.msra.mxu0 0
        %1278 = vmatprep.subr.bf16.mxu0 0
        %1279 = vmatpush1.bf16.msra.mxu0 0
        %1280 = vmatprep.subr.bf16.mxu0 0
        %1281 = vmatpush1.bf16.msra.mxu0 0
        %1282 = vmatprep.subr.bf16.mxu0 0
        %1283 = vmatpush1.bf16.msra.mxu0 0
        %1284 = vmatprep.subr.bf16.mxu0 0
        %1285 = vmatpush1.bf16.msra.mxu0 0
        %1286 = vmatprep.mubr.bf16.mxu0 0
        %1287 = vmatmul.mubr.bf16.gmra.mrb[0].mxu0 %v1231
        %v1288 = vpop.f32.mrb[0].mxu0
        %v1289 = vadd.f32 %v869, %v1288
        %v1290 = vpop.f32.mrb[0].mxu0
        %v1291 = vadd.f32 %v871, %v1290
        %v1292 = vpop.f32.mrb[0].mxu0
        %v1293 = vadd.f32 %v873, %v1292
        %v1294 = vpop.f32.mrb[0].mxu0
        %v1295 = vadd.f32 %v875, %v1294
        %1296 = vmatprep.mubr.bf16.mxu0 0
        %1297 = vmatmul.mubr.bf16.gmra.mrb[0].mxu0 %v1234
        %v1298 = vpop.f32.mrb[0].mxu0
        %v1299 = vadd.f32 %v879, %v1298
        %v1300 = vpop.f32.mrb[0].mxu0
        %v1301 = vadd.f32 %v881, %v1300
        %v1302 = vpop.f32.mrb[0].mxu0
        %v1303 = vadd.f32 %v883, %v1302
        %v1304 = vpop.f32.mrb[0].mxu0
        %v1305 = vadd.f32 %v885, %v1304
        %1306 = vmatprep.mubr.bf16.mxu0 0
        %1307 = vmatmul.mubr.bf16.gmra.mrb[0].mxu0 %v1237
        %v1308 = vpop.f32.mrb[0].mxu0
        %v1309 = vadd.f32 %v889, %v1308
        %v1310 = vpop.f32.mrb[0].mxu0
        %v1311 = vadd.f32 %v891, %v1310
        %v1312 = vpop.f32.mrb[0].mxu0
        %v1313 = vadd.f32 %v893, %v1312
        %v1314 = vpop.f32.mrb[0].mxu0
        %v1315 = vadd.f32 %v895, %v1314
        %1316 = vmatprep.mubr.bf16.mxu0 0
        %1317 = vmatmul.mubr.bf16.gmra.mrb[0].mxu0 %v1240
        %v1318 = vpop.f32.mrb[0].mxu0
        %v1319 = vadd.f32 %v899, %v1318
        %v1320 = vpop.f32.mrb[0].mxu0
        %v1321 = vadd.f32 %v901, %v1320
        %v1322 = vpop.f32.mrb[0].mxu0
        %v1323 = vadd.f32 %v903, %v1322
        %v1324 = vpop.f32.mrb[0].mxu0
        %v1325 = vadd.f32 %v905, %v1324
        %1326 = vmatprep.mubr.bf16.mxu0 0
        %1327 = vmatmul.mubr.bf16.gmra.mrb[0].mxu0 %v1243
        %v1328 = vpop.f32.mrb[0].mxu0
        %v1329 = vadd.f32 %v909, %v1328
        %v1330 = vpop.f32.mrb[0].mxu0
        %v1331 = vadd.f32 %v911, %v1330
        %v1332 = vpop.f32.mrb[0].mxu0
        %v1333 = vadd.f32 %v913, %v1332
        %v1334 = vpop.f32.mrb[0].mxu0
        %v1335 = vadd.f32 %v915, %v1334
        %1336 = vmatprep.mubr.bf16.mxu0 0
        %1337 = vmatmul.mubr.bf16.gmra.mrb[0].mxu0 %v1246
        %v1338 = vpop.f32.mrb[0].mxu0
        %v1339 = vadd.f32 %v919, %v1338
        %v1340 = vpop.f32.mrb[0].mxu0
        %v1341 = vadd.f32 %v921, %v1340
        %v1342 = vpop.f32.mrb[0].mxu0
        %v1343 = vadd.f32 %v923, %v1342
        %v1344 = vpop.f32.mrb[0].mxu0
        %v1345 = vadd.f32 %v925, %v1344
        %1346 = vmatprep.mubr.bf16.mxu0 0
        %1347 = vmatmul.mubr.bf16.gmra.mrb[0].mxu0 %v1249
        %v1348 = vpop.f32.mrb[0].mxu0
        %v1349 = vadd.f32 %v929, %v1348
        %v1350 = vpop.f32.mrb[0].mxu0
        %v1351 = vadd.f32 %v931, %v1350
        %v1352 = vpop.f32.mrb[0].mxu0
        %v1353 = vadd.f32 %v933, %v1352
        %v1354 = vpop.f32.mrb[0].mxu0
        %v1355 = vadd.f32 %v935, %v1354
        %1356 = vmatprep.mubr.bf16.mxu0 0
        %1357 = vmatmul.mubr.bf16.gmra.mrb[0].mxu0 %v1252
        %v1358 = vpop.f32.mrb[0].mxu0
        %v1359 = vadd.f32 %v939, %v1358
        %v1360 = vpop.f32.mrb[0].mxu0
        %v1361 = vadd.f32 %v941, %v1360
        %v1362 = vpop.f32.mrb[0].mxu0
        %v1363 = vadd.f32 %v943, %v1362
        %v1364 = vpop.f32.mrb[0].mxu0
        %v1365 = vadd.f32 %v945, %v1364
        %1366 = vdwg.mxu0
        %1367 = vmatprep.subr.bf16.mxu0 0
        %1368 = vmatpush1.bf16.msra.mxu0 %v1213
        %1369 = vmatprep.subr.bf16.mxu0 0
        %1370 = vmatpush1.bf16.msra.mxu0 %v1216
        %1371 = vmatprep.subr.bf16.mxu0 0
        %1372 = vmatpush1.bf16.msra.mxu0 %v1219
        %1373 = vmatprep.subr.bf16.mxu0 0
        %1374 = vmatpush1.bf16.msra.mxu0 0
        %1375 = vmatprep.subr.bf16.mxu0 0
        %1376 = vmatpush1.bf16.msra.mxu0 0
        %1377 = vmatprep.subr.bf16.mxu0 0
        %1378 = vmatpush1.bf16.msra.mxu0 0
        %1379 = vmatprep.subr.bf16.mxu0 0
        %1380 = vmatpush1.bf16.msra.mxu0 0
        %1381 = vmatprep.subr.bf16.mxu0 0
        %1382 = vmatpush1.bf16.msra.mxu0 0
        %1383 = vmatprep.subr.bf16.mxu0 0
        %1384 = vmatpush1.bf16.msra.mxu0 0
        %1385 = vmatprep.subr.bf16.mxu0 0
        %1386 = vmatpush1.bf16.msra.mxu0 0
        %1387 = vmatprep.subr.bf16.mxu0 0
        %1388 = vmatpush1.bf16.msra.mxu0 0
        %1389 = vmatprep.subr.bf16.mxu0 0
        %1390 = vmatpush1.bf16.msra.mxu0 0
        %1391 = vmatprep.subr.bf16.mxu0 0
        %1392 = vmatpush1.bf16.msra.mxu0 0
        %1393 = vmatprep.subr.bf16.mxu0 0
        %1394 = vmatpush1.bf16.msra.mxu0 0
        %1395 = vmatprep.subr.bf16.mxu0 0
        %1396 = vmatpush1.bf16.msra.mxu0 0
        %1397 = vmatprep.subr.bf16.mxu0 0
        %1398 = vmatpush1.bf16.msra.mxu0 0
        %1399 = vmatprep.mubr.bf16.mxu0 0
        %1400 = vmatmul.mubr.bf16.gmra.mrb[0].mxu0 %v1231
        %v1401 = vpop.f32.mrb[0].mxu0
        %v1402 = vadd.f32 %v1079, %v1401
        %v1403 = vpop.f32.mrb[0].mxu0
        %v1404 = vpop.f32.mrb[0].mxu0
        %v1405 = vadd.f32 %v1082, %v1404
        %v1406 = vpop.f32.mrb[0].mxu0
        %1407 = vmatprep.mubr.bf16.mxu0 0
        %1408 = vmatmul.mubr.bf16.gmra.mrb[0].mxu0 %v1234
        %v1409 = vpop.f32.mrb[0].mxu0
        %v1410 = vadd.f32 %v1087, %v1409
        %v1411 = vpop.f32.mrb[0].mxu0
        %v1412 = vpop.f32.mrb[0].mxu0
        %v1413 = vadd.f32 %v1090, %v1412
        %v1414 = vpop.f32.mrb[0].mxu0
        %1415 = vmatprep.mubr.bf16.mxu0 0
        %1416 = vmatmul.mubr.bf16.gmra.mrb[0].mxu0 %v1237
        %v1417 = vpop.f32.mrb[0].mxu0
        %v1418 = vadd.f32 %v1095, %v1417
        %v1419 = vpop.f32.mrb[0].mxu0
        %v1420 = vpop.f32.mrb[0].mxu0
        %v1421 = vadd.f32 %v1098, %v1420
        %v1422 = vpop.f32.mrb[0].mxu0
        %1423 = vmatprep.mubr.bf16.mxu0 0
        %1424 = vmatmul.mubr.bf16.gmra.mrb[0].mxu0 %v1240
        %v1425 = vpop.f32.mrb[0].mxu0
        %v1426 = vadd.f32 %v1103, %v1425
        %v1427 = vpop.f32.mrb[0].mxu0
        %v1428 = vpop.f32.mrb[0].mxu0
        %v1429 = vadd.f32 %v1106, %v1428
        %v1430 = vpop.f32.mrb[0].mxu0
        %1431 = vmatprep.mubr.bf16.mxu0 0
        %1432 = vmatmul.mubr.bf16.gmra.mrb[0].mxu0 %v1243
        %v1433 = vpop.f32.mrb[0].mxu0
        %v1434 = vadd.f32 %v1111, %v1433
        %v1435 = vpop.f32.mrb[0].mxu0
        %v1436 = vpop.f32.mrb[0].mxu0
        %v1437 = vadd.f32 %v1114, %v1436
        %v1438 = vpop.f32.mrb[0].mxu0
        %1439 = vmatprep.mubr.bf16.mxu0 0
        %1440 = vmatmul.mubr.bf16.gmra.mrb[0].mxu0 %v1246
        %v1441 = vpop.f32.mrb[0].mxu0
        %v1442 = vadd.f32 %v1119, %v1441
        %v1443 = vpop.f32.mrb[0].mxu0
        %v1444 = vpop.f32.mrb[0].mxu0
        %v1445 = vadd.f32 %v1122, %v1444
        %v1446 = vpop.f32.mrb[0].mxu0
        %1447 = vmatprep.mubr.bf16.mxu0 0
        %1448 = vmatmul.mubr.bf16.gmra.mrb[0].mxu0 %v1249
        %v1449 = vpop.f32.mrb[0].mxu0
        %v1450 = vadd.f32 %v1127, %v1449
        %v1451 = vpop.f32.mrb[0].mxu0
        %v1452 = vpop.f32.mrb[0].mxu0
        %v1453 = vadd.f32 %v1130, %v1452
        %v1454 = vpop.f32.mrb[0].mxu0
        %1455 = vmatprep.mubr.bf16.mxu0 0
        %1456 = vmatmul.mubr.bf16.gmra.mrb[0].mxu0 %v1252
        %v1457 = vpop.f32.mrb[0].mxu0
        %v1458 = vadd.f32 %v1135, %v1457
        %v1459 = vpop.f32.mrb[0].mxu0
        %v1460 = vpop.f32.mrb[0].mxu0
        %v1461 = vadd.f32 %v1138, %v1460
        %v1462 = vpop.f32.mrb[0].mxu0
        %1463 = vdwg.mxu0
        %v1464 = vld [vmem:[%s4] sm:$0xff]
        %v1465 = vld [vmem:[%s4 + $0x8] sm:$0xff]
        %v1466 = vld [vmem:[%s4 + $0x10] sm:$0xff]
        %v1467 = vld [vmem:[%s4 + $0x18] sm:$0xff]
        %v1468 = vld [vmem:[%s4 + $0x20] sm:$0xff]
        %v1469 = vld [vmem:[%s4 + $0x28] sm:$0xff]
        %v1470 = vld [vmem:[%s4 + $0x30] sm:$0xff]
        %v1471 = vld [vmem:[%s4 + $0x38] sm:$0xff]
        %v1472 = vld [vmem:[%s4 + $0x40] sm:$0xff]
        %v1473 = vld [vmem:[%s4 + $0x48] sm:$0xff]
        %v1474 = vld [vmem:[%s4 + $0x50] sm:$0xff]
        %v1475 = vld [vmem:[%s4 + $0x58] sm:$0xff]
        %v1476 = vld [vmem:[%s4 + $0x60] sm:$0xff]
        %v1477 = vld [vmem:[%s4 + $0x68] sm:$0xff]
        %v1478 = vld [vmem:[%s4 + $0x70] sm:$0xff]
        %v1479 = vld [vmem:[%s4 + $0x78] sm:$0xff]
        %1481 = vset.pattern.permute.xlu0 0
        %1482 = vperm.xlu0 %1481, %v1464
        %v1483 = vpop.permute.xlu0 %1482
        %1486 = vset.pattern.permute.xlu0 0
        %1487 = vperm.xlu0 %1486, %v1465
        %v1488 = vpop.permute.xlu0 %1487
        %1491 = vset.pattern.permute.xlu0 0
        %1492 = vperm.xlu0 %1491, %v1466
        %v1493 = vpop.permute.xlu0 %1492
        %1496 = vset.pattern.permute.xlu0 0
        %1497 = vperm.xlu0 %1496, %v1467
        %v1498 = vpop.permute.xlu0 %1497
        %1501 = vset.pattern.permute.xlu0 0
        %1502 = vperm.xlu0 %1501, %v1468
        %v1503 = vpop.permute.xlu0 %1502
        %1506 = vset.pattern.permute.xlu0 0
        %1507 = vperm.xlu0 %1506, %v1469
        %v1508 = vpop.permute.xlu0 %1507
        %1511 = vset.pattern.permute.xlu0 0
        %1512 = vperm.xlu0 %1511, %v1470
        %v1513 = vpop.permute.xlu0 %1512
        %1516 = vset.pattern.permute.xlu0 0
        %1517 = vperm.xlu0 %1516, %v1471
        %v1518 = vpop.permute.xlu0 %1517
        %1521 = vset.pattern.permute.xlu0 0
        %1522 = vperm.xlu0 %1521, %v1472
        %v1523 = vpop.permute.xlu0 %1522
        %1526 = vset.pattern.permute.xlu0 0
        %1527 = vperm.xlu0 %1526, %v1473
        %v1528 = vpop.permute.xlu0 %1527
        %1531 = vset.pattern.permute.xlu0 0
        %1532 = vperm.xlu0 %1531, %v1474
        %v1533 = vpop.permute.xlu0 %1532
        %1536 = vset.pattern.permute.xlu0 0
        %1537 = vperm.xlu0 %1536, %v1475
        %v1538 = vpop.permute.xlu0 %1537
        %1541 = vset.pattern.permute.xlu0 0
        %1542 = vperm.xlu0 %1541, %v1476
        %v1543 = vpop.permute.xlu0 %1542
        %1546 = vset.pattern.permute.xlu0 0
        %1547 = vperm.xlu0 %1546, %v1477
        %v1548 = vpop.permute.xlu0 %1547
        %1551 = vset.pattern.permute.xlu0 0
        %1552 = vperm.xlu0 %1551, %v1478
        %v1553 = vpop.permute.xlu0 %1552
        %1556 = vset.pattern.permute.xlu0 0
        %1557 = vperm.xlu0 %1556, %v1479
        %v1558 = vpop.permute.xlu0 %1557
        %v1560 = vadd.f32 %v1289, %v1483
        %v1561 = vadd.f32 %v1291, %v1483
        %v1562 = vadd.f32 %v1402, %v1483
        %v1563 = vadd.f32 %v1293, %v1488
        %v1564 = vadd.f32 %v1295, %v1488
        %v1565 = vadd.f32 %v1405, %v1488
        %v1566 = vadd.f32 %v1299, %v1493
        %v1567 = vadd.f32 %v1301, %v1493
        %v1568 = vadd.f32 %v1410, %v1493
        %v1569 = vadd.f32 %v1303, %v1498
        %v1570 = vadd.f32 %v1305, %v1498
        %v1571 = vadd.f32 %v1413, %v1498
        %v1572 = vadd.f32 %v1309, %v1503
        %v1573 = vadd.f32 %v1311, %v1503
        %v1574 = vadd.f32 %v1418, %v1503
        %v1575 = vadd.f32 %v1313, %v1508
        %v1576 = vadd.f32 %v1315, %v1508
        %v1577 = vadd.f32 %v1421, %v1508
        %v1578 = vadd.f32 %v1319, %v1513
        %v1579 = vadd.f32 %v1321, %v1513
        %v1580 = vadd.f32 %v1426, %v1513
        %v1581 = vadd.f32 %v1323, %v1518
        %v1582 = vadd.f32 %v1325, %v1518
        %v1583 = vadd.f32 %v1429, %v1518
        %v1584 = vadd.f32 %v1329, %v1523
        %v1585 = vadd.f32 %v1331, %v1523
        %v1586 = vadd.f32 %v1434, %v1523
        %v1587 = vadd.f32 %v1333, %v1528
        %v1588 = vadd.f32 %v1335, %v1528
        %v1589 = vadd.f32 %v1437, %v1528
        %v1590 = vadd.f32 %v1339, %v1533
        %v1591 = vadd.f32 %v1341, %v1533
        %v1592 = vadd.f32 %v1442, %v1533
        %v1593 = vadd.f32 %v1343, %v1538
        %v1594 = vadd.f32 %v1345, %v1538
        %v1595 = vadd.f32 %v1445, %v1538
        %v1596 = vadd.f32 %v1349, %v1543
        %v1597 = vadd.f32 %v1351, %v1543
        %v1598 = vadd.f32 %v1450, %v1543
        %v1599 = vadd.f32 %v1353, %v1548
        %v1600 = vadd.f32 %v1355, %v1548
        %v1601 = vadd.f32 %v1453, %v1548
        %v1602 = vadd.f32 %v1359, %v1553
        %v1603 = vadd.f32 %v1361, %v1553
        %v1604 = vadd.f32 %v1458, %v1553
        %v1605 = vadd.f32 %v1363, %v1558
        %v1606 = vadd.f32 %v1365, %v1558
        %v1607 = vadd.f32 %v1461, %v1558
        %v1608 = vmul.f32 %v1560, 0.5
        %v1609 = vmul.f32 %v1561, 0.5
        %v1610 = vmul.f32 %v1562, 0.5
        %v1611 = vmul.f32 %v1563, 0.5
        %v1612 = vmul.f32 %v1564, 0.5
        %v1613 = vmul.f32 %v1565, 0.5
        %v1614 = vmul.f32 %v1566, 0.5
        %v1615 = vmul.f32 %v1567, 0.5
        %v1616 = vmul.f32 %v1568, 0.5
        %v1617 = vmul.f32 %v1569, 0.5
        %v1618 = vmul.f32 %v1570, 0.5
        %v1619 = vmul.f32 %v1571, 0.5
        %v1620 = vtanh.pop %v1608
        %v1621 = vtanh.pop %v1609
        %v1622 = vtanh.pop %v1610
        %v1623 = vtanh.pop %v1611
        %v1624 = vtanh.pop %v1612
        %v1625 = vtanh.pop %v1613
        %v1626 = vtanh.pop %v1614
        %v1627 = vtanh.pop %v1615
        %v1628 = vtanh.pop %v1616
        %v1629 = vtanh.pop %v1617
        %v1630 = vtanh.pop %v1618
        %v1631 = vtanh.pop %v1619
        %v1632 = vmul.f32 %v1620, 0.5
        %v1633 = vmul.f32 %v1621, 0.5
        %v1634 = vmul.f32 %v1622, 0.5
        %v1635 = vmul.f32 %v1623, 0.5
        %v1636 = vmul.f32 %v1624, 0.5
        %v1637 = vmul.f32 %v1625, 0.5
        %v1638 = vmul.f32 %v1626, 0.5
        %v1639 = vmul.f32 %v1627, 0.5
        %v1640 = vmul.f32 %v1628, 0.5
        %v1641 = vmul.f32 %v1629, 0.5
        %v1642 = vmul.f32 %v1630, 0.5
        %v1643 = vmul.f32 %v1631, 0.5
        %v1644 = vadd.f32 %v1632, 0.5
        %v1645 = vadd.f32 %v1633, 0.5
        %v1646 = vadd.f32 %v1634, 0.5
        %v1647 = vadd.f32 %v1635, 0.5
        %v1648 = vadd.f32 %v1636, 0.5
        %v1649 = vadd.f32 %v1637, 0.5
        %v1650 = vadd.f32 %v1638, 0.5
        %v1651 = vadd.f32 %v1639, 0.5
        %v1652 = vadd.f32 %v1640, 0.5
        %v1653 = vadd.f32 %v1641, 0.5
        %v1654 = vadd.f32 %v1642, 0.5
        %v1655 = vadd.f32 %v1643, 0.5
        %v1656 = vmul.f32 %v1572, 0.5
        %v1657 = vmul.f32 %v1573, 0.5
        %v1658 = vmul.f32 %v1574, 0.5
        %v1659 = vmul.f32 %v1575, 0.5
        %v1660 = vmul.f32 %v1576, 0.5
        %v1661 = vmul.f32 %v1577, 0.5
        %v1662 = vmul.f32 %v1578, 0.5
        %v1663 = vmul.f32 %v1579, 0.5
        %v1664 = vmul.f32 %v1580, 0.5
        %v1665 = vmul.f32 %v1581, 0.5
        %v1666 = vmul.f32 %v1582, 0.5
        %v1667 = vmul.f32 %v1583, 0.5
        %v1668 = vtanh.pop %v1656
        %v1669 = vtanh.pop %v1657
        %v1670 = vtanh.pop %v1658
        %v1671 = vtanh.pop %v1659
        %v1672 = vtanh.pop %v1660
        %v1673 = vtanh.pop %v1661
        %v1674 = vtanh.pop %v1662
        %v1675 = vtanh.pop %v1663
        %v1676 = vtanh.pop %v1664
        %v1677 = vtanh.pop %v1665
        %v1678 = vtanh.pop %v1666
        %v1679 = vtanh.pop %v1667
        %v1680 = vmul.f32 %v1668, 0.5
        %v1681 = vmul.f32 %v1669, 0.5
        %v1682 = vmul.f32 %v1670, 0.5
        %v1683 = vmul.f32 %v1671, 0.5
        %v1684 = vmul.f32 %v1672, 0.5
        %v1685 = vmul.f32 %v1673, 0.5
        %v1686 = vmul.f32 %v1674, 0.5
        %v1687 = vmul.f32 %v1675, 0.5
        %v1688 = vmul.f32 %v1676, 0.5
        %v1689 = vmul.f32 %v1677, 0.5
        %v1690 = vmul.f32 %v1678, 0.5
        %v1691 = vmul.f32 %v1679, 0.5
        %v1692 = vadd.f32 %v1680, 0.5
        %v1693 = vadd.f32 %v1681, 0.5
        %v1694 = vadd.f32 %v1682, 0.5
        %v1695 = vadd.f32 %v1683, 0.5
        %v1696 = vadd.f32 %v1684, 0.5
        %v1697 = vadd.f32 %v1685, 0.5
        %v1698 = vadd.f32 %v1686, 0.5
        %v1699 = vadd.f32 %v1687, 0.5
        %v1700 = vadd.f32 %v1688, 0.5
        %v1701 = vadd.f32 %v1689, 0.5
        %v1702 = vadd.f32 %v1690, 0.5
        %v1703 = vadd.f32 %v1691, 0.5
        %v1704 = vmul.f32 %v1584, 0.5
        %v1705 = vmul.f32 %v1585, 0.5
        %v1706 = vmul.f32 %v1586, 0.5
        %v1707 = vmul.f32 %v1587, 0.5
        %v1708 = vmul.f32 %v1588, 0.5
        %v1709 = vmul.f32 %v1589, 0.5
        %v1710 = vmul.f32 %v1590, 0.5
        %v1711 = vmul.f32 %v1591, 0.5
        %v1712 = vmul.f32 %v1592, 0.5
        %v1713 = vmul.f32 %v1593, 0.5
        %v1714 = vmul.f32 %v1594, 0.5
        %v1715 = vmul.f32 %v1595, 0.5
        %v1716 = vtanh.pop %v1704
        %v1717 = vtanh.pop %v1705
        %v1718 = vtanh.pop %v1706
        %v1719 = vtanh.pop %v1707
        %v1720 = vtanh.pop %v1708
        %v1721 = vtanh.pop %v1709
        %v1722 = vtanh.pop %v1710
        %v1723 = vtanh.pop %v1711
        %v1724 = vtanh.pop %v1712
        %v1725 = vtanh.pop %v1713
        %v1726 = vtanh.pop %v1714
        %v1727 = vtanh.pop %v1715
        %v1728 = vmul.f32 %v1716, 0.5
        %v1729 = vmul.f32 %v1717, 0.5
        %v1730 = vmul.f32 %v1718, 0.5
        %v1731 = vmul.f32 %v1719, 0.5
        %v1732 = vmul.f32 %v1720, 0.5
        %v1733 = vmul.f32 %v1721, 0.5
        %v1734 = vmul.f32 %v1722, 0.5
        %v1735 = vmul.f32 %v1723, 0.5
        %v1736 = vmul.f32 %v1724, 0.5
        %v1737 = vmul.f32 %v1725, 0.5
        %v1738 = vmul.f32 %v1726, 0.5
        %v1739 = vmul.f32 %v1727, 0.5
        %v1740 = vadd.f32 %v1728, 0.5
        %v1741 = vadd.f32 %v1729, 0.5
        %v1742 = vadd.f32 %v1730, 0.5
        %v1743 = vadd.f32 %v1731, 0.5
        %v1744 = vadd.f32 %v1732, 0.5
        %v1745 = vadd.f32 %v1733, 0.5
        %v1746 = vadd.f32 %v1734, 0.5
        %v1747 = vadd.f32 %v1735, 0.5
        %v1748 = vadd.f32 %v1736, 0.5
        %v1749 = vadd.f32 %v1737, 0.5
        %v1750 = vadd.f32 %v1738, 0.5
        %v1751 = vadd.f32 %v1739, 0.5
        %v1752 = vtanh.pop %v1596
        %v1753 = vtanh.pop %v1597
        %v1754 = vtanh.pop %v1598
        %v1755 = vtanh.pop %v1599
        %v1756 = vtanh.pop %v1600
        %v1757 = vtanh.pop %v1601
        %v1758 = vtanh.pop %v1602
        %v1759 = vtanh.pop %v1603
        %v1760 = vtanh.pop %v1604
        %v1761 = vtanh.pop %v1605
        %v1762 = vtanh.pop %v1606
        %v1763 = vtanh.pop %v1607
        %v1764 = vld [vmem:[#allocation3] sm:$0xff]
        %v1765 = vld [vmem:[#allocation3 + $0x8] sm:$0xff]
        %v1766 = vld [vmem:[#allocation3 + $0x10] sm:$0xff]
        %v1767 = vld [vmem:[#allocation3 + $0x18] sm:$0xff]
        %v1768 = vld [vmem:[#allocation3 + $0x20] sm:$0xff]
        %v1769 = vld [vmem:[#allocation3 + $0x28] sm:$0xff]
        %v1770 = vld [vmem:[#allocation3 + $0x30] sm:$0xff]
        %v1771 = vld [vmem:[#allocation3 + $0x38] sm:$0xff]
        %v1772 = vld [vmem:[#allocation3 + $0x40] sm:$0xff]
        %v1773 = vld [vmem:[#allocation3 + $0x48] sm:$0xff]
        %v1774 = vld [vmem:[#allocation3 + $0x50] sm:$0xff]
        %v1775 = vld [vmem:[#allocation3 + $0x58] sm:$0xff]
        %v1776 = vmul.f32 %v1692, %v1764
        %v1777 = vmul.f32 %v1693, %v1765
        %v1778 = vmul.f32 %v1694, %v1766
        %v1779 = vmul.f32 %v1695, %v1767
        %v1780 = vmul.f32 %v1696, %v1768
        %v1781 = vmul.f32 %v1697, %v1769
        %v1782 = vmul.f32 %v1698, %v1770
        %v1783 = vmul.f32 %v1699, %v1771
        %v1784 = vmul.f32 %v1700, %v1772
        %v1785 = vmul.f32 %v1701, %v1773
        %v1786 = vmul.f32 %v1702, %v1774
        %v1787 = vmul.f32 %v1703, %v1775
        %v1788 = vmul.f32 %v1644, %v1752
        %v1789 = vmul.f32 %v1645, %v1753
        %v1790 = vmul.f32 %v1646, %v1754
        %v1791 = vmul.f32 %v1647, %v1755
        %v1792 = vmul.f32 %v1648, %v1756
        %v1793 = vmul.f32 %v1649, %v1757
        %v1794 = vmul.f32 %v1650, %v1758
        %v1795 = vmul.f32 %v1651, %v1759
        %v1796 = vmul.f32 %v1652, %v1760
        %v1797 = vmul.f32 %v1653, %v1761
        %v1798 = vmul.f32 %v1654, %v1762
        %v1799 = vmul.f32 %v1655, %v1763
        %v1800 = vadd.f32 %v1776, %v1788
        %v1801 = vadd.f32 %v1777, %v1789
        %v1802 = vadd.f32 %v1778, %v1790
        %v1803 = vadd.f32 %v1779, %v1791
        %v1804 = vadd.f32 %v1780, %v1792
        %v1805 = vadd.f32 %v1781, %v1793
        %v1806 = vadd.f32 %v1782, %v1794
        %v1807 = vadd.f32 %v1783, %v1795
        %v1808 = vadd.f32 %v1784, %v1796
        %v1809 = vadd.f32 %v1785, %v1797
        %v1810 = vadd.f32 %v1786, %v1798
        %v1811 = vadd.f32 %v1787, %v1799
        %v1813 = vlaneseq
        %v1814 = vshrl.u32 %v1813, 7
        %v1815 = vsub.s32 0, %v1814
        %v1816 = vrot.slane %v452, %v1815
        %v1817 = vlaneseq
        %v1818 = vshrl.u32 %v1817, 7
        %v1819 = vsub.s32 1, %v1818
        %v1820 = vrot.slane %v452, %v1819
        %v1821 = vlaneseq
        %v1822 = vshrl.u32 %v1821, 7
        %v1823 = vsub.s32 2, %v1822
        %v1824 = vrot.slane %v452, %v1823
        %v1828 = vmul.f32 %v1800, %v1816
        %v1829 = vmul.f32 %v1801, %v1820
        %v1830 = vmul.f32 %v1802, %v1824
        %v1831 = vmul.f32 %v1803, %v1816
        %v1832 = vmul.f32 %v1804, %v1820
        %v1833 = vmul.f32 %v1805, %v1824
        %v1834 = vmul.f32 %v1806, %v1816
        %v1835 = vmul.f32 %v1807, %v1820
        %v1836 = vmul.f32 %v1808, %v1824
        %v1837 = vmul.f32 %v1809, %v1816
        %v1838 = vmul.f32 %v1810, %v1820
        %v1839 = vmul.f32 %v1811, %v1824
        %v1840 = vtanh.pop %v1828
        %v1841 = vtanh.pop %v1829
        %v1842 = vtanh.pop %v1830
        %v1843 = vtanh.pop %v1831
        %v1844 = vtanh.pop %v1832
        %v1845 = vtanh.pop %v1833
        %v1846 = vtanh.pop %v1834
        %v1847 = vtanh.pop %v1835
        %v1848 = vtanh.pop %v1836
        %v1849 = vtanh.pop %v1837
        %v1850 = vtanh.pop %v1838
        %v1851 = vtanh.pop %v1839
        %v1852 = vmul.f32 %v1740, %v1840
        %v1853 = vmul.f32 %v1741, %v1841
        %v1854 = vmul.f32 %v1742, %v1842
        %v1855 = vmul.f32 %v1743, %v1843
        %v1856 = vmul.f32 %v1744, %v1844
        %v1857 = vmul.f32 %v1745, %v1845
        %v1858 = vmul.f32 %v1746, %v1846
        %v1859 = vmul.f32 %v1747, %v1847
        %v1860 = vmul.f32 %v1748, %v1848
        %v1861 = vmul.f32 %v1749, %v1849
        %v1862 = vmul.f32 %v1750, %v1850
        %v1863 = vmul.f32 %v1751, %v1851
        %1864 = vst [vmem:[#allocation3] sm:$0xff] %v1828
        %1865 = vst [vmem:[#allocation3 + $0x8] sm:$0xff] %v1829
        %1866 = vst [vmem:[#allocation3 + $0x10] sm:$0xff] %v1830
        %1867 = vst [vmem:[#allocation3 + $0x18] sm:$0xff] %v1831
        %1868 = vst [vmem:[#allocation3 + $0x20] sm:$0xff] %v1832
        %1869 = vst [vmem:[#allocation3 + $0x28] sm:$0xff] %v1833
        %1870 = vst [vmem:[#allocation3 + $0x30] sm:$0xff] %v1834
        %1871 = vst [vmem:[#allocation3 + $0x38] sm:$0xff] %v1835
        %1872 = vst [vmem:[#allocation3 + $0x40] sm:$0xff] %v1836
        %1873 = vst [vmem:[#allocation3 + $0x48] sm:$0xff] %v1837
        %1874 = vst [vmem:[#allocation3 + $0x50] sm:$0xff] %v1838
        %1875 = vst [vmem:[#allocation3 + $0x58] sm:$0xff] %v1839
        %1876 = vrot.lane.b32.xlu0 %v1852, 19
        %v1877 = vpop.permute.xlu0 %1876
        %1878 = vrot.lane.b32.xlu0 %v1855, 19
        %v1879 = vpop.permute.xlu0 %1878
        %1880 = vrot.lane.b32.xlu0 %v1858, 19
        %v1881 = vpop.permute.xlu0 %1880
        %1882 = vrot.lane.b32.xlu0 %v1861, 19
        %v1883 = vpop.permute.xlu0 %1882
        %1884 = vrot.lane.b32.xlu0 %v1853, 19
        %v1885 = vpop.permute.xlu0 %1884
        %1886 = vrot.lane.b32.xlu0 %v1856, 19
        %v1887 = vpop.permute.xlu0 %1886
        %1888 = vrot.lane.b32.xlu0 %v1859, 19
        %v1889 = vpop.permute.xlu0 %1888
        %1890 = vrot.lane.b32.xlu0 %v1862, 19
        %v1891 = vpop.permute.xlu0 %1890
        %1892 = vrot.lane.b32.xlu0 %v1854, 19
        %v1893 = vpop.permute.xlu0 %1892
        %1894 = vrot.lane.b32.xlu0 %v1857, 19
        %v1895 = vpop.permute.xlu0 %1894
        %1896 = vrot.lane.b32.xlu0 %v1860, 19
        %v1897 = vpop.permute.xlu0 %1896
        %1898 = vrot.lane.b32.xlu0 %v1863, 19
        %v1899 = vpop.permute.xlu0 %1898
        %v1900 = vlaneseq
        %v1901 = vand.u32 %v1900, 127
        %vm1902 = vcmp.lt.s32.totalorder %v1901, 19
        %v1903 = vsel %vm1902, %v1885, %v1893
        %v1904 = vsel %vm1902, %v1887, %v1895
        %v1905 = vsel %vm1902, %v1889, %v1897
        %v1906 = vsel %vm1902, %v1891, %v1899
        %v1907 = vsel %vm1902, %v1877, %v1885
        %v1908 = vsel %vm1902, %v1879, %v1887
        %v1909 = vsel %vm1902, %v1881, %v1889
        %v1910 = vsel %vm1902, %v1883, %v1891
        %v1911 = vsel %vm1902, %v1893, %v1877
        %v1912 = vsel %vm1902, %v1895, %v1879
        %v1913 = vsel %vm1902, %v1897, %v1881
        %v1914 = vsel %vm1902, %v1899, %v1883
        %v1915 = vpack.c.bf16 %v1912, %v1911
        %v1916 = vpack.c.bf16 %v1908, %v1907
        %v1917 = vpack.c.bf16 %v1904, %v1903
        %v1918 = vpack.c.bf16 %v1914, %v1913
        %v1919 = vpack.c.bf16 %v1910, %v1909
        %v1920 = vpack.c.bf16 %v1906, %v1905
        %1921 = vst [vmem:[#allocation2] sm:$0xff] %v1915
        %1922 = vst [vmem:[#allocation2 + $0x8] sm:$0xff] %v1916
        %1923 = vst [vmem:[#allocation2 + $0x10] sm:$0xff] %v1917
        %1924 = vst [vmem:[#allocation2 + $0x18] sm:$0xff] %v1918
        %1925 = vst [vmem:[#allocation2 + $0x20] sm:$0xff] %v1919
        %1926 = vst [vmem:[#allocation2 + $0x28] sm:$0xff] %v1920
        %1927 = vrot.lane.b32.xlu0 %v1852, 18
        %v1928 = vpop.permute.xlu0 %1927
        %1929 = vrot.lane.b32.xlu0 %v1855, 18
        %v1930 = vpop.permute.xlu0 %1929
        %1931 = vrot.lane.b32.xlu0 %v1858, 18
        %v1932 = vpop.permute.xlu0 %1931
        %1933 = vrot.lane.b32.xlu0 %v1861, 18
        %v1934 = vpop.permute.xlu0 %1933
        %1935 = vrot.lane.b32.xlu0 %v1853, 18
        %v1936 = vpop.permute.xlu0 %1935
        %1937 = vrot.lane.b32.xlu0 %v1856, 18
        %v1938 = vpop.permute.xlu0 %1937
        %1939 = vrot.lane.b32.xlu0 %v1859, 18
        %v1940 = vpop.permute.xlu0 %1939
        %1941 = vrot.lane.b32.xlu0 %v1862, 18
        %v1942 = vpop.permute.xlu0 %1941
        %1943 = vrot.lane.b32.xlu0 %v1854, 18
        %v1944 = vpop.permute.xlu0 %1943
        %1945 = vrot.lane.b32.xlu0 %v1857, 18
        %v1946 = vpop.permute.xlu0 %1945
        %1947 = vrot.lane.b32.xlu0 %v1860, 18
        %v1948 = vpop.permute.xlu0 %1947
        %1949 = vrot.lane.b32.xlu0 %v1863, 18
        %v1950 = vpop.permute.xlu0 %1949
        %vm1951 = vcmp.lt.s32.totalorder %v1901, 18
        %v1952 = vsel %vm1951, %v1936, %v1944
        %v1953 = vsel %vm1951, %v1938, %v1946
        %v1954 = vsel %vm1951, %v1940, %v1948
        %v1955 = vsel %vm1951, %v1942, %v1950
        %v1956 = vsel %vm1951, %v1928, %v1936
        %v1957 = vsel %vm1951, %v1930, %v1938
        %v1958 = vsel %vm1951, %v1932, %v1940
        %v1959 = vsel %vm1951, %v1934, %v1942
        %v1960 = vsel %vm1951, %v1944, %v1928
        %v1961 = vsel %vm1951, %v1946, %v1930
        %v1962 = vsel %vm1951, %v1948, %v1932
        %v1963 = vsel %vm1951, %v1950, %v1934
        %v1964 = vpack.c.bf16 %v1961, %v1960
        %v1965 = vpack.c.bf16 %v1957, %v1956
        %v1966 = vpack.c.bf16 %v1953, %v1952
        %v1967 = vpack.c.bf16 %v1963, %v1962
        %v1968 = vpack.c.bf16 %v1959, %v1958
        %v1969 = vpack.c.bf16 %v1955, %v1954
        %1970 = vst [vmem:[#allocation2 + $0x30] sm:$0xff] %v1964
        %1971 = vst [vmem:[#allocation2 + $0x38] sm:$0xff] %v1965
        %1972 = vst [vmem:[#allocation2 + $0x40] sm:$0xff] %v1966
        %1973 = vst [vmem:[#allocation2 + $0x48] sm:$0xff] %v1967
        %1974 = vst [vmem:[#allocation2 + $0x50] sm:$0xff] %v1968
        %1975 = vst [vmem:[#allocation2 + $0x58] sm:$0xff] %v1969
        %1976 = vrot.lane.b32.xlu0 %v1852, 17
        %v1977 = vpop.permute.xlu0 %1976
        %1978 = vrot.lane.b32.xlu0 %v1855, 17
        %v1979 = vpop.permute.xlu0 %1978
        %1980 = vrot.lane.b32.xlu0 %v1858, 17
        %v1981 = vpop.permute.xlu0 %1980
        %1982 = vrot.lane.b32.xlu0 %v1861, 17
        %v1983 = vpop.permute.xlu0 %1982
        %1984 = vrot.lane.b32.xlu0 %v1853, 17
        %v1985 = vpop.permute.xlu0 %1984
        %1986 = vrot.lane.b32.xlu0 %v1856, 17
        %v1987 = vpop.permute.xlu0 %1986
        %1988 = vrot.lane.b32.xlu0 %v1859, 17
        %v1989 = vpop.permute.xlu0 %1988
        %1990 = vrot.lane.b32.xlu0 %v1862, 17
        %v1991 = vpop.permute.xlu0 %1990
        %1992 = vrot.lane.b32.xlu0 %v1854, 17
        %v1993 = vpop.permute.xlu0 %1992
        %1994 = vrot.lane.b32.xlu0 %v1857, 17
        %v1995 = vpop.permute.xlu0 %1994
        %1996 = vrot.lane.b32.xlu0 %v1860, 17
        %v1997 = vpop.permute.xlu0 %1996
        %1998 = vrot.lane.b32.xlu0 %v1863, 17
        %v1999 = vpop.permute.xlu0 %1998
        %vm2000 = vcmp.lt.s32.totalorder %v1901, 17
        %v2001 = vsel %vm2000, %v1985, %v1993
        %v2002 = vsel %vm2000, %v1987, %v1995
        %v2003 = vsel %vm2000, %v1989, %v1997
        %v2004 = vsel %vm2000, %v1991, %v1999
        %v2005 = vsel %vm2000, %v1977, %v1985
        %v2006 = vsel %vm2000, %v1979, %v1987
        %v2007 = vsel %vm2000, %v1981, %v1989
        %v2008 = vsel %vm2000, %v1983, %v1991
        %v2009 = vsel %vm2000, %v1993, %v1977
        %v2010 = vsel %vm2000, %v1995, %v1979
        %v2011 = vsel %vm2000, %v1997, %v1981
        %v2012 = vsel %vm2000, %v1999, %v1983
        %v2013 = vpack.c.bf16 %v2010, %v2009
        %v2014 = vpack.c.bf16 %v2006, %v2005
        %v2015 = vpack.c.bf16 %v2002, %v2001
        %v2016 = vpack.c.bf16 %v2012, %v2011
        %v2017 = vpack.c.bf16 %v2008, %v2007
        %v2018 = vpack.c.bf16 %v2004, %v2003
        %2019 = vst [vmem:[#allocation2 + $0x60] sm:$0xff] %v2013
        %2020 = vst [vmem:[#allocation2 + $0x68] sm:$0xff] %v2014
        %2021 = vst [vmem:[#allocation2 + $0x70] sm:$0xff] %v2015
        %2022 = vst [vmem:[#allocation2 + $0x78] sm:$0xff] %v2016
        %2023 = vst [vmem:[#allocation2 + $0x80] sm:$0xff] %v2017
        %2024 = vst [vmem:[#allocation2 + $0x88] sm:$0xff] %v2018
        %2025 = vrot.lane.b32.xlu0 %v1852, 1
        %v2026 = vpop.permute.xlu0 %2025
        %2027 = vrot.lane.b32.xlu0 %v1855, 1
        %v2028 = vpop.permute.xlu0 %2027
        %2029 = vrot.lane.b32.xlu0 %v1858, 1
        %v2030 = vpop.permute.xlu0 %2029
        %2031 = vrot.lane.b32.xlu0 %v1861, 1
        %v2032 = vpop.permute.xlu0 %2031
        %2033 = vrot.lane.b32.xlu0 %v1853, 1
        %v2034 = vpop.permute.xlu0 %2033
        %2035 = vrot.lane.b32.xlu0 %v1856, 1
        %v2036 = vpop.permute.xlu0 %2035
        %2037 = vrot.lane.b32.xlu0 %v1859, 1
        %v2038 = vpop.permute.xlu0 %2037
        %2039 = vrot.lane.b32.xlu0 %v1862, 1
        %v2040 = vpop.permute.xlu0 %2039
        %2041 = vrot.lane.b32.xlu0 %v1854, 1
        %v2042 = vpop.permute.xlu0 %2041
        %2043 = vrot.lane.b32.xlu0 %v1857, 1
        %v2044 = vpop.permute.xlu0 %2043
        %2045 = vrot.lane.b32.xlu0 %v1860, 1
        %v2046 = vpop.permute.xlu0 %2045
        %2047 = vrot.lane.b32.xlu0 %v1863, 1
        %v2048 = vpop.permute.xlu0 %2047
        %vm2049 = vcmp.lt.s32.totalorder %v1901, 1
        %v2050 = vsel %vm2049, %v2034, %v2042
        %v2051 = vsel %vm2049, %v2036, %v2044
        %v2052 = vsel %vm2049, %v2038, %v2046
        %v2053 = vsel %vm2049, %v2040, %v2048
        %v2054 = vsel %vm2049, %v2026, %v2034
        %v2055 = vsel %vm2049, %v2028, %v2036
        %v2056 = vsel %vm2049, %v2030, %v2038
        %v2057 = vsel %vm2049, %v2032, %v2040
        %v2058 = vsel %vm2049, %v2042, %v2026
        %v2059 = vsel %vm2049, %v2044, %v2028
        %v2060 = vsel %vm2049, %v2046, %v2030
        %v2061 = vsel %vm2049, %v2048, %v2032
        %v2062 = vpack.c.bf16 %v2059, %v2058
        %v2063 = vpack.c.bf16 %v2055, %v2054
        %v2064 = vpack.c.bf16 %v2051, %v2050
        %v2065 = vpack.c.bf16 %v2061, %v2060
        %v2066 = vpack.c.bf16 %v2057, %v2056
        %v2067 = vpack.c.bf16 %v2053, %v2052
        %2068 = vst [vmem:[#allocation2 + $0x90] sm:$0xff] %v2062
        %2069 = vst [vmem:[#allocation2 + $0x98] sm:$0xff] %v2063
        %2070 = vst [vmem:[#allocation2 + $0xa0] sm:$0xff] %v2064
        %2071 = vst [vmem:[#allocation2 + $0xa8] sm:$0xff] %v2065
        %2072 = vst [vmem:[#allocation2 + $0xb0] sm:$0xff] %v2066
        %2073 = vst [vmem:[#allocation2 + $0xb8] sm:$0xff] %v2067
        %v2074 = vpack.c.bf16 %v1855, %v1852
        %v2075 = vpack.c.bf16 %v1856, %v1853
        %v2076 = vpack.c.bf16 %v1857, %v1854
        %v2077 = vpack.c.bf16 %v1861, %v1858
        %v2078 = vpack.c.bf16 %v1862, %v1859
        %v2079 = vpack.c.bf16 %v1863, %v1860
        %2080 = vst [vmem:[#allocation2 + $0xc0] sm:$0xff] %v2074
        %2081 = vst [vmem:[#allocation2 + $0xc8] sm:$0xff] %v2075
        %2082 = vst [vmem:[#allocation2 + $0xd0] sm:$0xff] %v2076
        %2083 = vst [vmem:[#allocation2 + $0xd8] sm:$0xff] %v2077
        %2084 = vst [vmem:[#allocation2 + $0xe0] sm:$0xff] %v2078
        %2085 = vst [vmem:[#allocation2 + $0xe8] sm:$0xff] %v2079
        %2086 = vrot.lane.b32.xlu0 %v1852, 127
        %v2087 = vpop.permute.xlu0 %2086
        %2088 = vrot.lane.b32.xlu0 %v1855, 127
        %v2089 = vpop.permute.xlu0 %2088
        %2090 = vrot.lane.b32.xlu0 %v1858, 127
        %v2091 = vpop.permute.xlu0 %2090
        %2092 = vrot.lane.b32.xlu0 %v1861, 127
        %v2093 = vpop.permute.xlu0 %2092
        %2094 = vrot.lane.b32.xlu0 %v1853, 127
        %v2095 = vpop.permute.xlu0 %2094
        %2096 = vrot.lane.b32.xlu0 %v1856, 127
        %v2097 = vpop.permute.xlu0 %2096
        %2098 = vrot.lane.b32.xlu0 %v1859, 127
        %v2099 = vpop.permute.xlu0 %2098
        %2100 = vrot.lane.b32.xlu0 %v1862, 127
        %v2101 = vpop.permute.xlu0 %2100
        %2102 = vrot.lane.b32.xlu0 %v1854, 127
        %v2103 = vpop.permute.xlu0 %2102
        %2104 = vrot.lane.b32.xlu0 %v1857, 127
        %v2105 = vpop.permute.xlu0 %2104
        %2106 = vrot.lane.b32.xlu0 %v1860, 127
        %v2107 = vpop.permute.xlu0 %2106
        %2108 = vrot.lane.b32.xlu0 %v1863, 127
        %v2109 = vpop.permute.xlu0 %2108
        %vm2110 = vcmp.lt.s32.totalorder %v1901, 127
        %v2111 = vsel %vm2110, %v2095, %v2103
        %v2112 = vsel %vm2110, %v2097, %v2105
        %v2113 = vsel %vm2110, %v2099, %v2107
        %v2114 = vsel %vm2110, %v2101, %v2109
        %v2115 = vsel %vm2110, %v2087, %v2095
        %v2116 = vsel %vm2110, %v2089, %v2097
        %v2117 = vsel %vm2110, %v2091, %v2099
        %v2118 = vsel %vm2110, %v2093, %v2101
        %v2119 = vsel %vm2110, %v2103, %v2087
        %v2120 = vsel %vm2110, %v2105, %v2089
        %v2121 = vsel %vm2110, %v2107, %v2091
        %v2122 = vsel %vm2110, %v2109, %v2093
        %v2123 = vpack.c.bf16 %v2116, %v2115
        %v2124 = vpack.c.bf16 %v2112, %v2111
        %v2125 = vpack.c.bf16 %v2120, %v2119
        %v2126 = vpack.c.bf16 %v2118, %v2117
        %v2127 = vpack.c.bf16 %v2114, %v2113
        %v2128 = vpack.c.bf16 %v2122, %v2121
        %2129 = vst [vmem:[#allocation2 + $0xf0] sm:$0xff] %v2123
        %2130 = vst [vmem:[#allocation2 + $0xf8] sm:$0xff] %v2124
        %2131 = vst [vmem:[#allocation2 + $0x100] sm:$0xff] %v2125
        %2132 = vst [vmem:[#allocation2 + $0x108] sm:$0xff] %v2126
        %2133 = vst [vmem:[#allocation2 + $0x110] sm:$0xff] %v2127
        %2134 = vst [vmem:[#allocation2 + $0x118] sm:$0xff] %v2128
        %2135 = vrot.lane.b32.xlu0 %v1852, 111
        %v2136 = vpop.permute.xlu0 %2135
        %2137 = vrot.lane.b32.xlu0 %v1855, 111
        %v2138 = vpop.permute.xlu0 %2137
        %2139 = vrot.lane.b32.xlu0 %v1858, 111
        %v2140 = vpop.permute.xlu0 %2139
        %2141 = vrot.lane.b32.xlu0 %v1861, 111
        %v2142 = vpop.permute.xlu0 %2141
        %2143 = vrot.lane.b32.xlu0 %v1853, 111
        %v2144 = vpop.permute.xlu0 %2143
        %2145 = vrot.lane.b32.xlu0 %v1856, 111
        %v2146 = vpop.permute.xlu0 %2145
        %2147 = vrot.lane.b32.xlu0 %v1859, 111
        %v2148 = vpop.permute.xlu0 %2147
        %2149 = vrot.lane.b32.xlu0 %v1862, 111
        %v2150 = vpop.permute.xlu0 %2149
        %2151 = vrot.lane.b32.xlu0 %v1854, 111
        %v2152 = vpop.permute.xlu0 %2151
        %2153 = vrot.lane.b32.xlu0 %v1857, 111
        %v2154 = vpop.permute.xlu0 %2153
        %2155 = vrot.lane.b32.xlu0 %v1860, 111
        %v2156 = vpop.permute.xlu0 %2155
        %2157 = vrot.lane.b32.xlu0 %v1863, 111
        %v2158 = vpop.permute.xlu0 %2157
        %vm2159 = vcmp.lt.s32.totalorder %v1901, 111
        %v2160 = vsel %vm2159, %v2144, %v2152
        %v2161 = vsel %vm2159, %v2146, %v2154
        %v2162 = vsel %vm2159, %v2148, %v2156
        %v2163 = vsel %vm2159, %v2150, %v2158
        %v2164 = vsel %vm2159, %v2136, %v2144
        %v2165 = vsel %vm2159, %v2138, %v2146
        %v2166 = vsel %vm2159, %v2140, %v2148
        %v2167 = vsel %vm2159, %v2142, %v2150
        %v2168 = vsel %vm2159, %v2152, %v2136
        %v2169 = vsel %vm2159, %v2154, %v2138
        %v2170 = vsel %vm2159, %v2156, %v2140
        %v2171 = vsel %vm2159, %v2158, %v2142
        %v2172 = vpack.c.bf16 %v2165, %v2164
        %v2173 = vpack.c.bf16 %v2161, %v2160
        %v2174 = vpack.c.bf16 %v2169, %v2168
        %v2175 = vpack.c.bf16 %v2167, %v2166
        %v2176 = vpack.c.bf16 %v2163, %v2162
        %v2177 = vpack.c.bf16 %v2171, %v2170
        %2178 = vst [vmem:[#allocation2 + $0x120] sm:$0xff] %v2172
        %2179 = vst [vmem:[#allocation2 + $0x128] sm:$0xff] %v2173
        %2180 = vst [vmem:[#allocation2 + $0x130] sm:$0xff] %v2174
        %2181 = vst [vmem:[#allocation2 + $0x138] sm:$0xff] %v2175
        %2182 = vst [vmem:[#allocation2 + $0x140] sm:$0xff] %v2176
        %2183 = vst [vmem:[#allocation2 + $0x148] sm:$0xff] %v2177
        %2184 = vrot.lane.b32.xlu0 %v1852, 110
        %v2185 = vpop.permute.xlu0 %2184
        %2186 = vrot.lane.b32.xlu0 %v1855, 110
        %v2187 = vpop.permute.xlu0 %2186
        %2188 = vrot.lane.b32.xlu0 %v1858, 110
        %v2189 = vpop.permute.xlu0 %2188
        %2190 = vrot.lane.b32.xlu0 %v1861, 110
        %v2191 = vpop.permute.xlu0 %2190
        %2192 = vrot.lane.b32.xlu0 %v1853, 110
        %v2193 = vpop.permute.xlu0 %2192
        %2194 = vrot.lane.b32.xlu0 %v1856, 110
        %v2195 = vpop.permute.xlu0 %2194
        %2196 = vrot.lane.b32.xlu0 %v1859, 110
        %v2197 = vpop.permute.xlu0 %2196
        %2198 = vrot.lane.b32.xlu0 %v1862, 110
        %v2199 = vpop.permute.xlu0 %2198
        %2200 = vrot.lane.b32.xlu0 %v1854, 110
        %v2201 = vpop.permute.xlu0 %2200
        %2202 = vrot.lane.b32.xlu0 %v1857, 110
        %v2203 = vpop.permute.xlu0 %2202
        %2204 = vrot.lane.b32.xlu0 %v1860, 110
        %v2205 = vpop.permute.xlu0 %2204
        %2206 = vrot.lane.b32.xlu0 %v1863, 110
        %v2207 = vpop.permute.xlu0 %2206
        %vm2208 = vcmp.lt.s32.totalorder %v1901, 110
        %v2209 = vsel %vm2208, %v2193, %v2201
        %v2210 = vsel %vm2208, %v2195, %v2203
        %v2211 = vsel %vm2208, %v2197, %v2205
        %v2212 = vsel %vm2208, %v2199, %v2207
        %v2213 = vsel %vm2208, %v2185, %v2193
        %v2214 = vsel %vm2208, %v2187, %v2195
        %v2215 = vsel %vm2208, %v2189, %v2197
        %v2216 = vsel %vm2208, %v2191, %v2199
        %v2217 = vsel %vm2208, %v2201, %v2185
        %v2218 = vsel %vm2208, %v2203, %v2187
        %v2219 = vsel %vm2208, %v2205, %v2189
        %v2220 = vsel %vm2208, %v2207, %v2191
        %v2221 = vpack.c.bf16 %v2214, %v2213
        %v2222 = vpack.c.bf16 %v2210, %v2209
        %v2223 = vpack.c.bf16 %v2218, %v2217
        %v2224 = vpack.c.bf16 %v2216, %v2215
        %v2225 = vpack.c.bf16 %v2212, %v2211
        %v2226 = vpack.c.bf16 %v2220, %v2219
        %2227 = vst [vmem:[#allocation2 + $0x150] sm:$0xff] %v2221
        %2228 = vst [vmem:[#allocation2 + $0x158] sm:$0xff] %v2222
        %2229 = vst [vmem:[#allocation2 + $0x160] sm:$0xff] %v2223
        %2230 = vst [vmem:[#allocation2 + $0x168] sm:$0xff] %v2224
        %2231 = vst [vmem:[#allocation2 + $0x170] sm:$0xff] %v2225
        %2232 = vst [vmem:[#allocation2 + $0x178] sm:$0xff] %v2226
        %2233 = vrot.lane.b32.xlu0 %v1852, 109
        %v2234 = vpop.permute.xlu0 %2233
        %2235 = vrot.lane.b32.xlu0 %v1855, 109
        %v2236 = vpop.permute.xlu0 %2235
        %2237 = vrot.lane.b32.xlu0 %v1858, 109
        %v2238 = vpop.permute.xlu0 %2237
        %2239 = vrot.lane.b32.xlu0 %v1861, 109
        %v2240 = vpop.permute.xlu0 %2239
        %2241 = vrot.lane.b32.xlu0 %v1853, 109
        %v2242 = vpop.permute.xlu0 %2241
        %2243 = vrot.lane.b32.xlu0 %v1856, 109
        %v2244 = vpop.permute.xlu0 %2243
        %2245 = vrot.lane.b32.xlu0 %v1859, 109
        %v2246 = vpop.permute.xlu0 %2245
        %2247 = vrot.lane.b32.xlu0 %v1862, 109
        %v2248 = vpop.permute.xlu0 %2247
        %2249 = vrot.lane.b32.xlu0 %v1854, 109
        %v2250 = vpop.permute.xlu0 %2249
        %2251 = vrot.lane.b32.xlu0 %v1857, 109
        %v2252 = vpop.permute.xlu0 %2251
        %2253 = vrot.lane.b32.xlu0 %v1860, 109
        %v2254 = vpop.permute.xlu0 %2253
        %2255 = vrot.lane.b32.xlu0 %v1863, 109
        %v2256 = vpop.permute.xlu0 %2255
        %vm2257 = vcmp.lt.s32.totalorder %v1901, 109
        %v2258 = vsel %vm2257, %v2242, %v2250
        %v2259 = vsel %vm2257, %v2244, %v2252
        %v2260 = vsel %vm2257, %v2246, %v2254
        %v2261 = vsel %vm2257, %v2248, %v2256
        %v2262 = vsel %vm2257, %v2234, %v2242
        %v2263 = vsel %vm2257, %v2236, %v2244
        %v2264 = vsel %vm2257, %v2238, %v2246
        %v2265 = vsel %vm2257, %v2240, %v2248
        %v2266 = vsel %vm2257, %v2250, %v2234
        %v2267 = vsel %vm2257, %v2252, %v2236
        %v2268 = vsel %vm2257, %v2254, %v2238
        %v2269 = vsel %vm2257, %v2256, %v2240
        %v2270 = vpack.c.bf16 %v2263, %v2262
        %v2271 = vpack.c.bf16 %v2259, %v2258
        %v2272 = vpack.c.bf16 %v2267, %v2266
        %v2273 = vpack.c.bf16 %v2265, %v2264
        %v2274 = vpack.c.bf16 %v2261, %v2260
        %v2275 = vpack.c.bf16 %v2269, %v2268
        %2276 = vst [vmem:[#allocation2 + $0x180] sm:$0xff] %v2270
        %2277 = vst [vmem:[#allocation2 + $0x188] sm:$0xff] %v2271
        %2278 = vst [vmem:[#allocation2 + $0x190] sm:$0xff] %v2272
        %2279 = vst [vmem:[#allocation2 + $0x198] sm:$0xff] %v2273
        %2280 = vst [vmem:[#allocation2 + $0x1a0] sm:$0xff] %v2274
        %2281 = vst [vmem:[#allocation2 + $0x1a8] sm:$0xff] %v2275
        %v2282 = vld [vmem:[%s5] sm:$0xff]
        %v2283 = vld [vmem:[%s5 + $0x8] sm:$0xff]
        %v2284 = vld [vmem:[%s5 + $0x10] sm:$0xf]
        %v2285 = vld [vmem:[%s5 + $0x14] sm:$0xff]
        %v2286 = vld [vmem:[%s5 + $0x1c] sm:$0xff]
        %v2287 = vld [vmem:[%s5 + $0x24] sm:$0xf]
        %v2288 = vld [vmem:[%s5 + $0x28] sm:$0xff]
        %v2289 = vld [vmem:[%s5 + $0x30] sm:$0xff]
        %v2290 = vld [vmem:[%s5 + $0x38] sm:$0xf]
        %v2291 = vld [vmem:[%s5 + $0x3c] sm:$0xff]
        %v2292 = vld [vmem:[%s5 + $0x44] sm:$0xff]
        %v2293 = vld [vmem:[%s5 + $0x4c] sm:$0xf]
        %v2294 = vld [vmem:[%s5 + $0x50] sm:$0xff]
        %v2295 = vld [vmem:[%s5 + $0x58] sm:$0xff]
        %v2296 = vld [vmem:[%s5 + $0x60] sm:$0xf]
        %v2297 = vld [vmem:[%s5 + $0x64] sm:$0xff]
        %v2298 = vld [vmem:[%s5 + $0x6c] sm:$0xff]
        %v2299 = vld [vmem:[%s5 + $0x74] sm:$0xf]
        %v2300 = vld [vmem:[%s5 + $0x78] sm:$0xff]
        %v2301 = vld [vmem:[%s5 + $0x80] sm:$0xff]
        %v2302 = vld [vmem:[%s5 + $0x88] sm:$0xf]
        %v2303 = vld [vmem:[%s5 + $0x8c] sm:$0xff]
        %v2304 = vld [vmem:[%s5 + $0x94] sm:$0xff]
        %v2305 = vld [vmem:[%s5 + $0x9c] sm:$0xf]
        %v2306 = vld [vmem:[%s5 + $0xa0] sm:$0xff]
        %v2307 = vld [vmem:[%s5 + $0xa8] sm:$0xff]
        %v2308 = vld [vmem:[%s5 + $0xb0] sm:$0xf]
        %v2309 = vld [vmem:[%s5 + $0xb4] sm:$0xff]
        %v2310 = vld [vmem:[%s5 + $0xbc] sm:$0xff]
        %v2311 = vld [vmem:[%s5 + $0xc4] sm:$0xf]
        %v2312 = vld [vmem:[%s5 + $0xc8] sm:$0xff]
        %v2313 = vld [vmem:[%s5 + $0xd0] sm:$0xff]
        %v2314 = vld [vmem:[%s5 + $0xd8] sm:$0xf]
        %v2315 = vld [vmem:[%s5 + $0xdc] sm:$0xff]
        %v2316 = vld [vmem:[%s5 + $0xe4] sm:$0xff]
        %v2317 = vld [vmem:[%s5 + $0xec] sm:$0xf]
        %v2318 = vld [vmem:[%s5 + $0xf0] sm:$0xff]
        %v2319 = vld [vmem:[%s5 + $0xf8] sm:$0xff]
        %v2320 = vld [vmem:[%s5 + $0x100] sm:$0xf]
        %v2321 = vld [vmem:[%s5 + $0x104] sm:$0xff]
        %v2322 = vld [vmem:[%s5 + $0x10c] sm:$0xff]
        %v2323 = vld [vmem:[%s5 + $0x114] sm:$0xf]
        %v2324 = vld [vmem:[%s5 + $0x118] sm:$0xff]
        %v2325 = vld [vmem:[%s5 + $0x120] sm:$0xff]
        %v2326 = vld [vmem:[%s5 + $0x128] sm:$0xf]
        %v2327 = vld [vmem:[%s5 + $0x12c] sm:$0xff]
        %v2328 = vld [vmem:[%s5 + $0x134] sm:$0xff]
        %v2329 = vld [vmem:[%s5 + $0x13c] sm:$0xf]
        %v2330 = vld [vmem:[#allocation2] sm:$0xff]
        %v2331 = vld [vmem:[#allocation2 + $0x8] sm:$0xff]
        %v2332 = vld [vmem:[#allocation2 + $0x10] sm:$0xff]
        %v2333 = vld [vmem:[#allocation2 + $0x18] sm:$0xff]
        %v2334 = vld [vmem:[#allocation2 + $0x20] sm:$0xff]
        %v2335 = vld [vmem:[#allocation2 + $0x28] sm:$0xff]
        %v2336 = vld [vmem:[#allocation2 + $0x30] sm:$0xff]
        %v2337 = vld [vmem:[#allocation2 + $0x38] sm:$0xff]
        %v2338 = vld [vmem:[#allocation2 + $0x40] sm:$0xff]
        %v2339 = vld [vmem:[#allocation2 + $0x48] sm:$0xff]
        %v2340 = vld [vmem:[#allocation2 + $0x50] sm:$0xff]
        %v2341 = vld [vmem:[#allocation2 + $0x58] sm:$0xff]
        %v2342 = vld [vmem:[#allocation2 + $0x60] sm:$0xff]
        %v2343 = vld [vmem:[#allocation2 + $0x68] sm:$0xff]
        %v2344 = vld [vmem:[#allocation2 + $0x70] sm:$0xff]
        %v2345 = vld [vmem:[#allocation2 + $0x78] sm:$0xff]
        %v2346 = vld [vmem:[#allocation2 + $0x80] sm:$0xff]
        %v2347 = vld [vmem:[#allocation2 + $0x88] sm:$0xff]
        %v2348 = vld [vmem:[#allocation2 + $0x90] sm:$0xff]
        %v2349 = vld [vmem:[#allocation2 + $0x98] sm:$0xff]
        %v2350 = vld [vmem:[#allocation2 + $0xa0] sm:$0xff]
        %v2351 = vld [vmem:[#allocation2 + $0xa8] sm:$0xff]
        %v2352 = vld [vmem:[#allocation2 + $0xb0] sm:$0xff]
        %v2353 = vld [vmem:[#allocation2 + $0xb8] sm:$0xff]
        %v2354 = vld [vmem:[#allocation2 + $0xc0] sm:$0xff]
        %v2355 = vld [vmem:[#allocation2 + $0xc8] sm:$0xff]
        %v2356 = vld [vmem:[#allocation2 + $0xd0] sm:$0xff]
        %v2357 = vld [vmem:[#allocation2 + $0xd8] sm:$0xff]
        %v2358 = vld [vmem:[#allocation2 + $0xe0] sm:$0xff]
        %v2359 = vld [vmem:[#allocation2 + $0xe8] sm:$0xff]
        %v2360 = vld [vmem:[#allocation2 + $0xf0] sm:$0xff]
        %v2361 = vld [vmem:[#allocation2 + $0xf8] sm:$0xff]
        %v2362 = vld [vmem:[#allocation2 + $0x100] sm:$0xff]
        %v2363 = vld [vmem:[#allocation2 + $0x108] sm:$0xff]
        %v2364 = vld [vmem:[#allocation2 + $0x110] sm:$0xff]
        %v2365 = vld [vmem:[#allocation2 + $0x118] sm:$0xff]
        %v2366 = vld [vmem:[#allocation2 + $0x120] sm:$0xff]
        %v2367 = vld [vmem:[#allocation2 + $0x128] sm:$0xff]
        %v2368 = vld [vmem:[#allocation2 + $0x130] sm:$0xff]
        %v2369 = vld [vmem:[#allocation2 + $0x138] sm:$0xff]
        %v2370 = vld [vmem:[#allocation2 + $0x140] sm:$0xff]
        %v2371 = vld [vmem:[#allocation2 + $0x148] sm:$0xff]
        %v2372 = vld [vmem:[#allocation2 + $0x150] sm:$0xff]
        %v2373 = vld [vmem:[#allocation2 + $0x158] sm:$0xff]
        %v2374 = vld [vmem:[#allocation2 + $0x160] sm:$0xff]
        %v2375 = vld [vmem:[#allocation2 + $0x168] sm:$0xff]
        %v2376 = vld [vmem:[#allocation2 + $0x170] sm:$0xff]
        %v2377 = vld [vmem:[#allocation2 + $0x178] sm:$0xff]
        %v2378 = vld [vmem:[#allocation2 + $0x180] sm:$0xff]
        %v2379 = vld [vmem:[#allocation2 + $0x188] sm:$0xff]
        %v2380 = vld [vmem:[#allocation2 + $0x190] sm:$0xff]
        %v2381 = vld [vmem:[#allocation2 + $0x198] sm:$0xff]
        %v2382 = vld [vmem:[#allocation2 + $0x1a0] sm:$0xff]
        %v2383 = vld [vmem:[#allocation2 + $0x1a8] sm:$0xff]
        %v2384 = vld [vmem:[#allocation2 + $0x1b0] sm:$0xff]
        %v2385 = vld [vmem:[#allocation2 + $0x1b8] sm:$0xff]
        %v2386 = vld [vmem:[#allocation2 + $0x1c0] sm:$0xff]
        %v2387 = vld [vmem:[#allocation2 + $0x1c8] sm:$0xff]
        %v2388 = vld [vmem:[#allocation2 + $0x1d0] sm:$0xff]
        %v2389 = vld [vmem:[#allocation2 + $0x1d8] sm:$0xff]
        %v2390 = vld [vmem:[#allocation2 + $0x1e0] sm:$0xff]
        %v2391 = vld [vmem:[#allocation2 + $0x1e8] sm:$0xff]
        %v2392 = vld [vmem:[#allocation2 + $0x1f0] sm:$0xff]
        %v2393 = vld [vmem:[#allocation2 + $0x1f8] sm:$0xff]
        %v2394 = vld [vmem:[#allocation2 + $0x200] sm:$0xff]
        %v2395 = vld [vmem:[#allocation2 + $0x208] sm:$0xff]
        %v2396 = vld [vmem:[#allocation2 + $0x210] sm:$0xff]
        %v2397 = vld [vmem:[#allocation2 + $0x218] sm:$0xff]
        %v2398 = vld [vmem:[#allocation2 + $0x220] sm:$0xff]
        %v2399 = vld [vmem:[#allocation2 + $0x228] sm:$0xff]
        %v2400 = vld [vmem:[#allocation2 + $0x230] sm:$0xff]
        %v2401 = vld [vmem:[#allocation2 + $0x238] sm:$0xff]
        %v2402 = vld [vmem:[#allocation2 + $0x240] sm:$0xff]
        %v2403 = vld [vmem:[#allocation2 + $0x248] sm:$0xff]
        %v2404 = vld [vmem:[#allocation2 + $0x250] sm:$0xff]
        %v2405 = vld [vmem:[#allocation2 + $0x258] sm:$0xff]
        %v2406 = vld [vmem:[#allocation2 + $0x260] sm:$0xff]
        %v2407 = vld [vmem:[#allocation2 + $0x268] sm:$0xff]
        %v2408 = vld [vmem:[#allocation2 + $0x270] sm:$0xff]
        %v2409 = vld [vmem:[#allocation2 + $0x278] sm:$0xff]
        %v2410 = vld [vmem:[#allocation2 + $0x280] sm:$0xff]
        %v2411 = vld [vmem:[#allocation2 + $0x288] sm:$0xff]
        %v2412 = vld [vmem:[#allocation2 + $0x290] sm:$0xff]
        %v2413 = vld [vmem:[#allocation2 + $0x298] sm:$0xff]
        %v2414 = vld [vmem:[#allocation2 + $0x2a0] sm:$0xff]
        %v2415 = vld [vmem:[#allocation2 + $0x2a8] sm:$0xff]
        %v2416 = vld [vmem:[#allocation2 + $0x2b0] sm:$0xff]
        %v2417 = vld [vmem:[#allocation2 + $0x2b8] sm:$0xff]
        %v2418 = vld [vmem:[#allocation2 + $0x2c0] sm:$0xff]
        %v2419 = vld [vmem:[#allocation2 + $0x2c8] sm:$0xff]
        %v2420 = vld [vmem:[#allocation2 + $0x2d0] sm:$0xff]
        %v2421 = vld [vmem:[#allocation2 + $0x2d8] sm:$0xff]
        %v2422 = vld [vmem:[#allocation2 + $0x2e0] sm:$0xff]
        %v2423 = vld [vmem:[#allocation2 + $0x2e8] sm:$0xff]
        %v2424 = vld [vmem:[#allocation2 + $0x2f0] sm:$0xff]
        %v2425 = vld [vmem:[#allocation2 + $0x2f8] sm:$0xff]
        %v2426 = vld [vmem:[#allocation2 + $0x300] sm:$0xff]
        %v2427 = vld [vmem:[#allocation2 + $0x308] sm:$0xff]
        %v2428 = vld [vmem:[#allocation2 + $0x310] sm:$0xff]
        %v2429 = vld [vmem:[#allocation2 + $0x318] sm:$0xff]
        %v2430 = vld [vmem:[#allocation2 + $0x320] sm:$0xff]
        %v2431 = vld [vmem:[#allocation2 + $0x328] sm:$0xff]
        %v2432 = vld [vmem:[#allocation2 + $0x330] sm:$0xff]
        %v2433 = vld [vmem:[#allocation2 + $0x338] sm:$0xff]
        %v2434 = vld [vmem:[#allocation2 + $0x340] sm:$0xff]
        %v2435 = vld [vmem:[#allocation2 + $0x348] sm:$0xff]
        %v2436 = vld [vmem:[#allocation2 + $0x350] sm:$0xff]
        %v2437 = vld [vmem:[#allocation2 + $0x358] sm:$0xff]
        %v2438 = vld [vmem:[%s6] sm:$0xff]
        %v2439 = vld [vmem:[%s6 + $0x8] sm:$0xff]
        %v2440 = vld [vmem:[%s6 + $0x10] sm:$0xff]
        %v2441 = vld [vmem:[%s6 + $0x18] sm:$0xff]
        %v2442 = vld [vmem:[%s6 + $0x20] sm:$0xff]
        %v2443 = vld [vmem:[%s6 + $0x28] sm:$0xff]
        %v2444 = vld [vmem:[%s6 + $0x30] sm:$0xff]
        %v2445 = vld [vmem:[%s6 + $0x38] sm:$0xff]
        %v2446 = vld [vmem:[%s6 + $0x40] sm:$0xff]
        %v2447 = vld [vmem:[%s6 + $0x48] sm:$0xff]
        %v2448 = vld [vmem:[%s6 + $0x50] sm:$0xff]
        %v2449 = vld [vmem:[%s6 + $0x58] sm:$0xff]
        %v2450 = vld [vmem:[%s6 + $0x60] sm:$0xff]
        %v2451 = vld [vmem:[%s6 + $0x68] sm:$0xff]
        %v2452 = vld [vmem:[%s6 + $0x70] sm:$0xff]
        %v2453 = vld [vmem:[%s6 + $0x78] sm:$0xff]
        %2455 = vset.pattern.permute.xlu0 0
        %2456 = vperm.xlu0 %2455, %v2438
        %v2457 = vpop.permute.xlu0 %2456
        %2460 = vset.pattern.permute.xlu0 0
        %2461 = vperm.xlu0 %2460, %v2439
        %v2462 = vpop.permute.xlu0 %2461
        %2465 = vset.pattern.permute.xlu0 0
        %2466 = vperm.xlu0 %2465, %v2440
        %v2467 = vpop.permute.xlu0 %2466
        %2470 = vset.pattern.permute.xlu0 0
        %2471 = vperm.xlu0 %2470, %v2441
        %v2472 = vpop.permute.xlu0 %2471
        %2475 = vset.pattern.permute.xlu0 0
        %2476 = vperm.xlu0 %2475, %v2442
        %v2477 = vpop.permute.xlu0 %2476
        %2480 = vset.pattern.permute.xlu0 0
        %2481 = vperm.xlu0 %2480, %v2443
        %v2482 = vpop.permute.xlu0 %2481
        %2485 = vset.pattern.permute.xlu0 0
        %2486 = vperm.xlu0 %2485, %v2444
        %v2487 = vpop.permute.xlu0 %2486
        %2490 = vset.pattern.permute.xlu0 0
        %2491 = vperm.xlu0 %2490, %v2445
        %v2492 = vpop.permute.xlu0 %2491
        %2495 = vset.pattern.permute.xlu0 0
        %2496 = vperm.xlu0 %2495, %v2446
        %v2497 = vpop.permute.xlu0 %2496
        %2500 = vset.pattern.permute.xlu0 0
        %2501 = vperm.xlu0 %2500, %v2447
        %v2502 = vpop.permute.xlu0 %2501
        %2505 = vset.pattern.permute.xlu0 0
        %2506 = vperm.xlu0 %2505, %v2448
        %v2507 = vpop.permute.xlu0 %2506
        %2510 = vset.pattern.permute.xlu0 0
        %2511 = vperm.xlu0 %2510, %v2449
        %v2512 = vpop.permute.xlu0 %2511
        %2515 = vset.pattern.permute.xlu0 0
        %2516 = vperm.xlu0 %2515, %v2450
        %v2517 = vpop.permute.xlu0 %2516
        %2520 = vset.pattern.permute.xlu0 0
        %2521 = vperm.xlu0 %2520, %v2451
        %v2522 = vpop.permute.xlu0 %2521
        %2525 = vset.pattern.permute.xlu0 0
        %2526 = vperm.xlu0 %2525, %v2452
        %v2527 = vpop.permute.xlu0 %2526
        %2530 = vset.pattern.permute.xlu0 0
        %2531 = vperm.xlu0 %2530, %v2453
        %v2532 = vpop.permute.xlu0 %2531
        %v2582 = vunpack.c.l.b16 %v2282
        %v2583 = vunpack.c.h.b16 %v2282
        %v2584 = vunpack.c.l.b16 %v2283
        %v2585 = vunpack.c.h.b16 %v2283
        %v2586 = vunpack.c.l.b16 %v2284
        %v2587 = vunpack.c.l.b16 %v2285
        %v2588 = vunpack.c.h.b16 %v2285
        %v2589 = vunpack.c.l.b16 %v2286
        %v2590 = vunpack.c.h.b16 %v2286
        %v2591 = vunpack.c.l.b16 %v2287
        %v2592 = vunpack.c.l.b16 %v2288
        %v2593 = vunpack.c.h.b16 %v2288
        %v2594 = vunpack.c.l.b16 %v2289
        %v2595 = vunpack.c.h.b16 %v2289
        %v2596 = vunpack.c.l.b16 %v2290
        %v2597 = vunpack.c.l.b16 %v2291
        %v2598 = vunpack.c.h.b16 %v2291
        %v2599 = vunpack.c.l.b16 %v2292
        %v2600 = vunpack.c.h.b16 %v2292
        %v2601 = vunpack.c.l.b16 %v2293
        %v2602 = vunpack.c.l.b16 %v2294
        %v2603 = vunpack.c.h.b16 %v2294
        %v2604 = vunpack.c.l.b16 %v2295
        %v2605 = vunpack.c.h.b16 %v2295
        %v2606 = vunpack.c.l.b16 %v2296
        %v2607 = vunpack.c.l.b16 %v2297
        %v2608 = vunpack.c.h.b16 %v2297
        %v2609 = vunpack.c.l.b16 %v2298
        %v2610 = vunpack.c.h.b16 %v2298
        %v2611 = vunpack.c.l.b16 %v2299
        %v2612 = vunpack.c.l.b16 %v2300
        %v2613 = vunpack.c.h.b16 %v2300
        %v2614 = vunpack.c.l.b16 %v2301
        %v2615 = vunpack.c.h.b16 %v2301
        %v2616 = vunpack.c.l.b16 %v2302
        %v2617 = vunpack.c.l.b16 %v2303
        %v2618 = vunpack.c.h.b16 %v2303
        %v2619 = vunpack.c.l.b16 %v2304
        %v2620 = vunpack.c.h.b16 %v2304
        %v2621 = vunpack.c.l.b16 %v2305
        %v2622 = vunpack.c.l.b16 %v2306
        %v2623 = vunpack.c.h.b16 %v2306
        %v2624 = vunpack.c.l.b16 %v2307
        %v2625 = vunpack.c.h.b16 %v2307
        %v2626 = vunpack.c.l.b16 %v2308
        %v2627 = vunpack.c.l.b16 %v2309
        %v2628 = vunpack.c.h.b16 %v2309
        %v2629 = vunpack.c.l.b16 %v2310
        %v2630 = vunpack.c.h.b16 %v2310
        %v2631 = vunpack.c.l.b16 %v2311
        %v2632 = vunpack.c.l.b16 %v2312
        %v2633 = vunpack.c.h.b16 %v2312
        %v2634 = vunpack.c.l.b16 %v2313
        %v2635 = vunpack.c.h.b16 %v2313
        %v2636 = vunpack.c.l.b16 %v2314
        %v2637 = vunpack.c.l.b16 %v2315
        %v2638 = vunpack.c.h.b16 %v2315
        %v2639 = vunpack.c.l.b16 %v2316
        %v2640 = vunpack.c.h.b16 %v2316
        %v2641 = vunpack.c.l.b16 %v2317
        %v2642 = vunpack.c.l.b16 %v2318
        %v2643 = vunpack.c.h.b16 %v2318
        %v2644 = vunpack.c.l.b16 %v2319
        %v2645 = vunpack.c.h.b16 %v2319
        %v2646 = vunpack.c.l.b16 %v2320
        %v2647 = vunpack.c.l.b16 %v2321
        %v2648 = vunpack.c.h.b16 %v2321
        %v2649 = vunpack.c.l.b16 %v2322
        %v2650 = vunpack.c.h.b16 %v2322
        %v2651 = vunpack.c.l.b16 %v2323
        %v2652 = vunpack.c.l.b16 %v2324
        %v2653 = vunpack.c.h.b16 %v2324
        %v2654 = vunpack.c.l.b16 %v2325
        %v2655 = vunpack.c.h.b16 %v2325
        %v2656 = vunpack.c.l.b16 %v2326
        %v2657 = vunpack.c.l.b16 %v2327
        %v2658 = vunpack.c.h.b16 %v2327
        %v2659 = vunpack.c.l.b16 %v2328
        %v2660 = vunpack.c.h.b16 %v2328
        %v2661 = vunpack.c.l.b16 %v2329
        %v2662 = vpack.c.b16 %v2587, %v2582
        %v2663 = vpack.c.b16 %v2588, %v2583
        %v2664 = vpack.c.b16 %v2589, %v2584
        %v2665 = vpack.c.b16 %v2590, %v2585
        %v2666 = vpack.c.b16 %v2591, %v2586
        %v2667 = vpack.c.b16 %v2597, %v2592
        %v2668 = vpack.c.b16 %v2598, %v2593
        %v2669 = vpack.c.b16 %v2599, %v2594
        %v2670 = vpack.c.b16 %v2600, %v2595
        %v2671 = vpack.c.b16 %v2601, %v2596
        %v2672 = vpack.c.b16 %v2607, %v2602
        %v2673 = vpack.c.b16 %v2608, %v2603
        %v2674 = vpack.c.b16 %v2609, %v2604
        %v2675 = vpack.c.b16 %v2610, %v2605
        %v2676 = vpack.c.b16 %v2611, %v2606
        %v2677 = vpack.c.b16 %v2617, %v2612
        %v2678 = vpack.c.b16 %v2618, %v2613
        %v2679 = vpack.c.b16 %v2619, %v2614
        %v2680 = vpack.c.b16 %v2620, %v2615
        %v2681 = vpack.c.b16 %v2621, %v2616
        %v2682 = vpack.c.b16 %v2627, %v2622
        %v2683 = vpack.c.b16 %v2628, %v2623
        %v2684 = vpack.c.b16 %v2629, %v2624
        %v2685 = vpack.c.b16 %v2630, %v2625
        %v2686 = vpack.c.b16 %v2631, %v2626
        %v2687 = vpack.c.b16 %v2637, %v2632
        %v2688 = vpack.c.b16 %v2638, %v2633
        %v2689 = vpack.c.b16 %v2639, %v2634
        %v2690 = vpack.c.b16 %v2640, %v2635
        %v2691 = vpack.c.b16 %v2641, %v2636
        %v2692 = vpack.c.b16 %v2647, %v2642
        %v2693 = vpack.c.b16 %v2648, %v2643
        %v2694 = vpack.c.b16 %v2649, %v2644
        %v2695 = vpack.c.b16 %v2650, %v2645
        %v2696 = vpack.c.b16 %v2651, %v2646
        %v2697 = vpack.c.b16 %v2657, %v2652
        %v2698 = vpack.c.b16 %v2658, %v2653
        %v2699 = vpack.c.b16 %v2659, %v2654
        %v2700 = vpack.c.b16 %v2660, %v2655
        %v2701 = vpack.c.b16 %v2661, %v2656
        %vm2734 = vcmask 523264
        %v2736 = vsel %vm2734, %v2666, 0
        %v2739 = vsel %vm2734, %v2671, 0
        %v2742 = vsel %vm2734, %v2676, 0
        %v2745 = vsel %vm2734, %v2681, 0
        %v2748 = vsel %vm2734, %v2686, 0
        %v2751 = vsel %vm2734, %v2691, 0
        %v2754 = vsel %vm2734, %v2696, 0
        %v2757 = vsel %vm2734, %v2701, 0
        %2759 = vmatprep.subr.bf16.mxu0 %v2331
        %2760 = vmatpush1.bf16.msra.mxu0 %v2330
        %2761 = vmatprep.subr.bf16.mxu0 %v2334
        %2762 = vmatpush1.bf16.msra.mxu0 %v2333
        %2763 = vmatprep.subr.bf16.mxu0 %v2337
        %2764 = vmatpush1.bf16.msra.mxu0 %v2336
        %2765 = vmatprep.subr.bf16.mxu0 %v2340
        %2766 = vmatpush1.bf16.msra.mxu0 %v2339
        %2767 = vmatprep.subr.bf16.mxu0 %v2343
        %2768 = vmatpush1.bf16.msra.mxu0 %v2342
        %2769 = vmatprep.subr.bf16.mxu0 %v2346
        %2770 = vmatpush1.bf16.msra.mxu0 %v2345
        %2771 = vmatprep.subr.bf16.mxu0 %v2349
        %2772 = vmatpush1.bf16.msra.mxu0 %v2348
        %2773 = vmatprep.subr.bf16.mxu0 %v2352
        %2774 = vmatpush1.bf16.msra.mxu0 %v2351
        %2775 = vmatprep.subr.bf16.mxu0 %v2355
        %2776 = vmatpush1.bf16.msra.mxu0 %v2354
        %2777 = vmatprep.subr.bf16.mxu0 %v2358
        %2778 = vmatpush1.bf16.msra.mxu0 %v2357
        %2779 = vmatprep.subr.bf16.mxu0 %v2361
        %2780 = vmatpush1.bf16.msra.mxu0 %v2360
        %2781 = vmatprep.subr.bf16.mxu0 %v2364
        %2782 = vmatpush1.bf16.msra.mxu0 %v2363
        %2783 = vmatprep.subr.bf16.mxu0 %v2367
        %2784 = vmatpush1.bf16.msra.mxu0 %v2366
        %2785 = vmatprep.subr.bf16.mxu0 %v2370
        %2786 = vmatpush1.bf16.msra.mxu0 %v2369
        %2787 = vmatprep.subr.bf16.mxu0 %v2373
        %2788 = vmatpush1.bf16.msra.mxu0 %v2372
        %2789 = vmatprep.subr.bf16.mxu0 %v2376
        %2790 = vmatpush1.bf16.msra.mxu0 %v2375
        %2791 = vmatprep.mubr.bf16.mxu0 %v2663
        %2792 = vmatmul.mubr.bf16.gmra.mrb[0].mxu0 %v2662
        %v2793 = vpop.f32.mrb[0].mxu0
        %v2794 = vadd.f32 %v2457, %v2793
        %v2795 = vpop.f32.mrb[0].mxu0
        %v2796 = vadd.f32 %v2457, %v2795
        %v2797 = vpop.f32.mrb[0].mxu0
        %v2798 = vadd.f32 %v2462, %v2797
        %v2799 = vpop.f32.mrb[0].mxu0
        %v2800 = vadd.f32 %v2462, %v2799
        %2801 = vmatprep.mubr.bf16.mxu0 %v2668
        %2802 = vmatmul.mubr.bf16.gmra.mrb[0].mxu0 %v2667
        %v2803 = vpop.f32.mrb[0].mxu0
        %v2804 = vadd.f32 %v2467, %v2803
        %v2805 = vpop.f32.mrb[0].mxu0
        %v2806 = vadd.f32 %v2467, %v2805
        %v2807 = vpop.f32.mrb[0].mxu0
        %v2808 = vadd.f32 %v2472, %v2807
        %v2809 = vpop.f32.mrb[0].mxu0
        %v2810 = vadd.f32 %v2472, %v2809
        %2811 = vmatprep.mubr.bf16.mxu0 %v2673
        %2812 = vmatmul.mubr.bf16.gmra.mrb[0].mxu0 %v2672
        %v2813 = vpop.f32.mrb[0].mxu0
        %v2814 = vadd.f32 %v2477, %v2813
        %v2815 = vpop.f32.mrb[0].mxu0
        %v2816 = vadd.f32 %v2477, %v2815
        %v2817 = vpop.f32.mrb[0].mxu0
        %v2818 = vadd.f32 %v2482, %v2817
        %v2819 = vpop.f32.mrb[0].mxu0
        %v2820 = vadd.f32 %v2482, %v2819
        %2821 = vmatprep.mubr.bf16.mxu0 %v2678
        %2822 = vmatmul.mubr.bf16.gmra.mrb[0].mxu0 %v2677
        %v2823 = vpop.f32.mrb[0].mxu0
        %v2824 = vadd.f32 %v2487, %v2823
        %v2825 = vpop.f32.mrb[0].mxu0
        %v2826 = vadd.f32 %v2487, %v2825
        %v2827 = vpop.f32.mrb[0].mxu0
        %v2828 = vadd.f32 %v2492, %v2827
        %v2829 = vpop.f32.mrb[0].mxu0
        %v2830 = vadd.f32 %v2492, %v2829
        %2831 = vmatprep.mubr.bf16.mxu0 %v2683
        %2832 = vmatmul.mubr.bf16.gmra.mrb[0].mxu0 %v2682
        %v2833 = vpop.f32.mrb[0].mxu0
        %v2834 = vadd.f32 %v2497, %v2833
        %v2835 = vpop.f32.mrb[0].mxu0
        %v2836 = vadd.f32 %v2497, %v2835
        %v2837 = vpop.f32.mrb[0].mxu0
        %v2838 = vadd.f32 %v2502, %v2837
        %v2839 = vpop.f32.mrb[0].mxu0
        %v2840 = vadd.f32 %v2502, %v2839
        %2841 = vmatprep.mubr.bf16.mxu0 %v2688
        %2842 = vmatmul.mubr.bf16.gmra.mrb[0].mxu0 %v2687
        %v2843 = vpop.f32.mrb[0].mxu0
        %v2844 = vadd.f32 %v2507, %v2843
        %v2845 = vpop.f32.mrb[0].mxu0
        %v2846 = vadd.f32 %v2507, %v2845
        %v2847 = vpop.f32.mrb[0].mxu0
        %v2848 = vadd.f32 %v2512, %v2847
        %v2849 = vpop.f32.mrb[0].mxu0
        %v2850 = vadd.f32 %v2512, %v2849
        %2851 = vmatprep.mubr.bf16.mxu0 %v2693
        %2852 = vmatmul.mubr.bf16.gmra.mrb[0].mxu0 %v2692
        %v2853 = vpop.f32.mrb[0].mxu0
        %v2854 = vadd.f32 %v2517, %v2853
        %v2855 = vpop.f32.mrb[0].mxu0
        %v2856 = vadd.f32 %v2517, %v2855
        %v2857 = vpop.f32.mrb[0].mxu0
        %v2858 = vadd.f32 %v2522, %v2857
        %v2859 = vpop.f32.mrb[0].mxu0
        %v2860 = vadd.f32 %v2522, %v2859
        %2861 = vmatprep.mubr.bf16.mxu0 %v2698
        %2862 = vmatmul.mubr.bf16.gmra.mrb[0].mxu0 %v2697
        %v2863 = vpop.f32.mrb[0].mxu0
        %v2864 = vadd.f32 %v2527, %v2863
        %v2865 = vpop.f32.mrb[0].mxu0
        %v2866 = vadd.f32 %v2527, %v2865
        %v2867 = vpop.f32.mrb[0].mxu0
        %v2868 = vadd.f32 %v2532, %v2867
        %v2869 = vpop.f32.mrb[0].mxu0
        %v2870 = vadd.f32 %v2532, %v2869
        %2871 = vdwg.mxu0
        %2872 = vmatprep.subr.bf16.mxu0 %v2379
        %2873 = vmatpush1.bf16.msra.mxu0 %v2378
        %2874 = vmatprep.subr.bf16.mxu0 %v2382
        %2875 = vmatpush1.bf16.msra.mxu0 %v2381
        %2876 = vmatprep.subr.bf16.mxu0 %v2385
        %2877 = vmatpush1.bf16.msra.mxu0 %v2384
        %2878 = vmatprep.subr.bf16.mxu0 %v2388
        %2879 = vmatpush1.bf16.msra.mxu0 %v2387
        %2880 = vmatprep.subr.bf16.mxu0 %v2391
        %2881 = vmatpush1.bf16.msra.mxu0 %v2390
        %2882 = vmatprep.subr.bf16.mxu0 %v2394
        %2883 = vmatpush1.bf16.msra.mxu0 %v2393
        %2884 = vmatprep.subr.bf16.mxu0 %v2397
        %2885 = vmatpush1.bf16.msra.mxu0 %v2396
        %2886 = vmatprep.subr.bf16.mxu0 %v2400
        %2887 = vmatpush1.bf16.msra.mxu0 %v2399
        %2888 = vmatprep.subr.bf16.mxu0 %v2403
        %2889 = vmatpush1.bf16.msra.mxu0 %v2402
        %2890 = vmatprep.subr.bf16.mxu0 %v2406
        %2891 = vmatpush1.bf16.msra.mxu0 %v2405
        %2892 = vmatprep.subr.bf16.mxu0 %v2409
        %2893 = vmatpush1.bf16.msra.mxu0 %v2408
        %2894 = vmatprep.subr.bf16.mxu0 %v2412
        %2895 = vmatpush1.bf16.msra.mxu0 %v2411
        %2896 = vmatprep.subr.bf16.mxu0 %v2415
        %2897 = vmatpush1.bf16.msra.mxu0 %v2414
        %2898 = vmatprep.subr.bf16.mxu0 %v2418
        %2899 = vmatpush1.bf16.msra.mxu0 %v2417
        %2900 = vmatprep.subr.bf16.mxu0 %v2421
        %2901 = vmatpush1.bf16.msra.mxu0 %v2420
        %2902 = vmatprep.subr.bf16.mxu0 %v2424
        %2903 = vmatpush1.bf16.msra.mxu0 %v2423
        %2904 = vmatprep.mubr.bf16.mxu0 %v2665
        %2905 = vmatmul.mubr.bf16.gmra.mrb[0].mxu0 %v2664
        %v2906 = vpop.f32.mrb[0].mxu0
        %v2907 = vadd.f32 %v2794, %v2906
        %v2908 = vpop.f32.mrb[0].mxu0
        %v2909 = vadd.f32 %v2796, %v2908
        %v2910 = vpop.f32.mrb[0].mxu0
        %v2911 = vadd.f32 %v2798, %v2910
        %v2912 = vpop.f32.mrb[0].mxu0
        %v2913 = vadd.f32 %v2800, %v2912
        %2914 = vmatprep.mubr.bf16.mxu0 %v2670
        %2915 = vmatmul.mubr.bf16.gmra.mrb[0].mxu0 %v2669
        %v2916 = vpop.f32.mrb[0].mxu0
        %v2917 = vadd.f32 %v2804, %v2916
        %v2918 = vpop.f32.mrb[0].mxu0
        %v2919 = vadd.f32 %v2806, %v2918
        %v2920 = vpop.f32.mrb[0].mxu0
        %v2921 = vadd.f32 %v2808, %v2920
        %v2922 = vpop.f32.mrb[0].mxu0
        %v2923 = vadd.f32 %v2810, %v2922
        %2924 = vmatprep.mubr.bf16.mxu0 %v2675
        %2925 = vmatmul.mubr.bf16.gmra.mrb[0].mxu0 %v2674
        %v2926 = vpop.f32.mrb[0].mxu0
        %v2927 = vadd.f32 %v2814, %v2926
        %v2928 = vpop.f32.mrb[0].mxu0
        %v2929 = vadd.f32 %v2816, %v2928
        %v2930 = vpop.f32.mrb[0].mxu0
        %v2931 = vadd.f32 %v2818, %v2930
        %v2932 = vpop.f32.mrb[0].mxu0
        %v2933 = vadd.f32 %v2820, %v2932
        %2934 = vmatprep.mubr.bf16.mxu0 %v2680
        %2935 = vmatmul.mubr.bf16.gmra.mrb[0].mxu0 %v2679
        %v2936 = vpop.f32.mrb[0].mxu0
        %v2937 = vadd.f32 %v2824, %v2936
        %v2938 = vpop.f32.mrb[0].mxu0
        %v2939 = vadd.f32 %v2826, %v2938
        %v2940 = vpop.f32.mrb[0].mxu0
        %v2941 = vadd.f32 %v2828, %v2940
        %v2942 = vpop.f32.mrb[0].mxu0
        %v2943 = vadd.f32 %v2830, %v2942
        %2944 = vmatprep.mubr.bf16.mxu0 %v2685
        %2945 = vmatmul.mubr.bf16.gmra.mrb[0].mxu0 %v2684
        %v2946 = vpop.f32.mrb[0].mxu0
        %v2947 = vadd.f32 %v2834, %v2946
        %v2948 = vpop.f32.mrb[0].mxu0
        %v2949 = vadd.f32 %v2836, %v2948
        %v2950 = vpop.f32.mrb[0].mxu0
        %v2951 = vadd.f32 %v2838, %v2950
        %v2952 = vpop.f32.mrb[0].mxu0
        %v2953 = vadd.f32 %v2840, %v2952
        %2954 = vmatprep.mubr.bf16.mxu0 %v2690
        %2955 = vmatmul.mubr.bf16.gmra.mrb[0].mxu0 %v2689
        %v2956 = vpop.f32.mrb[0].mxu0
        %v2957 = vadd.f32 %v2844, %v2956
        %v2958 = vpop.f32.mrb[0].mxu0
        %v2959 = vadd.f32 %v2846, %v2958
        %v2960 = vpop.f32.mrb[0].mxu0
        %v2961 = vadd.f32 %v2848, %v2960
        %v2962 = vpop.f32.mrb[0].mxu0
        %v2963 = vadd.f32 %v2850, %v2962
        %2964 = vmatprep.mubr.bf16.mxu0 %v2695
        %2965 = vmatmul.mubr.bf16.gmra.mrb[0].mxu0 %v2694
        %v2966 = vpop.f32.mrb[0].mxu0
        %v2967 = vadd.f32 %v2854, %v2966
        %v2968 = vpop.f32.mrb[0].mxu0
        %v2969 = vadd.f32 %v2856, %v2968
        %v2970 = vpop.f32.mrb[0].mxu0
        %v2971 = vadd.f32 %v2858, %v2970
        %v2972 = vpop.f32.mrb[0].mxu0
        %v2973 = vadd.f32 %v2860, %v2972
        %2974 = vmatprep.mubr.bf16.mxu0 %v2700
        %2975 = vmatmul.mubr.bf16.gmra.mrb[0].mxu0 %v2699
        %v2976 = vpop.f32.mrb[0].mxu0
        %v2977 = vadd.f32 %v2864, %v2976
        %v2978 = vpop.f32.mrb[0].mxu0
        %v2979 = vadd.f32 %v2866, %v2978
        %v2980 = vpop.f32.mrb[0].mxu0
        %v2981 = vadd.f32 %v2868, %v2980
        %v2982 = vpop.f32.mrb[0].mxu0
        %v2983 = vadd.f32 %v2870, %v2982
        %2984 = vdwg.mxu0
        %2985 = vmatprep.subr.bf16.mxu0 %v2427
        %2986 = vmatpush1.bf16.msra.mxu0 %v2426
        %2987 = vmatprep.subr.bf16.mxu0 %v2430
        %2988 = vmatpush1.bf16.msra.mxu0 %v2429
        %2989 = vmatprep.subr.bf16.mxu0 %v2433
        %2990 = vmatpush1.bf16.msra.mxu0 %v2432
        %2991 = vmatprep.subr.bf16.mxu0 %v2436
        %2992 = vmatpush1.bf16.msra.mxu0 %v2435
        %2993 = vmatprep.subr.bf16.mxu0 0
        %2994 = vmatpush1.bf16.msra.mxu0 0
        %2995 = vmatprep.subr.bf16.mxu0 0
        %2996 = vmatpush1.bf16.msra.mxu0 0
        %2997 = vmatprep.subr.bf16.mxu0 0
        %2998 = vmatpush1.bf16.msra.mxu0 0
        %2999 = vmatprep.subr.bf16.mxu0 0
        %3000 = vmatpush1.bf16.msra.mxu0 0
        %3001 = vmatprep.subr.bf16.mxu0 0
        %3002 = vmatpush1.bf16.msra.mxu0 0
        %3003 = vmatprep.subr.bf16.mxu0 0
        %3004 = vmatpush1.bf16.msra.mxu0 0
        %3005 = vmatprep.subr.bf16.mxu0 0
        %3006 = vmatpush1.bf16.msra.mxu0 0
        %3007 = vmatprep.subr.bf16.mxu0 0
        %3008 = vmatpush1.bf16.msra.mxu0 0
        %3009 = vmatprep.subr.bf16.mxu0 0
        %3010 = vmatpush1.bf16.msra.mxu0 0
        %3011 = vmatprep.subr.bf16.mxu0 0
        %3012 = vmatpush1.bf16.msra.mxu0 0
        %3013 = vmatprep.subr.bf16.mxu0 0
        %3014 = vmatpush1.bf16.msra.mxu0 0
        %3015 = vmatprep.subr.bf16.mxu0 0
        %3016 = vmatpush1.bf16.msra.mxu0 0
        %3017 = vmatprep.mubr.bf16.mxu0 0
        %3018 = vmatmul.mubr.bf16.gmra.mrb[0].mxu0 %v2736
        %v3019 = vpop.f32.mrb[0].mxu0
        %v3020 = vadd.f32 %v2907, %v3019
        %v3021 = vpop.f32.mrb[0].mxu0
        %v3022 = vadd.f32 %v2909, %v3021
        %v3023 = vpop.f32.mrb[0].mxu0
        %v3024 = vadd.f32 %v2911, %v3023
        %v3025 = vpop.f32.mrb[0].mxu0
        %v3026 = vadd.f32 %v2913, %v3025
        %3027 = vmatprep.mubr.bf16.mxu0 0
        %3028 = vmatmul.mubr.bf16.gmra.mrb[0].mxu0 %v2739
        %v3029 = vpop.f32.mrb[0].mxu0
        %v3030 = vadd.f32 %v2917, %v3029
        %v3031 = vpop.f32.mrb[0].mxu0
        %v3032 = vadd.f32 %v2919, %v3031
        %v3033 = vpop.f32.mrb[0].mxu0
        %v3034 = vadd.f32 %v2921, %v3033
        %v3035 = vpop.f32.mrb[0].mxu0
        %v3036 = vadd.f32 %v2923, %v3035
        %3037 = vmatprep.mubr.bf16.mxu0 0
        %3038 = vmatmul.mubr.bf16.gmra.mrb[0].mxu0 %v2742
        %v3039 = vpop.f32.mrb[0].mxu0
        %v3040 = vadd.f32 %v2927, %v3039
        %v3041 = vpop.f32.mrb[0].mxu0
        %v3042 = vadd.f32 %v2929, %v3041
        %v3043 = vpop.f32.mrb[0].mxu0
        %v3044 = vadd.f32 %v2931, %v3043
        %v3045 = vpop.f32.mrb[0].mxu0
        %v3046 = vadd.f32 %v2933, %v3045
        %3047 = vmatprep.mubr.bf16.mxu0 0
        %3048 = vmatmul.mubr.bf16.gmra.mrb[0].mxu0 %v2745
        %v3049 = vpop.f32.mrb[0].mxu0
        %v3050 = vadd.f32 %v2937, %v3049
        %v3051 = vpop.f32.mrb[0].mxu0
        %v3052 = vadd.f32 %v2939, %v3051
        %v3053 = vpop.f32.mrb[0].mxu0
        %v3054 = vadd.f32 %v2941, %v3053
        %v3055 = vpop.f32.mrb[0].mxu0
        %v3056 = vadd.f32 %v2943, %v3055
        %3057 = vmatprep.mubr.bf16.mxu0 0
        %3058 = vmatmul.mubr.bf16.gmra.mrb[0].mxu0 %v2748
        %v3059 = vpop.f32.mrb[0].mxu0
        %v3060 = vadd.f32 %v2947, %v3059
        %v3061 = vpop.f32.mrb[0].mxu0
        %v3062 = vadd.f32 %v2949, %v3061
        %v3063 = vpop.f32.mrb[0].mxu0
        %v3064 = vadd.f32 %v2951, %v3063
        %v3065 = vpop.f32.mrb[0].mxu0
        %v3066 = vadd.f32 %v2953, %v3065
        %3067 = vmatprep.mubr.bf16.mxu0 0
        %3068 = vmatmul.mubr.bf16.gmra.mrb[0].mxu0 %v2751
        %v3069 = vpop.f32.mrb[0].mxu0
        %v3070 = vadd.f32 %v2957, %v3069
        %v3071 = vpop.f32.mrb[0].mxu0
        %v3072 = vadd.f32 %v2959, %v3071
        %v3073 = vpop.f32.mrb[0].mxu0
        %v3074 = vadd.f32 %v2961, %v3073
        %v3075 = vpop.f32.mrb[0].mxu0
        %v3076 = vadd.f32 %v2963, %v3075
        %3077 = vmatprep.mubr.bf16.mxu0 0
        %3078 = vmatmul.mubr.bf16.gmra.mrb[0].mxu0 %v2754
        %v3079 = vpop.f32.mrb[0].mxu0
        %v3080 = vadd.f32 %v2967, %v3079
        %v3081 = vpop.f32.mrb[0].mxu0
        %v3082 = vadd.f32 %v2969, %v3081
        %v3083 = vpop.f32.mrb[0].mxu0
        %v3084 = vadd.f32 %v2971, %v3083
        %v3085 = vpop.f32.mrb[0].mxu0
        %v3086 = vadd.f32 %v2973, %v3085
        %3087 = vmatprep.mubr.bf16.mxu0 0
        %3088 = vmatmul.mubr.bf16.gmra.mrb[0].mxu0 %v2757
        %v3089 = vpop.f32.mrb[0].mxu0
        %v3090 = vadd.f32 %v2977, %v3089
        %v3091 = vpop.f32.mrb[0].mxu0
        %v3092 = vadd.f32 %v2979, %v3091
        %v3093 = vpop.f32.mrb[0].mxu0
        %v3094 = vadd.f32 %v2981, %v3093
        %v3095 = vpop.f32.mrb[0].mxu0
        %v3096 = vadd.f32 %v2983, %v3095
        %3097 = vdwg.mxu0
        %3098 = vmatprep.subr.bf16.mxu0 0
        %3099 = vmatpush1.bf16.msra.mxu0 %v2332
        %3100 = vmatprep.subr.bf16.mxu0 0
        %3101 = vmatpush1.bf16.msra.mxu0 %v2335
        %3102 = vmatprep.subr.bf16.mxu0 0
        %3103 = vmatpush1.bf16.msra.mxu0 %v2338
        %3104 = vmatprep.subr.bf16.mxu0 0
        %3105 = vmatpush1.bf16.msra.mxu0 %v2341
        %3106 = vmatprep.subr.bf16.mxu0 0
        %3107 = vmatpush1.bf16.msra.mxu0 %v2344
        %3108 = vmatprep.subr.bf16.mxu0 0
        %3109 = vmatpush1.bf16.msra.mxu0 %v2347
        %3110 = vmatprep.subr.bf16.mxu0 0
        %3111 = vmatpush1.bf16.msra.mxu0 %v2350
        %3112 = vmatprep.subr.bf16.mxu0 0
        %3113 = vmatpush1.bf16.msra.mxu0 %v2353
        %3114 = vmatprep.subr.bf16.mxu0 0
        %3115 = vmatpush1.bf16.msra.mxu0 %v2356
        %3116 = vmatprep.subr.bf16.mxu0 0
        %3117 = vmatpush1.bf16.msra.mxu0 %v2359
        %3118 = vmatprep.subr.bf16.mxu0 0
        %3119 = vmatpush1.bf16.msra.mxu0 %v2362
        %3120 = vmatprep.subr.bf16.mxu0 0
        %3121 = vmatpush1.bf16.msra.mxu0 %v2365
        %3122 = vmatprep.subr.bf16.mxu0 0
        %3123 = vmatpush1.bf16.msra.mxu0 %v2368
        %3124 = vmatprep.subr.bf16.mxu0 0
        %3125 = vmatpush1.bf16.msra.mxu0 %v2371
        %3126 = vmatprep.subr.bf16.mxu0 0
        %3127 = vmatpush1.bf16.msra.mxu0 %v2374
        %3128 = vmatprep.subr.bf16.mxu0 0
        %3129 = vmatpush1.bf16.msra.mxu0 %v2377
        %3130 = vmatprep.mubr.bf16.mxu0 %v2663
        %3131 = vmatmul.mubr.bf16.gmra.mrb[0].mxu0 %v2662
        %v3132 = vpop.f32.mrb[0].mxu0
        %v3133 = vadd.f32 %v2457, %v3132
        %v3134 = vpop.f32.mrb[0].mxu0
        %v3135 = vpop.f32.mrb[0].mxu0
        %v3136 = vadd.f32 %v2462, %v3135
        %v3137 = vpop.f32.mrb[0].mxu0
        %3138 = vmatprep.mubr.bf16.mxu0 %v2668
        %3139 = vmatmul.mubr.bf16.gmra.mrb[0].mxu0 %v2667
        %v3140 = vpop.f32.mrb[0].mxu0
        %v3141 = vadd.f32 %v2467, %v3140
        %v3142 = vpop.f32.mrb[0].mxu0
        %v3143 = vpop.f32.mrb[0].mxu0
        %v3144 = vadd.f32 %v2472, %v3143
        %v3145 = vpop.f32.mrb[0].mxu0
        %3146 = vmatprep.mubr.bf16.mxu0 %v2673
        %3147 = vmatmul.mubr.bf16.gmra.mrb[0].mxu0 %v2672
        %v3148 = vpop.f32.mrb[0].mxu0
        %v3149 = vadd.f32 %v2477, %v3148
        %v3150 = vpop.f32.mrb[0].mxu0
        %v3151 = vpop.f32.mrb[0].mxu0
        %v3152 = vadd.f32 %v2482, %v3151
        %v3153 = vpop.f32.mrb[0].mxu0
        %3154 = vmatprep.mubr.bf16.mxu0 %v2678
        %3155 = vmatmul.mubr.bf16.gmra.mrb[0].mxu0 %v2677
        %v3156 = vpop.f32.mrb[0].mxu0
        %v3157 = vadd.f32 %v2487, %v3156
        %v3158 = vpop.f32.mrb[0].mxu0
        %v3159 = vpop.f32.mrb[0].mxu0
        %v3160 = vadd.f32 %v2492, %v3159
        %v3161 = vpop.f32.mrb[0].mxu0
        %3162 = vmatprep.mubr.bf16.mxu0 %v2683
        %3163 = vmatmul.mubr.bf16.gmra.mrb[0].mxu0 %v2682
        %v3164 = vpop.f32.mrb[0].mxu0
        %v3165 = vadd.f32 %v2497, %v3164
        %v3166 = vpop.f32.mrb[0].mxu0
        %v3167 = vpop.f32.mrb[0].mxu0
        %v3168 = vadd.f32 %v2502, %v3167
        %v3169 = vpop.f32.mrb[0].mxu0
        %3170 = vmatprep.mubr.bf16.mxu0 %v2688
        %3171 = vmatmul.mubr.bf16.gmra.mrb[0].mxu0 %v2687
        %v3172 = vpop.f32.mrb[0].mxu0
        %v3173 = vadd.f32 %v2507, %v3172
        %v3174 = vpop.f32.mrb[0].mxu0
        %v3175 = vpop.f32.mrb[0].mxu0
        %v3176 = vadd.f32 %v2512, %v3175
        %v3177 = vpop.f32.mrb[0].mxu0
        %3178 = vmatprep.mubr.bf16.mxu0 %v2693
        %3179 = vmatmul.mubr.bf16.gmra.mrb[0].mxu0 %v2692
        %v3180 = vpop.f32.mrb[0].mxu0
        %v3181 = vadd.f32 %v2517, %v3180
        %v3182 = vpop.f32.mrb[0].mxu0
        %v3183 = vpop.f32.mrb[0].mxu0
        %v3184 = vadd.f32 %v2522, %v3183
        %v3185 = vpop.f32.mrb[0].mxu0
        %3186 = vmatprep.mubr.bf16.mxu0 %v2698
        %3187 = vmatmul.mubr.bf16.gmra.mrb[0].mxu0 %v2697
        %v3188 = vpop.f32.mrb[0].mxu0
        %v3189 = vadd.f32 %v2527, %v3188
        %v3190 = vpop.f32.mrb[0].mxu0
        %v3191 = vpop.f32.mrb[0].mxu0
        %v3192 = vadd.f32 %v2532, %v3191
        %v3193 = vpop.f32.mrb[0].mxu0
        %3194 = vdwg.mxu0
        %3195 = vmatprep.subr.bf16.mxu0 0
        %3196 = vmatpush1.bf16.msra.mxu0 %v2380
        %3197 = vmatprep.subr.bf16.mxu0 0
        %3198 = vmatpush1.bf16.msra.mxu0 %v2383
        %3199 = vmatprep.subr.bf16.mxu0 0
        %3200 = vmatpush1.bf16.msra.mxu0 %v2386
        %3201 = vmatprep.subr.bf16.mxu0 0
        %3202 = vmatpush1.bf16.msra.mxu0 %v2389
        %3203 = vmatprep.subr.bf16.mxu0 0
        %3204 = vmatpush1.bf16.msra.mxu0 %v2392
        %3205 = vmatprep.subr.bf16.mxu0 0
        %3206 = vmatpush1.bf16.msra.mxu0 %v2395
        %3207 = vmatprep.subr.bf16.mxu0 0
        %3208 = vmatpush1.bf16.msra.mxu0 %v2398
        %3209 = vmatprep.subr.bf16.mxu0 0
        %3210 = vmatpush1.bf16.msra.mxu0 %v2401
        %3211 = vmatprep.subr.bf16.mxu0 0
        %3212 = vmatpush1.bf16.msra.mxu0 %v2404
        %3213 = vmatprep.subr.bf16.mxu0 0
        %3214 = vmatpush1.bf16.msra.mxu0 %v2407
        %3215 = vmatprep.subr.bf16.mxu0 0
        %3216 = vmatpush1.bf16.msra.mxu0 %v2410
        %3217 = vmatprep.subr.bf16.mxu0 0
        %3218 = vmatpush1.bf16.msra.mxu0 %v2413
        %3219 = vmatprep.subr.bf16.mxu0 0
        %3220 = vmatpush1.bf16.msra.mxu0 %v2416
        %3221 = vmatprep.subr.bf16.mxu0 0
        %3222 = vmatpush1.bf16.msra.mxu0 %v2419
        %3223 = vmatprep.subr.bf16.mxu0 0
        %3224 = vmatpush1.bf16.msra.mxu0 %v2422
        %3225 = vmatprep.subr.bf16.mxu0 0
        %3226 = vmatpush1.bf16.msra.mxu0 %v2425
        %3227 = vmatprep.mubr.bf16.mxu0 %v2665
        %3228 = vmatmul.mubr.bf16.gmra.mrb[0].mxu0 %v2664
        %v3229 = vpop.f32.mrb[0].mxu0
        %v3230 = vadd.f32 %v3133, %v3229
        %v3231 = vpop.f32.mrb[0].mxu0
        %v3232 = vpop.f32.mrb[0].mxu0
        %v3233 = vadd.f32 %v3136, %v3232
        %v3234 = vpop.f32.mrb[0].mxu0
        %3235 = vmatprep.mubr.bf16.mxu0 %v2670
        %3236 = vmatmul.mubr.bf16.gmra.mrb[0].mxu0 %v2669
        %v3237 = vpop.f32.mrb[0].mxu0
        %v3238 = vadd.f32 %v3141, %v3237
        %v3239 = vpop.f32.mrb[0].mxu0
        %v3240 = vpop.f32.mrb[0].mxu0
        %v3241 = vadd.f32 %v3144, %v3240
        %v3242 = vpop.f32.mrb[0].mxu0
        %3243 = vmatprep.mubr.bf16.mxu0 %v2675
        %3244 = vmatmul.mubr.bf16.gmra.mrb[0].mxu0 %v2674
        %v3245 = vpop.f32.mrb[0].mxu0
        %v3246 = vadd.f32 %v3149, %v3245
        %v3247 = vpop.f32.mrb[0].mxu0
        %v3248 = vpop.f32.mrb[0].mxu0
        %v3249 = vadd.f32 %v3152, %v3248
        %v3250 = vpop.f32.mrb[0].mxu0
        %3251 = vmatprep.mubr.bf16.mxu0 %v2680
        %3252 = vmatmul.mubr.bf16.gmra.mrb[0].mxu0 %v2679
        %v3253 = vpop.f32.mrb[0].mxu0
        %v3254 = vadd.f32 %v3157, %v3253
        %v3255 = vpop.f32.mrb[0].mxu0
        %v3256 = vpop.f32.mrb[0].mxu0
        %v3257 = vadd.f32 %v3160, %v3256
        %v3258 = vpop.f32.mrb[0].mxu0
        %3259 = vmatprep.mubr.bf16.mxu0 %v2685
        %3260 = vmatmul.mubr.bf16.gmra.mrb[0].mxu0 %v2684
        %v3261 = vpop.f32.mrb[0].mxu0
        %v3262 = vadd.f32 %v3165, %v3261
        %v3263 = vpop.f32.mrb[0].mxu0
        %v3264 = vpop.f32.mrb[0].mxu0
        %v3265 = vadd.f32 %v3168, %v3264
        %v3266 = vpop.f32.mrb[0].mxu0
        %3267 = vmatprep.mubr.bf16.mxu0 %v2690
        %3268 = vmatmul.mubr.bf16.gmra.mrb[0].mxu0 %v2689
        %v3269 = vpop.f32.mrb[0].mxu0
        %v3270 = vadd.f32 %v3173, %v3269
        %v3271 = vpop.f32.mrb[0].mxu0
        %v3272 = vpop.f32.mrb[0].mxu0
        %v3273 = vadd.f32 %v3176, %v3272
        %v3274 = vpop.f32.mrb[0].mxu0
        %3275 = vmatprep.mubr.bf16.mxu0 %v2695
        %3276 = vmatmul.mubr.bf16.gmra.mrb[0].mxu0 %v2694
        %v3277 = vpop.f32.mrb[0].mxu0
        %v3278 = vadd.f32 %v3181, %v3277
        %v3279 = vpop.f32.mrb[0].mxu0
        %v3280 = vpop.f32.mrb[0].mxu0
        %v3281 = vadd.f32 %v3184, %v3280
        %v3282 = vpop.f32.mrb[0].mxu0
        %3283 = vmatprep.mubr.bf16.mxu0 %v2700
        %3284 = vmatmul.mubr.bf16.gmra.mrb[0].mxu0 %v2699
        %v3285 = vpop.f32.mrb[0].mxu0
        %v3286 = vadd.f32 %v3189, %v3285
        %v3287 = vpop.f32.mrb[0].mxu0
        %v3288 = vpop.f32.mrb[0].mxu0
        %v3289 = vadd.f32 %v3192, %v3288
        %v3290 = vpop.f32.mrb[0].mxu0
        %3291 = vdwg.mxu0
        %3292 = vmatprep.subr.bf16.mxu0 0
        %3293 = vmatpush1.bf16.msra.mxu0 %v2428
        %3294 = vmatprep.subr.bf16.mxu0 0
        %3295 = vmatpush1.bf16.msra.mxu0 %v2431
        %3296 = vmatprep.subr.bf16.mxu0 0
        %3297 = vmatpush1.bf16.msra.mxu0 %v2434
        %3298 = vmatprep.subr.bf16.mxu0 0
        %3299 = vmatpush1.bf16.msra.mxu0 %v2437
        %3300 = vmatprep.subr.bf16.mxu0 0
        %3301 = vmatpush1.bf16.msra.mxu0 0
        %3302 = vmatprep.subr.bf16.mxu0 0
        %3303 = vmatpush1.bf16.msra.mxu0 0
        %3304 = vmatprep.subr.bf16.mxu0 0
        %3305 = vmatpush1.bf16.msra.mxu0 0
        %3306 = vmatprep.subr.bf16.mxu0 0
        %3307 = vmatpush1.bf16.msra.mxu0 0
        %3308 = vmatprep.subr.bf16.mxu0 0
        %3309 = vmatpush1.bf16.msra.mxu0 0
        %3310 = vmatprep.subr.bf16.mxu0 0
        %3311 = vmatpush1.bf16.msra.mxu0 0
        %3312 = vmatprep.subr.bf16.mxu0 0
        %3313 = vmatpush1.bf16.msra.mxu0 0
        %3314 = vmatprep.subr.bf16.mxu0 0
        %3315 = vmatpush1.bf16.msra.mxu0 0
        %3316 = vmatprep.subr.bf16.mxu0 0
        %3317 = vmatpush1.bf16.msra.mxu0 0
        %3318 = vmatprep.subr.bf16.mxu0 0
        %3319 = vmatpush1.bf16.msra.mxu0 0
        %3320 = vmatprep.subr.bf16.mxu0 0
        %3321 = vmatpush1.bf16.msra.mxu0 0
        %3322 = vmatprep.subr.bf16.mxu0 0
        %3323 = vmatpush1.bf16.msra.mxu0 0
        %3324 = vmatprep.mubr.bf16.mxu0 0
        %3325 = vmatmul.mubr.bf16.gmra.mrb[0].mxu0 %v2736
        %v3326 = vpop.f32.mrb[0].mxu0
        %v3327 = vadd.f32 %v3230, %v3326
        %v3328 = vpop.f32.mrb[0].mxu0
        %v3329 = vpop.f32.mrb[0].mxu0
        %v3330 = vadd.f32 %v3233, %v3329
        %v3331 = vpop.f32.mrb[0].mxu0
        %3332 = vmatprep.mubr.bf16.mxu0 0
        %3333 = vmatmul.mubr.bf16.gmra.mrb[0].mxu0 %v2739
        %v3334 = vpop.f32.mrb[0].mxu0
        %v3335 = vadd.f32 %v3238, %v3334
        %v3336 = vpop.f32.mrb[0].mxu0
        %v3337 = vpop.f32.mrb[0].mxu0
        %v3338 = vadd.f32 %v3241, %v3337
        %v3339 = vpop.f32.mrb[0].mxu0
        %3340 = vmatprep.mubr.bf16.mxu0 0
        %3341 = vmatmul.mubr.bf16.gmra.mrb[0].mxu0 %v2742
        %v3342 = vpop.f32.mrb[0].mxu0
        %v3343 = vadd.f32 %v3246, %v3342
        %v3344 = vpop.f32.mrb[0].mxu0
        %v3345 = vpop.f32.mrb[0].mxu0
        %v3346 = vadd.f32 %v3249, %v3345
        %v3347 = vpop.f32.mrb[0].mxu0
        %3348 = vmatprep.mubr.bf16.mxu0 0
        %3349 = vmatmul.mubr.bf16.gmra.mrb[0].mxu0 %v2745
        %v3350 = vpop.f32.mrb[0].mxu0
        %v3351 = vadd.f32 %v3254, %v3350
        %v3352 = vpop.f32.mrb[0].mxu0
        %v3353 = vpop.f32.mrb[0].mxu0
        %v3354 = vadd.f32 %v3257, %v3353
        %v3355 = vpop.f32.mrb[0].mxu0
        %3356 = vmatprep.mubr.bf16.mxu0 0
        %3357 = vmatmul.mubr.bf16.gmra.mrb[0].mxu0 %v2748
        %v3358 = vpop.f32.mrb[0].mxu0
        %v3359 = vadd.f32 %v3262, %v3358
        %v3360 = vpop.f32.mrb[0].mxu0
        %v3361 = vpop.f32.mrb[0].mxu0
        %v3362 = vadd.f32 %v3265, %v3361
        %v3363 = vpop.f32.mrb[0].mxu0
        %3364 = vmatprep.mubr.bf16.mxu0 0
        %3365 = vmatmul.mubr.bf16.gmra.mrb[0].mxu0 %v2751
        %v3366 = vpop.f32.mrb[0].mxu0
        %v3367 = vadd.f32 %v3270, %v3366
        %v3368 = vpop.f32.mrb[0].mxu0
        %v3369 = vpop.f32.mrb[0].mxu0
        %v3370 = vadd.f32 %v3273, %v3369
        %v3371 = vpop.f32.mrb[0].mxu0
        %3372 = vmatprep.mubr.bf16.mxu0 0
        %3373 = vmatmul.mubr.bf16.gmra.mrb[0].mxu0 %v2754
        %v3374 = vpop.f32.mrb[0].mxu0
        %v3375 = vadd.f32 %v3278, %v3374
        %v3376 = vpop.f32.mrb[0].mxu0
        %v3377 = vpop.f32.mrb[0].mxu0
        %v3378 = vadd.f32 %v3281, %v3377
        %v3379 = vpop.f32.mrb[0].mxu0
        %3380 = vmatprep.mubr.bf16.mxu0 0
        %3381 = vmatmul.mubr.bf16.gmra.mrb[0].mxu0 %v2757
        %v3382 = vpop.f32.mrb[0].mxu0
        %v3383 = vadd.f32 %v3286, %v3382
        %v3384 = vpop.f32.mrb[0].mxu0
        %v3385 = vpop.f32.mrb[0].mxu0
        %v3386 = vadd.f32 %v3289, %v3385
        %v3387 = vpop.f32.mrb[0].mxu0
        %3388 = vdwg.mxu0
        %v3389 = vmul.f32 %v3020, 0.5
        %v3390 = vmul.f32 %v3022, 0.5
        %v3391 = vmul.f32 %v3327, 0.5
        %v3392 = vmul.f32 %v3024, 0.5
        %v3393 = vmul.f32 %v3026, 0.5
        %v3394 = vmul.f32 %v3330, 0.5
        %v3395 = vmul.f32 %v3030, 0.5
        %v3396 = vmul.f32 %v3032, 0.5
        %v3397 = vmul.f32 %v3335, 0.5
        %v3398 = vmul.f32 %v3034, 0.5
        %v3399 = vmul.f32 %v3036, 0.5
        %v3400 = vmul.f32 %v3338, 0.5
        %v3401 = vtanh.pop %v3389
        %v3402 = vtanh.pop %v3390
        %v3403 = vtanh.pop %v3391
        %v3404 = vtanh.pop %v3392
        %v3405 = vtanh.pop %v3393
        %v3406 = vtanh.pop %v3394
        %v3407 = vtanh.pop %v3395
        %v3408 = vtanh.pop %v3396
        %v3409 = vtanh.pop %v3397
        %v3410 = vtanh.pop %v3398
        %v3411 = vtanh.pop %v3399
        %v3412 = vtanh.pop %v3400
        %v3413 = vmul.f32 %v3401, 0.5
        %v3414 = vmul.f32 %v3402, 0.5
        %v3415 = vmul.f32 %v3403, 0.5
        %v3416 = vmul.f32 %v3404, 0.5
        %v3417 = vmul.f32 %v3405, 0.5
        %v3418 = vmul.f32 %v3406, 0.5
        %v3419 = vmul.f32 %v3407, 0.5
        %v3420 = vmul.f32 %v3408, 0.5
        %v3421 = vmul.f32 %v3409, 0.5
        %v3422 = vmul.f32 %v3410, 0.5
        %v3423 = vmul.f32 %v3411, 0.5
        %v3424 = vmul.f32 %v3412, 0.5
        %v3425 = vadd.f32 %v3413, 0.5
        %v3426 = vadd.f32 %v3414, 0.5
        %v3427 = vadd.f32 %v3415, 0.5
        %v3428 = vadd.f32 %v3416, 0.5
        %v3429 = vadd.f32 %v3417, 0.5
        %v3430 = vadd.f32 %v3418, 0.5
        %v3431 = vadd.f32 %v3419, 0.5
        %v3432 = vadd.f32 %v3420, 0.5
        %v3433 = vadd.f32 %v3421, 0.5
        %v3434 = vadd.f32 %v3422, 0.5
        %v3435 = vadd.f32 %v3423, 0.5
        %v3436 = vadd.f32 %v3424, 0.5
        %v3437 = vmul.f32 %v3040, 0.5
        %v3438 = vmul.f32 %v3042, 0.5
        %v3439 = vmul.f32 %v3343, 0.5
        %v3440 = vmul.f32 %v3044, 0.5
        %v3441 = vmul.f32 %v3046, 0.5
        %v3442 = vmul.f32 %v3346, 0.5
        %v3443 = vmul.f32 %v3050, 0.5
        %v3444 = vmul.f32 %v3052, 0.5
        %v3445 = vmul.f32 %v3351, 0.5
        %v3446 = vmul.f32 %v3054, 0.5
        %v3447 = vmul.f32 %v3056, 0.5
        %v3448 = vmul.f32 %v3354, 0.5
        %v3449 = vtanh.pop %v3437
        %v3450 = vtanh.pop %v3438
        %v3451 = vtanh.pop %v3439
        %v3452 = vtanh.pop %v3440
        %v3453 = vtanh.pop %v3441
        %v3454 = vtanh.pop %v3442
        %v3455 = vtanh.pop %v3443
        %v3456 = vtanh.pop %v3444
        %v3457 = vtanh.pop %v3445
        %v3458 = vtanh.pop %v3446
        %v3459 = vtanh.pop %v3447
        %v3460 = vtanh.pop %v3448
        %v3461 = vmul.f32 %v3449, 0.5
        %v3462 = vmul.f32 %v3450, 0.5
        %v3463 = vmul.f32 %v3451, 0.5
        %v3464 = vmul.f32 %v3452, 0.5
        %v3465 = vmul.f32 %v3453, 0.5
        %v3466 = vmul.f32 %v3454, 0.5
        %v3467 = vmul.f32 %v3455, 0.5
        %v3468 = vmul.f32 %v3456, 0.5
        %v3469 = vmul.f32 %v3457, 0.5
        %v3470 = vmul.f32 %v3458, 0.5
        %v3471 = vmul.f32 %v3459, 0.5
        %v3472 = vmul.f32 %v3460, 0.5
        %v3473 = vadd.f32 %v3461, 0.5
        %v3474 = vadd.f32 %v3462, 0.5
        %v3475 = vadd.f32 %v3463, 0.5
        %v3476 = vadd.f32 %v3464, 0.5
        %v3477 = vadd.f32 %v3465, 0.5
        %v3478 = vadd.f32 %v3466, 0.5
        %v3479 = vadd.f32 %v3467, 0.5
        %v3480 = vadd.f32 %v3468, 0.5
        %v3481 = vadd.f32 %v3469, 0.5
        %v3482 = vadd.f32 %v3470, 0.5
        %v3483 = vadd.f32 %v3471, 0.5
        %v3484 = vadd.f32 %v3472, 0.5
        %v3485 = vmul.f32 %v3060, 0.5
        %v3486 = vmul.f32 %v3062, 0.5
        %v3487 = vmul.f32 %v3359, 0.5
        %v3488 = vmul.f32 %v3064, 0.5
        %v3489 = vmul.f32 %v3066, 0.5
        %v3490 = vmul.f32 %v3362, 0.5
        %v3491 = vmul.f32 %v3070, 0.5
        %v3492 = vmul.f32 %v3072, 0.5
        %v3493 = vmul.f32 %v3367, 0.5
        %v3494 = vmul.f32 %v3074, 0.5
        %v3495 = vmul.f32 %v3076, 0.5
        %v3496 = vmul.f32 %v3370, 0.5
        %v3497 = vtanh.pop %v3485
        %v3498 = vtanh.pop %v3486
        %v3499 = vtanh.pop %v3487
        %v3500 = vtanh.pop %v3488
        %v3501 = vtanh.pop %v3489
        %v3502 = vtanh.pop %v3490
        %v3503 = vtanh.pop %v3491
        %v3504 = vtanh.pop %v3492
        %v3505 = vtanh.pop %v3493
        %v3506 = vtanh.pop %v3494
        %v3507 = vtanh.pop %v3495
        %v3508 = vtanh.pop %v3496
        %v3509 = vmul.f32 %v3497, 0.5
        %v3510 = vmul.f32 %v3498, 0.5
        %v3511 = vmul.f32 %v3499, 0.5
        %v3512 = vmul.f32 %v3500, 0.5
        %v3513 = vmul.f32 %v3501, 0.5
        %v3514 = vmul.f32 %v3502, 0.5
        %v3515 = vmul.f32 %v3503, 0.5
        %v3516 = vmul.f32 %v3504, 0.5
        %v3517 = vmul.f32 %v3505, 0.5
        %v3518 = vmul.f32 %v3506, 0.5
        %v3519 = vmul.f32 %v3507, 0.5
        %v3520 = vmul.f32 %v3508, 0.5
        %v3521 = vadd.f32 %v3509, 0.5
        %v3522 = vadd.f32 %v3510, 0.5
        %v3523 = vadd.f32 %v3511, 0.5
        %v3524 = vadd.f32 %v3512, 0.5
        %v3525 = vadd.f32 %v3513, 0.5
        %v3526 = vadd.f32 %v3514, 0.5
        %v3527 = vadd.f32 %v3515, 0.5
        %v3528 = vadd.f32 %v3516, 0.5
        %v3529 = vadd.f32 %v3517, 0.5
        %v3530 = vadd.f32 %v3518, 0.5
        %v3531 = vadd.f32 %v3519, 0.5
        %v3532 = vadd.f32 %v3520, 0.5
        %v3533 = vtanh.pop %v3080
        %v3534 = vtanh.pop %v3082
        %v3535 = vtanh.pop %v3375
        %v3536 = vtanh.pop %v3084
        %v3537 = vtanh.pop %v3086
        %v3538 = vtanh.pop %v3378
        %v3539 = vtanh.pop %v3090
        %v3540 = vtanh.pop %v3092
        %v3541 = vtanh.pop %v3383
        %v3542 = vtanh.pop %v3094
        %v3543 = vtanh.pop %v3096
        %v3544 = vtanh.pop %v3386
        %v3545 = vld [vmem:[#allocation4] sm:$0xff]
        %v3546 = vld [vmem:[#allocation4 + $0x8] sm:$0xff]
        %v3547 = vld [vmem:[#allocation4 + $0x10] sm:$0xff]
        %v3548 = vld [vmem:[#allocation4 + $0x18] sm:$0xff]
        %v3549 = vld [vmem:[#allocation4 + $0x20] sm:$0xff]
        %v3550 = vld [vmem:[#allocation4 + $0x28] sm:$0xff]
        %v3551 = vld [vmem:[#allocation4 + $0x30] sm:$0xff]
        %v3552 = vld [vmem:[#allocation4 + $0x38] sm:$0xff]
        %v3553 = vld [vmem:[#allocation4 + $0x40] sm:$0xff]
        %v3554 = vld [vmem:[#allocation4 + $0x48] sm:$0xff]
        %v3555 = vld [vmem:[#allocation4 + $0x50] sm:$0xff]
        %v3556 = vld [vmem:[#allocation4 + $0x58] sm:$0xff]
        %v3557 = vmul.f32 %v3473, %v3545
        %v3558 = vmul.f32 %v3474, %v3546
        %v3559 = vmul.f32 %v3475, %v3547
        %v3560 = vmul.f32 %v3476, %v3548
        %v3561 = vmul.f32 %v3477, %v3549
        %v3562 = vmul.f32 %v3478, %v3550
        %v3563 = vmul.f32 %v3479, %v3551
        %v3564 = vmul.f32 %v3480, %v3552
        %v3565 = vmul.f32 %v3481, %v3553
        %v3566 = vmul.f32 %v3482, %v3554
        %v3567 = vmul.f32 %v3483, %v3555
        %v3568 = vmul.f32 %v3484, %v3556
        %v3569 = vmul.f32 %v3425, %v3533
        %v3570 = vmul.f32 %v3426, %v3534
        %v3571 = vmul.f32 %v3427, %v3535
        %v3572 = vmul.f32 %v3428, %v3536
        %v3573 = vmul.f32 %v3429, %v3537
        %v3574 = vmul.f32 %v3430, %v3538
        %v3575 = vmul.f32 %v3431, %v3539
        %v3576 = vmul.f32 %v3432, %v3540
        %v3577 = vmul.f32 %v3433, %v3541
        %v3578 = vmul.f32 %v3434, %v3542
        %v3579 = vmul.f32 %v3435, %v3543
        %v3580 = vmul.f32 %v3436, %v3544
        %v3581 = vadd.f32 %v3557, %v3569
        %v3582 = vadd.f32 %v3558, %v3570
        %v3583 = vadd.f32 %v3559, %v3571
        %v3584 = vadd.f32 %v3560, %v3572
        %v3585 = vadd.f32 %v3561, %v3573
        %v3586 = vadd.f32 %v3562, %v3574
        %v3587 = vadd.f32 %v3563, %v3575
        %v3588 = vadd.f32 %v3564, %v3576
        %v3589 = vadd.f32 %v3565, %v3577
        %v3590 = vadd.f32 %v3566, %v3578
        %v3591 = vadd.f32 %v3567, %v3579
        %v3592 = vadd.f32 %v3568, %v3580
        %v3593 = vmul.f32 %v3581, %v1816
        %v3594 = vmul.f32 %v3582, %v1820
        %v3595 = vmul.f32 %v3583, %v1824
        %v3596 = vmul.f32 %v3584, %v1816
        %v3597 = vmul.f32 %v3585, %v1820
        %v3598 = vmul.f32 %v3586, %v1824
        %v3599 = vmul.f32 %v3587, %v1816
        %v3600 = vmul.f32 %v3588, %v1820
        %v3601 = vmul.f32 %v3589, %v1824
        %v3602 = vmul.f32 %v3590, %v1816
        %v3603 = vmul.f32 %v3591, %v1820
        %v3604 = vmul.f32 %v3592, %v1824
        %v3605 = vtanh.pop %v3593
        %v3606 = vtanh.pop %v3594
        %v3607 = vtanh.pop %v3595
        %v3608 = vtanh.pop %v3596
        %v3609 = vtanh.pop %v3597
        %v3610 = vtanh.pop %v3598
        %v3611 = vtanh.pop %v3599
        %v3612 = vtanh.pop %v3600
        %v3613 = vtanh.pop %v3601
        %v3614 = vtanh.pop %v3602
        %v3615 = vtanh.pop %v3603
        %v3616 = vtanh.pop %v3604
        %v3617 = vmul.f32 %v3521, %v3605
        %v3618 = vmul.f32 %v3522, %v3606
        %v3619 = vmul.f32 %v3523, %v3607
        %v3620 = vmul.f32 %v3524, %v3608
        %v3621 = vmul.f32 %v3525, %v3609
        %v3622 = vmul.f32 %v3526, %v3610
        %v3623 = vmul.f32 %v3527, %v3611
        %v3624 = vmul.f32 %v3528, %v3612
        %v3625 = vmul.f32 %v3529, %v3613
        %v3626 = vmul.f32 %v3530, %v3614
        %v3627 = vmul.f32 %v3531, %v3615
        %v3628 = vmul.f32 %v3532, %v3616
        %3629 = vst [vmem:[#allocation4] sm:$0xff] %v3593
        %3630 = vst [vmem:[#allocation4 + $0x8] sm:$0xff] %v3594
        %3631 = vst [vmem:[#allocation4 + $0x10] sm:$0xff] %v3595
        %3632 = vst [vmem:[#allocation4 + $0x18] sm:$0xff] %v3596
        %3633 = vst [vmem:[#allocation4 + $0x20] sm:$0xff] %v3597
        %3634 = vst [vmem:[#allocation4 + $0x28] sm:$0xff] %v3598
        %3635 = vst [vmem:[#allocation4 + $0x30] sm:$0xff] %v3599
        %3636 = vst [vmem:[#allocation4 + $0x38] sm:$0xff] %v3600
        %3637 = vst [vmem:[#allocation4 + $0x40] sm:$0xff] %v3601
        %3638 = vst [vmem:[#allocation4 + $0x48] sm:$0xff] %v3602
        %3639 = vst [vmem:[#allocation4 + $0x50] sm:$0xff] %v3603
        %3640 = vst [vmem:[#allocation4 + $0x58] sm:$0xff] %v3604
        %3641 = vrot.lane.b32.xlu0 %v3617, 19
        %v3642 = vpop.permute.xlu0 %3641
        %3643 = vrot.lane.b32.xlu0 %v3620, 19
        %v3644 = vpop.permute.xlu0 %3643
        %3645 = vrot.lane.b32.xlu0 %v3623, 19
        %v3646 = vpop.permute.xlu0 %3645
        %3647 = vrot.lane.b32.xlu0 %v3626, 19
        %v3648 = vpop.permute.xlu0 %3647
        %3649 = vrot.lane.b32.xlu0 %v3618, 19
        %v3650 = vpop.permute.xlu0 %3649
        %3651 = vrot.lane.b32.xlu0 %v3621, 19
        %v3652 = vpop.permute.xlu0 %3651
        %3653 = vrot.lane.b32.xlu0 %v3624, 19
        %v3654 = vpop.permute.xlu0 %3653
        %3655 = vrot.lane.b32.xlu0 %v3627, 19
        %v3656 = vpop.permute.xlu0 %3655
        %3657 = vrot.lane.b32.xlu0 %v3619, 19
        %v3658 = vpop.permute.xlu0 %3657
        %3659 = vrot.lane.b32.xlu0 %v3622, 19
        %v3660 = vpop.permute.xlu0 %3659
        %3661 = vrot.lane.b32.xlu0 %v3625, 19
        %v3662 = vpop.permute.xlu0 %3661
        %3663 = vrot.lane.b32.xlu0 %v3628, 19
        %v3664 = vpop.permute.xlu0 %3663
        %v3665 = vsel %vm1902, %v3650, %v3658
        %v3666 = vsel %vm1902, %v3652, %v3660
        %v3667 = vsel %vm1902, %v3654, %v3662
        %v3668 = vsel %vm1902, %v3656, %v3664
        %v3669 = vsel %vm1902, %v3642, %v3650
        %v3670 = vsel %vm1902, %v3644, %v3652
        %v3671 = vsel %vm1902, %v3646, %v3654
        %v3672 = vsel %vm1902, %v3648, %v3656
        %v3673 = vsel %vm1902, %v3658, %v3642
        %v3674 = vsel %vm1902, %v3660, %v3644
        %v3675 = vsel %vm1902, %v3662, %v3646
        %v3676 = vsel %vm1902, %v3664, %v3648
        %v3677 = vpack.c.bf16 %v3674, %v3673
        %v3678 = vpack.c.bf16 %v3670, %v3669
        %v3679 = vpack.c.bf16 %v3666, %v3665
        %v3680 = vpack.c.bf16 %v3676, %v3675
        %v3681 = vpack.c.bf16 %v3672, %v3671
        %v3682 = vpack.c.bf16 %v3668, %v3667
        %3683 = vst [vmem:[#allocation2 + $0x1b0] sm:$0xff] %v3677
        %3684 = vst [vmem:[#allocation2 + $0x1b8] sm:$0xff] %v3678
        %3685 = vst [vmem:[#allocation2 + $0x1c0] sm:$0xff] %v3679
        %3686 = vst [vmem:[#allocation2 + $0x1c8] sm:$0xff] %v3680
        %3687 = vst [vmem:[#allocation2 + $0x1d0] sm:$0xff] %v3681
        %3688 = vst [vmem:[#allocation2 + $0x1d8] sm:$0xff] %v3682
        %3689 = vrot.lane.b32.xlu0 %v3617, 18
        %v3690 = vpop.permute.xlu0 %3689
        %3691 = vrot.lane.b32.xlu0 %v3620, 18
        %v3692 = vpop.permute.xlu0 %3691
        %3693 = vrot.lane.b32.xlu0 %v3623, 18
        %v3694 = vpop.permute.xlu0 %3693
        %3695 = vrot.lane.b32.xlu0 %v3626, 18
        %v3696 = vpop.permute.xlu0 %3695
        %3697 = vrot.lane.b32.xlu0 %v3618, 18
        %v3698 = vpop.permute.xlu0 %3697
        %3699 = vrot.lane.b32.xlu0 %v3621, 18
        %v3700 = vpop.permute.xlu0 %3699
        %3701 = vrot.lane.b32.xlu0 %v3624, 18
        %v3702 = vpop.permute.xlu0 %3701
        %3703 = vrot.lane.b32.xlu0 %v3627, 18
        %v3704 = vpop.permute.xlu0 %3703
        %3705 = vrot.lane.b32.xlu0 %v3619, 18
        %v3706 = vpop.permute.xlu0 %3705
        %3707 = vrot.lane.b32.xlu0 %v3622, 18
        %v3708 = vpop.permute.xlu0 %3707
        %3709 = vrot.lane.b32.xlu0 %v3625, 18
        %v3710 = vpop.permute.xlu0 %3709
        %3711 = vrot.lane.b32.xlu0 %v3628, 18
        %v3712 = vpop.permute.xlu0 %3711
        %v3713 = vsel %vm1951, %v3698, %v3706
        %v3714 = vsel %vm1951, %v3700, %v3708
        %v3715 = vsel %vm1951, %v3702, %v3710
        %v3716 = vsel %vm1951, %v3704, %v3712
        %v3717 = vsel %vm1951, %v3690, %v3698
        %v3718 = vsel %vm1951, %v3692, %v3700
        %v3719 = vsel %vm1951, %v3694, %v3702
        %v3720 = vsel %vm1951, %v3696, %v3704
        %v3721 = vsel %vm1951, %v3706, %v3690
        %v3722 = vsel %vm1951, %v3708, %v3692
        %v3723 = vsel %vm1951, %v3710, %v3694
        %v3724 = vsel %vm1951, %v3712, %v3696
        %v3725 = vpack.c.bf16 %v3722, %v3721
        %v3726 = vpack.c.bf16 %v3718, %v3717
        %v3727 = vpack.c.bf16 %v3714, %v3713
        %v3728 = vpack.c.bf16 %v3724, %v3723
        %v3729 = vpack.c.bf16 %v3720, %v3719
        %v3730 = vpack.c.bf16 %v3716, %v3715
        %3731 = vst [vmem:[#allocation2 + $0x1e0] sm:$0xff] %v3725
        %3732 = vst [vmem:[#allocation2 + $0x1e8] sm:$0xff] %v3726
        %3733 = vst [vmem:[#allocation2 + $0x1f0] sm:$0xff] %v3727
        %3734 = vst [vmem:[#allocation2 + $0x1f8] sm:$0xff] %v3728
        %3735 = vst [vmem:[#allocation2 + $0x200] sm:$0xff] %v3729
        %3736 = vst [vmem:[#allocation2 + $0x208] sm:$0xff] %v3730
        %3737 = vrot.lane.b32.xlu0 %v3617, 17
        %v3738 = vpop.permute.xlu0 %3737
        %3739 = vrot.lane.b32.xlu0 %v3620, 17
        %v3740 = vpop.permute.xlu0 %3739
        %3741 = vrot.lane.b32.xlu0 %v3623, 17
        %v3742 = vpop.permute.xlu0 %3741
        %3743 = vrot.lane.b32.xlu0 %v3626, 17
        %v3744 = vpop.permute.xlu0 %3743
        %3745 = vrot.lane.b32.xlu0 %v3618, 17
        %v3746 = vpop.permute.xlu0 %3745
        %3747 = vrot.lane.b32.xlu0 %v3621, 17
        %v3748 = vpop.permute.xlu0 %3747
        %3749 = vrot.lane.b32.xlu0 %v3624, 17
        %v3750 = vpop.permute.xlu0 %3749
        %3751 = vrot.lane.b32.xlu0 %v3627, 17
        %v3752 = vpop.permute.xlu0 %3751
        %3753 = vrot.lane.b32.xlu0 %v3619, 17
        %v3754 = vpop.permute.xlu0 %3753
        %3755 = vrot.lane.b32.xlu0 %v3622, 17
        %v3756 = vpop.permute.xlu0 %3755
        %3757 = vrot.lane.b32.xlu0 %v3625, 17
        %v3758 = vpop.permute.xlu0 %3757
        %3759 = vrot.lane.b32.xlu0 %v3628, 17
        %v3760 = vpop.permute.xlu0 %3759
        %v3761 = vsel %vm2000, %v3746, %v3754
        %v3762 = vsel %vm2000, %v3748, %v3756
        %v3763 = vsel %vm2000, %v3750, %v3758
        %v3764 = vsel %vm2000, %v3752, %v3760
        %v3765 = vsel %vm2000, %v3738, %v3746
        %v3766 = vsel %vm2000, %v3740, %v3748
        %v3767 = vsel %vm2000, %v3742, %v3750
        %v3768 = vsel %vm2000, %v3744, %v3752
        %v3769 = vsel %vm2000, %v3754, %v3738
        %v3770 = vsel %vm2000, %v3756, %v3740
        %v3771 = vsel %vm2000, %v3758, %v3742
        %v3772 = vsel %vm2000, %v3760, %v3744
        %v3773 = vpack.c.bf16 %v3770, %v3769
        %v3774 = vpack.c.bf16 %v3766, %v3765
        %v3775 = vpack.c.bf16 %v3762, %v3761
        %v3776 = vpack.c.bf16 %v3772, %v3771
        %v3777 = vpack.c.bf16 %v3768, %v3767
        %v3778 = vpack.c.bf16 %v3764, %v3763
        %3779 = vst [vmem:[#allocation2 + $0x210] sm:$0xff] %v3773
        %3780 = vst [vmem:[#allocation2 + $0x218] sm:$0xff] %v3774
        %3781 = vst [vmem:[#allocation2 + $0x220] sm:$0xff] %v3775
        %3782 = vst [vmem:[#allocation2 + $0x228] sm:$0xff] %v3776
        %3783 = vst [vmem:[#allocation2 + $0x230] sm:$0xff] %v3777
        %3784 = vst [vmem:[#allocation2 + $0x238] sm:$0xff] %v3778
        %3785 = vrot.lane.b32.xlu0 %v3617, 1
        %v3786 = vpop.permute.xlu0 %3785
        %3787 = vrot.lane.b32.xlu0 %v3620, 1
        %v3788 = vpop.permute.xlu0 %3787
        %3789 = vrot.lane.b32.xlu0 %v3623, 1
        %v3790 = vpop.permute.xlu0 %3789
        %3791 = vrot.lane.b32.xlu0 %v3626, 1
        %v3792 = vpop.permute.xlu0 %3791
        %3793 = vrot.lane.b32.xlu0 %v3618, 1
        %v3794 = vpop.permute.xlu0 %3793
        %3795 = vrot.lane.b32.xlu0 %v3621, 1
        %v3796 = vpop.permute.xlu0 %3795
        %3797 = vrot.lane.b32.xlu0 %v3624, 1
        %v3798 = vpop.permute.xlu0 %3797
        %3799 = vrot.lane.b32.xlu0 %v3627, 1
        %v3800 = vpop.permute.xlu0 %3799
        %3801 = vrot.lane.b32.xlu0 %v3619, 1
        %v3802 = vpop.permute.xlu0 %3801
        %3803 = vrot.lane.b32.xlu0 %v3622, 1
        %v3804 = vpop.permute.xlu0 %3803
        %3805 = vrot.lane.b32.xlu0 %v3625, 1
        %v3806 = vpop.permute.xlu0 %3805
        %3807 = vrot.lane.b32.xlu0 %v3628, 1
        %v3808 = vpop.permute.xlu0 %3807
        %v3809 = vsel %vm2049, %v3794, %v3802
        %v3810 = vsel %vm2049, %v3796, %v3804
        %v3811 = vsel %vm2049, %v3798, %v3806
        %v3812 = vsel %vm2049, %v3800, %v3808
        %v3813 = vsel %vm2049, %v3786, %v3794
        %v3814 = vsel %vm2049, %v3788, %v3796
        %v3815 = vsel %vm2049, %v3790, %v3798
        %v3816 = vsel %vm2049, %v3792, %v3800
        %v3817 = vsel %vm2049, %v3802, %v3786
        %v3818 = vsel %vm2049, %v3804, %v3788
        %v3819 = vsel %vm2049, %v3806, %v3790
        %v3820 = vsel %vm2049, %v3808, %v3792
        %v3821 = vpack.c.bf16 %v3818, %v3817
        %v3822 = vpack.c.bf16 %v3814, %v3813
        %v3823 = vpack.c.bf16 %v3810, %v3809
        %v3824 = vpack.c.bf16 %v3820, %v3819
        %v3825 = vpack.c.bf16 %v3816, %v3815
        %v3826 = vpack.c.bf16 %v3812, %v3811
        %3827 = vst [vmem:[#allocation2 + $0x240] sm:$0xff] %v3821
        %3828 = vst [vmem:[#allocation2 + $0x248] sm:$0xff] %v3822
        %3829 = vst [vmem:[#allocation2 + $0x250] sm:$0xff] %v3823
        %3830 = vst [vmem:[#allocation2 + $0x258] sm:$0xff] %v3824
        %3831 = vst [vmem:[#allocation2 + $0x260] sm:$0xff] %v3825
        %3832 = vst [vmem:[#allocation2 + $0x268] sm:$0xff] %v3826
        %v3833 = vpack.c.bf16 %v3620, %v3617
        %v3834 = vpack.c.bf16 %v3621, %v3618
        %v3835 = vpack.c.bf16 %v3622, %v3619
        %v3836 = vpack.c.bf16 %v3626, %v3623
        %v3837 = vpack.c.bf16 %v3627, %v3624
        %v3838 = vpack.c.bf16 %v3628, %v3625
        %3839 = vst [vmem:[#allocation2 + $0x270] sm:$0xff] %v3833
        %3840 = vst [vmem:[#allocation2 + $0x278] sm:$0xff] %v3834
        %3841 = vst [vmem:[#allocation2 + $0x280] sm:$0xff] %v3835
        %3842 = vst [vmem:[#allocation2 + $0x288] sm:$0xff] %v3836
        %3843 = vst [vmem:[#allocation2 + $0x290] sm:$0xff] %v3837
        %3844 = vst [vmem:[#allocation2 + $0x298] sm:$0xff] %v3838
        %3845 = vrot.lane.b32.xlu0 %v3617, 127
        %v3846 = vpop.permute.xlu0 %3845
        %3847 = vrot.lane.b32.xlu0 %v3620, 127
        %v3848 = vpop.permute.xlu0 %3847
        %3849 = vrot.lane.b32.xlu0 %v3623, 127
        %v3850 = vpop.permute.xlu0 %3849
        %3851 = vrot.lane.b32.xlu0 %v3626, 127
        %v3852 = vpop.permute.xlu0 %3851
        %3853 = vrot.lane.b32.xlu0 %v3618, 127
        %v3854 = vpop.permute.xlu0 %3853
        %3855 = vrot.lane.b32.xlu0 %v3621, 127
        %v3856 = vpop.permute.xlu0 %3855
        %3857 = vrot.lane.b32.xlu0 %v3624, 127
        %v3858 = vpop.permute.xlu0 %3857
        %3859 = vrot.lane.b32.xlu0 %v3627, 127
        %v3860 = vpop.permute.xlu0 %3859
        %3861 = vrot.lane.b32.xlu0 %v3619, 127
        %v3862 = vpop.permute.xlu0 %3861
        %3863 = vrot.lane.b32.xlu0 %v3622, 127
        %v3864 = vpop.permute.xlu0 %3863
        %3865 = vrot.lane.b32.xlu0 %v3625, 127
        %v3866 = vpop.permute.xlu0 %3865
        %3867 = vrot.lane.b32.xlu0 %v3628, 127
        %v3868 = vpop.permute.xlu0 %3867
        %v3869 = vsel %vm2110, %v3854, %v3862
        %v3870 = vsel %vm2110, %v3856, %v3864
        %v3871 = vsel %vm2110, %v3858, %v3866
        %v3872 = vsel %vm2110, %v3860, %v3868
        %v3873 = vsel %vm2110, %v3846, %v3854
        %v3874 = vsel %vm2110, %v3848, %v3856
        %v3875 = vsel %vm2110, %v3850, %v3858
        %v3876 = vsel %vm2110, %v3852, %v3860
        %v3877 = vsel %vm2110, %v3862, %v3846
        %v3878 = vsel %vm2110, %v3864, %v3848
        %v3879 = vsel %vm2110, %v3866, %v3850
        %v3880 = vsel %vm2110, %v3868, %v3852
        %v3881 = vpack.c.bf16 %v3874, %v3873
        %v3882 = vpack.c.bf16 %v3870, %v3869
        %v3883 = vpack.c.bf16 %v3878, %v3877
        %v3884 = vpack.c.bf16 %v3876, %v3875
        %v3885 = vpack.c.bf16 %v3872, %v3871
        %v3886 = vpack.c.bf16 %v3880, %v3879
        %3887 = vst [vmem:[#allocation2 + $0x2a0] sm:$0xff] %v3881
        %3888 = vst [vmem:[#allocation2 + $0x2a8] sm:$0xff] %v3882
        %3889 = vst [vmem:[#allocation2 + $0x2b0] sm:$0xff] %v3883
        %3890 = vst [vmem:[#allocation2 + $0x2b8] sm:$0xff] %v3884
        %3891 = vst [vmem:[#allocation2 + $0x2c0] sm:$0xff] %v3885
        %3892 = vst [vmem:[#allocation2 + $0x2c8] sm:$0xff] %v3886
        %3893 = vrot.lane.b32.xlu0 %v3617, 111
        %v3894 = vpop.permute.xlu0 %3893
        %3895 = vrot.lane.b32.xlu0 %v3620, 111
        %v3896 = vpop.permute.xlu0 %3895
        %3897 = vrot.lane.b32.xlu0 %v3623, 111
        %v3898 = vpop.permute.xlu0 %3897
        %3899 = vrot.lane.b32.xlu0 %v3626, 111
        %v3900 = vpop.permute.xlu0 %3899
        %3901 = vrot.lane.b32.xlu0 %v3618, 111
        %v3902 = vpop.permute.xlu0 %3901
        %3903 = vrot.lane.b32.xlu0 %v3621, 111
        %v3904 = vpop.permute.xlu0 %3903
        %3905 = vrot.lane.b32.xlu0 %v3624, 111
        %v3906 = vpop.permute.xlu0 %3905
        %3907 = vrot.lane.b32.xlu0 %v3627, 111
        %v3908 = vpop.permute.xlu0 %3907
        %3909 = vrot.lane.b32.xlu0 %v3619, 111
        %v3910 = vpop.permute.xlu0 %3909
        %3911 = vrot.lane.b32.xlu0 %v3622, 111
        %v3912 = vpop.permute.xlu0 %3911
        %3913 = vrot.lane.b32.xlu0 %v3625, 111
        %v3914 = vpop.permute.xlu0 %3913
        %3915 = vrot.lane.b32.xlu0 %v3628, 111
        %v3916 = vpop.permute.xlu0 %3915
        %v3917 = vsel %vm2159, %v3902, %v3910
        %v3918 = vsel %vm2159, %v3904, %v3912
        %v3919 = vsel %vm2159, %v3906, %v3914
        %v3920 = vsel %vm2159, %v3908, %v3916
        %v3921 = vsel %vm2159, %v3894, %v3902
        %v3922 = vsel %vm2159, %v3896, %v3904
        %v3923 = vsel %vm2159, %v3898, %v3906
        %v3924 = vsel %vm2159, %v3900, %v3908
        %v3925 = vsel %vm2159, %v3910, %v3894
        %v3926 = vsel %vm2159, %v3912, %v3896
        %v3927 = vsel %vm2159, %v3914, %v3898
        %v3928 = vsel %vm2159, %v3916, %v3900
        %v3929 = vpack.c.bf16 %v3922, %v3921
        %v3930 = vpack.c.bf16 %v3918, %v3917
        %v3931 = vpack.c.bf16 %v3926, %v3925
        %v3932 = vpack.c.bf16 %v3924, %v3923
        %v3933 = vpack.c.bf16 %v3920, %v3919
        %v3934 = vpack.c.bf16 %v3928, %v3927
        %3935 = vst [vmem:[#allocation2 + $0x2d0] sm:$0xff] %v3929
        %3936 = vst [vmem:[#allocation2 + $0x2d8] sm:$0xff] %v3930
        %3937 = vst [vmem:[#allocation2 + $0x2e0] sm:$0xff] %v3931
        %3938 = vst [vmem:[#allocation2 + $0x2e8] sm:$0xff] %v3932
        %3939 = vst [vmem:[#allocation2 + $0x2f0] sm:$0xff] %v3933
        %3940 = vst [vmem:[#allocation2 + $0x2f8] sm:$0xff] %v3934
        %3941 = vrot.lane.b32.xlu0 %v3617, 110
        %v3942 = vpop.permute.xlu0 %3941
        %3943 = vrot.lane.b32.xlu0 %v3620, 110
        %v3944 = vpop.permute.xlu0 %3943
        %3945 = vrot.lane.b32.xlu0 %v3623, 110
        %v3946 = vpop.permute.xlu0 %3945
        %3947 = vrot.lane.b32.xlu0 %v3626, 110
        %v3948 = vpop.permute.xlu0 %3947
        %3949 = vrot.lane.b32.xlu0 %v3618, 110
        %v3950 = vpop.permute.xlu0 %3949
        %3951 = vrot.lane.b32.xlu0 %v3621, 110
        %v3952 = vpop.permute.xlu0 %3951
        %3953 = vrot.lane.b32.xlu0 %v3624, 110
        %v3954 = vpop.permute.xlu0 %3953
        %3955 = vrot.lane.b32.xlu0 %v3627, 110
        %v3956 = vpop.permute.xlu0 %3955
        %3957 = vrot.lane.b32.xlu0 %v3619, 110
        %v3958 = vpop.permute.xlu0 %3957
        %3959 = vrot.lane.b32.xlu0 %v3622, 110
        %v3960 = vpop.permute.xlu0 %3959
        %3961 = vrot.lane.b32.xlu0 %v3625, 110
        %v3962 = vpop.permute.xlu0 %3961
        %3963 = vrot.lane.b32.xlu0 %v3628, 110
        %v3964 = vpop.permute.xlu0 %3963
        %v3965 = vsel %vm2208, %v3950, %v3958
        %v3966 = vsel %vm2208, %v3952, %v3960
        %v3967 = vsel %vm2208, %v3954, %v3962
        %v3968 = vsel %vm2208, %v3956, %v3964
        %v3969 = vsel %vm2208, %v3942, %v3950
        %v3970 = vsel %vm2208, %v3944, %v3952
        %v3971 = vsel %vm2208, %v3946, %v3954
        %v3972 = vsel %vm2208, %v3948, %v3956
        %v3973 = vsel %vm2208, %v3958, %v3942
        %v3974 = vsel %vm2208, %v3960, %v3944
        %v3975 = vsel %vm2208, %v3962, %v3946
        %v3976 = vsel %vm2208, %v3964, %v3948
        %v3977 = vpack.c.bf16 %v3970, %v3969
        %v3978 = vpack.c.bf16 %v3966, %v3965
        %v3979 = vpack.c.bf16 %v3974, %v3973
        %v3980 = vpack.c.bf16 %v3972, %v3971
        %v3981 = vpack.c.bf16 %v3968, %v3967
        %v3982 = vpack.c.bf16 %v3976, %v3975
        %3983 = vst [vmem:[#allocation2 + $0x300] sm:$0xff] %v3977
        %3984 = vst [vmem:[#allocation2 + $0x308] sm:$0xff] %v3978
        %3985 = vst [vmem:[#allocation2 + $0x310] sm:$0xff] %v3979
        %3986 = vst [vmem:[#allocation2 + $0x318] sm:$0xff] %v3980
        %3987 = vst [vmem:[#allocation2 + $0x320] sm:$0xff] %v3981
        %3988 = vst [vmem:[#allocation2 + $0x328] sm:$0xff] %v3982
        %3989 = vrot.lane.b32.xlu0 %v3617, 109
        %v3990 = vpop.permute.xlu0 %3989
        %3991 = vrot.lane.b32.xlu0 %v3620, 109
        %v3992 = vpop.permute.xlu0 %3991
        %3993 = vrot.lane.b32.xlu0 %v3623, 109
        %v3994 = vpop.permute.xlu0 %3993
        %3995 = vrot.lane.b32.xlu0 %v3626, 109
        %v3996 = vpop.permute.xlu0 %3995
        %3997 = vrot.lane.b32.xlu0 %v3618, 109
        %v3998 = vpop.permute.xlu0 %3997
        %3999 = vrot.lane.b32.xlu0 %v3621, 109
        %v4000 = vpop.permute.xlu0 %3999
        %4001 = vrot.lane.b32.xlu0 %v3624, 109
        %v4002 = vpop.permute.xlu0 %4001
        %4003 = vrot.lane.b32.xlu0 %v3627, 109
        %v4004 = vpop.permute.xlu0 %4003
        %4005 = vrot.lane.b32.xlu0 %v3619, 109
        %v4006 = vpop.permute.xlu0 %4005
        %4007 = vrot.lane.b32.xlu0 %v3622, 109
        %v4008 = vpop.permute.xlu0 %4007
        %4009 = vrot.lane.b32.xlu0 %v3625, 109
        %v4010 = vpop.permute.xlu0 %4009
        %4011 = vrot.lane.b32.xlu0 %v3628, 109
        %v4012 = vpop.permute.xlu0 %4011
        %v4013 = vsel %vm2257, %v3998, %v4006
        %v4014 = vsel %vm2257, %v4000, %v4008
        %v4015 = vsel %vm2257, %v4002, %v4010
        %v4016 = vsel %vm2257, %v4004, %v4012
        %v4017 = vsel %vm2257, %v3990, %v3998
        %v4018 = vsel %vm2257, %v3992, %v4000
        %v4019 = vsel %vm2257, %v3994, %v4002
        %v4020 = vsel %vm2257, %v3996, %v4004
        %v4021 = vsel %vm2257, %v4006, %v3990
        %v4022 = vsel %vm2257, %v4008, %v3992
        %v4023 = vsel %vm2257, %v4010, %v3994
        %v4024 = vsel %vm2257, %v4012, %v3996
        %v4025 = vpack.c.bf16 %v4018, %v4017
        %v4026 = vpack.c.bf16 %v4014, %v4013
        %v4027 = vpack.c.bf16 %v4022, %v4021
        %v4028 = vpack.c.bf16 %v4020, %v4019
        %v4029 = vpack.c.bf16 %v4016, %v4015
        %v4030 = vpack.c.bf16 %v4024, %v4023
        %4031 = vst [vmem:[#allocation2 + $0x330] sm:$0xff] %v4025
        %4032 = vst [vmem:[#allocation2 + $0x338] sm:$0xff] %v4026
        %4033 = vst [vmem:[#allocation2 + $0x340] sm:$0xff] %v4027
        %4034 = vst [vmem:[#allocation2 + $0x348] sm:$0xff] %v4028
        %4035 = vst [vmem:[#allocation2 + $0x350] sm:$0xff] %v4029
        %4036 = vst [vmem:[#allocation2 + $0x358] sm:$0xff] %v4030
        %s4037 = smul.u32 %s454, 12
        %s4038 = smul.addr %s4037, 8
        %s4039 = scalar_lea.vmem %s313, %s4038
        %4040 = vst [vmem:[%s4039] sm:$0xff] %v3617
        %4041 = vst [vmem:[%s4039 + $0x8] sm:$0xff] %v3618
        %4042 = vst [vmem:[%s4039 + $0x10] sm:$0xff] %v3619
        %4043 = vst [vmem:[%s4039 + $0x18] sm:$0xff] %v3620
        %4044 = vst [vmem:[%s4039 + $0x20] sm:$0xff] %v3621
        %4045 = vst [vmem:[%s4039 + $0x28] sm:$0xff] %v3622
        %4046 = vst [vmem:[%s4039 + $0x30] sm:$0xff] %v3623
        %4047 = vst [vmem:[%s4039 + $0x38] sm:$0xff] %v3624
        %4048 = vst [vmem:[%s4039 + $0x40] sm:$0xff] %v3625
        %4049 = vst [vmem:[%s4039 + $0x48] sm:$0xff] %v3626
        %4050 = vst [vmem:[%s4039 + $0x50] sm:$0xff] %v3627
        %4051 = vst [vmem:[%s4039 + $0x58] sm:$0xff] %v3628
      $region53: #{convlstm2d_forward.1} parent=47 // loop_footer
        %s458 = sadd.s32 1, %s454
      $region54: #{convlstm2d_forward.1} parent=47 // loop_footer_branch
        %453 = sbr.rel target = $region50
      $region55: #{convlstm2d_forward.1} parent=47 // loop_exit
        _
      %v4052 = vld [vmem:[#allocation4] sm:$0xff]
      %v4053 = vld [vmem:[#allocation4 + $0x8] sm:$0xff]
      %v4054 = vld [vmem:[#allocation4 + $0x10] sm:$0xff]
      %v4055 = vld [vmem:[#allocation4 + $0x18] sm:$0xff]
      %v4056 = vld [vmem:[#allocation4 + $0x20] sm:$0xff]
      %v4057 = vld [vmem:[#allocation4 + $0x28] sm:$0xff]
      %v4058 = vld [vmem:[#allocation4 + $0x30] sm:$0xff]
      %v4059 = vld [vmem:[#allocation4 + $0x38] sm:$0xff]
      %v4060 = vld [vmem:[#allocation4 + $0x40] sm:$0xff]
      %v4061 = vld [vmem:[#allocation4 + $0x48] sm:$0xff]
      %v4062 = vld [vmem:[#allocation4 + $0x50] sm:$0xff]
      %v4063 = vld [vmem:[#allocation4 + $0x58] sm:$0xff]
      %4064 = vst [vmem:[%s318] sm:$0xff] %v4052
      %4065 = vst [vmem:[%s318 + $0x8] sm:$0xff] %v4053
      %4066 = vst [vmem:[%s318 + $0x10] sm:$0xff] %v4054
      %4067 = vst [vmem:[%s318 + $0x18] sm:$0xff] %v4055
      %4068 = vst [vmem:[%s318 + $0x20] sm:$0xff] %v4056
      %4069 = vst [vmem:[%s318 + $0x28] sm:$0xff] %v4057
      %4070 = vst [vmem:[%s318 + $0x30] sm:$0xff] %v4058
      %4071 = vst [vmem:[%s318 + $0x38] sm:$0xff] %v4059
      %4072 = vst [vmem:[%s318 + $0x40] sm:$0xff] %v4060
      %4073 = vst [vmem:[%s318 + $0x48] sm:$0xff] %v4061
      %4074 = vst [vmem:[%s318 + $0x50] sm:$0xff] %v4062
      %4075 = vst [vmem:[%s318 + $0x58] sm:$0xff] %v4063
      %p4076 = scmp.lt.s32.totalorder %s20, 1
      %s4077 = scalar_select %p4076, %s20, 1
      %s4078 = smul.addr %s4077, 96
      %s4079 = smul.addr %s4078, 8
      %s4080 = scalar_lea.vmem %s7, %s4079
      %p4081 = scmp.lt.s32.totalorder %s20, 1
      %s4082 = scalar_select %p4081, %s20, 1
      %s4083 = smul.addr %s4082, 12
      %s4084 = smul.addr %s4083, 8
      %s4085 = scalar_lea.vmem %s8, %s4084
      // Predicated region
      $region56: #{convlstm2d_forward.1} parent=47 // pred_check
        %p4086 = pneg %p190
      $region57: #{convlstm2d_forward.1} parent=47 // pred_check_branch
        %4088 = sbr.rel (%p4086) target = $region59
      $region58: #{convlstm2d_forward.1} parent=47 // pred_region
        _
      $region59: #{convlstm2d_forward.1} parent=47 // pred_fallthru
        _
      // Predicated region
      $region60: #{convlstm2d_forward.1} parent=47 // pred_check
        %p4089 = pneg %p216
      $region61: #{convlstm2d_forward.1} parent=47 // pred_check_branch
        %4091 = sbr.rel (%p4089) target = $region63
      $region62: #{convlstm2d_forward.1} parent=47 // pred_region
        _
      $region63: #{convlstm2d_forward.1} parent=47 // pred_fallthru
        _
    $region48: #{convlstm2d_forward.1} parent=5 // pred_fallthru
      _
    %p4092 = scmp.le.s32.totalorder 2, %s15
    // Predicated region
    $region64: #{convlstm2d_forward.1} parent=5 // pred_check
      %p4093 = pneg %p4092
    $region65: #{convlstm2d_forward.1} parent=5 // pred_check_branch
      %4095 = sbr.rel (%p4093) target = $region67
    $region66: #{convlstm2d_forward.1} parent=5 // pred_region
      %s4096 = ssub.s32 %s15, 2
      // Predicated region
      $region68: #{convlstm2d_forward.1} parent=66 // pred_check
        %p4097 = pneg %p196
      $region69: #{convlstm2d_forward.1} parent=66 // pred_check_branch
        %4099 = sbr.rel (%p4097) target = $region71
      $region70: #{convlstm2d_forward.1} parent=66 // pred_region
        %p4100 = scmp.lt.s32.totalorder %s21, 1
        %s4101 = scalar_select %p4100, %s21, 1
        %s4102 = smul.addr %s4101, 96
        %s4103 = smul.addr %s4102, 8
        %s4104 = scalar_lea.vmem %s7, %s4103
      $region71: #{convlstm2d_forward.1} parent=66 // pred_fallthru
        _
      // Predicated region
      $region72: #{convlstm2d_forward.1} parent=66 // pred_check
        %p4105 = pneg %p222
      $region73: #{convlstm2d_forward.1} parent=66 // pred_check_branch
        %4107 = sbr.rel (%p4105) target = $region75
      $region74: #{convlstm2d_forward.1} parent=66 // pred_region
        %p4108 = scmp.lt.s32.totalorder %s21, 1
        %s4109 = scalar_select %p4108, %s21, 1
        %s4110 = smul.addr %s4109, 12
        %s4111 = smul.addr %s4110, 8
        %s4112 = scalar_lea.vmem %s8, %s4111
      $region75: #{convlstm2d_forward.1} parent=66 // pred_fallthru
        _
    $region67: #{convlstm2d_forward.1} parent=5 // pred_fallthru
      _
  $region6: #{convlstm2d_forward.1} parent=0 // loop_footer
    %s19 = sadd.s32 1, %s15
  $region7: #{convlstm2d_forward.1} parent=0 // loop_footer_branch
    %14 = sbr.rel target = $region3
  $region8: #{convlstm2d_forward.1} parent=0 // loop_exit
    _

</llo_original>
